<compile_context>
chip_gen: v7x
topology: tpu7x:2x2x1
jax: 0.10.0
libtpu: 0.0.40
codegen_flags: <defaults>
</compile_context>

<pallas_src>
import functools

import numpy as np
import jax
import jax.numpy as jnp
from jax.experimental import pallas as pl
from jax.experimental.pallas import tpu as pltpu

# ----------------------------- config (small) -------------------------------
N_GRID_FEATS = 16                       # num_grid_feats
NF0 = 32                                # nf0
GRID_DIMS = (8, 8, 8)                   # grid_dims
FRUSTRUM_IMG_DIMS = (16, 16)            # frustrum_img_dims
FRUSTRUM_DEPTH = int(np.ceil(1.5 * GRID_DIMS[-1]))   # = 12
BN_EPS = 1e-5


# ----------------- fused kernel: collapse + rendering_net -------------------
def _fused_chunk_kernel(vol_ref, vis_ref, w1_ref, wmid_ref, shift_ref, w5_ref, b5_ref,
                        o_ref, *, depth, cin):
    # One grid step = one chunk of B views, pixels-of-all-views on the lane dim.
    vol = vol_ref[0]                                       # (D, C, L) bf16
    vis = vis_ref[0]                                       # (D, 1, L) bf16
    L = vol.shape[-1]

    # Visibility weighting on the VPU.  The depth *mean* is folded into layer-1's
    # MXU contraction: w1 is pre-tiled over depth and already carries 1/D and the
    # layer-1 BatchNorm scale.
    wv = (vis * vol).reshape(depth * cin, L)               # (D*C, L) bf16

    # layer 1: 1x1 conv + (folded) BN + ReLU, K = D*C = 192
    z = jnp.dot(w1_ref[...], wv, preferred_element_type=jnp.float32)      # (128, L) f32
    h = jnp.maximum(z + shift_ref[0], 0.0).astype(jnp.bfloat16)

    # layers 2..4: 1x1 conv + (folded) BN + ReLU, activations kept in bf16
    for i in range(3):
        z = jnp.dot(wmid_ref[i], h, preferred_element_type=jnp.float32)   # (128, L)
        h = jnp.maximum(z + shift_ref[i + 1], 0.0).astype(jnp.bfloat16)

    # output layer: 1x1 conv + bias, Tanh, * 0.5
    y = jnp.dot(w5_ref[...], h, preferred_element_type=jnp.float32) + b5_ref[...]  # (3, L)
    o_ref[0] = 0.5 * jnp.tanh(y)


def deepvoxels_render(vol, vis, kparams, *, views_per_step=None):
    """vol: (V, D, C, P) bf16, vis: (V, D, 1, P) bf16 -> (V, 3, P) f32."""
    V, D, C, P = vol.shape
    assert P % 128 == 0
    w1f, wmid, shifts, w5f, b5 = kparams

    # VMEM footprint per view in a step (double-buffered IO + f32 activation headroom).
    per_view = (2 * (D * C * P * 2)        # vol, bf16, x2 buffers
                + 2 * (D * P * 2)          # vis
                + 2 * (3 * P * 4)          # output, f32
                + 4 * (128 * P * 4))       # live activations, f32
    budget = 24 << 20                      # stays inside v7x's 32 MiB scoped VMEM
    max_b = max(1, budget // per_view)
    B = int(min(V, views_per_step if views_per_step else 16, max_b))
    G = pl.cdiv(V, B)
    Vp = G * B
    if Vp != V:
        pad = ((0, Vp - V), (0, 0), (0, 0), (0, 0))
        vol = jnp.pad(vol, pad)
        vis = jnp.pad(vis, pad)

    L = B * P
    # Fold each chunk of B views onto the lane dimension: (G, D, C, B*P).
    vol_c = vol.reshape(G, B, D, C, P).transpose(0, 2, 3, 1, 4).reshape(G, D, C, L)
    vis_c = vis.reshape(G, B, D, 1, P).transpose(0, 2, 3, 1, 4).reshape(G, D, 1, L)

    weight_bytes = sum(int(np.prod(p.shape)) * p.dtype.itemsize for p in kparams)
    vmem_limit = int(min(max(per_view * B + 2 * weight_bytes + (2 << 20), 16 << 20),
                         40 << 20))

    out = pl.pallas_call(
        functools.partial(_fused_chunk_kernel, depth=D, cin=C),
        out_shape=jax.ShapeDtypeStruct((G, 3, L), jnp.float32),
        grid_spec=pltpu.PrefetchScalarGridSpec(
            num_scalar_prefetch=0,
            grid=(G,),
            in_specs=[
                pl.BlockSpec((1, D, C, L), lambda g: (g, 0, 0, 0)),
                pl.BlockSpec((1, D, 1, L), lambda g: (g, 0, 0, 0)),
                pl.BlockSpec(w1f.shape, lambda g: (0, 0)),        # (128, D*C)
                pl.BlockSpec(wmid.shape, lambda g: (0, 0, 0)),    # (3, 128, 128)
                pl.BlockSpec(shifts.shape, lambda g: (0, 0, 0)),  # (4, 128, 1)
                pl.BlockSpec(w5f.shape, lambda g: (0, 0)),        # (3, 128)
                pl.BlockSpec(b5.shape, lambda g: (0, 0)),         # (3, 1)
            ],
            out_specs=pl.BlockSpec((1, 3, L), lambda g: (g, 0, 0)),
        ),
        compiler_params=pltpu.CompilerParams(
            dimension_semantics=("parallel",),    # view chunks shard across v7x's 2 TCs
            vmem_limit_bytes=vmem_limit),
    )(vol_c, vis_c, w1f, wmid, shifts, w5f, b5)

    # Unpack lanes back to per-view images (V, 3, P).
    imgs = out.reshape(G, 3, B, P).transpose(0, 2, 1, 3).reshape(Vp, 3, P)[:V]
    return imgs


# ------------------------------- parameter init -----------------------------
def init_rendering_params(key):
    """Raw f32 rendering_net params (eval-mode BatchNorm statistics)."""
    dims = [(N_GRID_FEATS, 128), (128, 128), (128, 128), (128, 128)]
    hidden = []
    for cin, cout in dims:
        key, kw, kg, kb, km, kv = jax.random.split(key, 6)
        w = jax.random.normal(kw, (cin, cout), jnp.float32) * 0.1
        gamma = 1.0 + 0.1 * jax.random.normal(kg, (cout,), jnp.float32)
        beta = 0.1 * jax.random.normal(kb, (cout,), jnp.float32)
        mean = 0.1 * jax.random.normal(km, (cout,), jnp.float32)
        var = 1.0 + 0.1 * jnp.abs(jax.random.normal(kv, (cout,), jnp.float32))
        hidden.append((w, gamma, beta, mean, var))
    key, kw, kb = jax.random.split(key, 3)
    w5 = jax.random.normal(kw, (128, 3), jnp.float32) * 0.1
    b5 = 0.1 * jax.random.normal(kb, (3,), jnp.float32)
    return {"hidden": hidden, "w5": w5, "b5": b5}


def fold_params_for_kernel(raw, depth):
    """BN scale folded into weights (in f32, then bf16 cast); 1/depth + depth tiling
    folded into w1 so the collapse happens as MXU contraction."""
    (w1, g1, b1, m1, v1) = raw["hidden"][0]
    s1 = g1 / jnp.sqrt(v1 + BN_EPS)
    t1 = b1 - m1 * s1
    w1s = (w1.T * s1[:, None]) * jnp.float32(1.0 / depth)          # (128, C) f32
    w1f = jnp.tile(w1s, (1, depth)).astype(jnp.bfloat16)           # (128, depth*C)

    wmid, shift_list = [], [t1]
    for (w, g, b, m, v) in raw["hidden"][1:]:
        s = g / jnp.sqrt(v + BN_EPS)
        shift_list.append(b - m * s)
        wmid.append((w.T * s[:, None]).astype(jnp.bfloat16))       # (128, 128) bf16
    wmid = jnp.stack(wmid, 0)                                      # (3, 128, 128)
    shifts = jnp.stack(shift_list, 0)[:, :, None].astype(jnp.float32)  # (4, 128, 1)

    w5f = raw["w5"].T.astype(jnp.bfloat16)                         # (3, 128)
    b5 = raw["b5"][:, None].astype(jnp.float32)                    # (3, 1)
    return (w1f, wmid, shifts, w5f, b5)


# ------------------------------- forward glue --------------------------------
def deepvoxels_forward(can_view_vol_list, vis_weights_list, kernel_params, *,
                       views_per_step=None):
    """Rendering branch of DeepVoxels.forward.

    can_view_vol_list[i]: (1, C, D, H, W)  (stands in for interpolate_trilinear output)
    vis_weights_list[i]:  (1, 1, D, H, W)  (stands in for OcclusionNet visibility output)
    """
    # TODO(synk): feature_extractor (Unet), IntegrationNet, Unet3d inpainting_net,
    #             OcclusionNet, interpolate_lifting / interpolate_trilinear are external
    #             modules whose definitions are not given in the source; their outputs
    #             (can_view_vol, visibility_weights) are taken as inputs instead.
    H, W = FRUSTRUM_IMG_DIMS
    D, C, P = FRUSTRUM_DEPTH, N_GRID_FEATS, FRUSTRUM_IMG_DIMS[0] * FRUSTRUM_IMG_DIMS[1]
    # NCDHW -> (V, D, C, P)/(V, D, 1, P) in bf16: the kernel is HBM-bound on the volume
    # DMA and the MXU consumes bf16 anyway, so halving the input bytes is ~free accuracy-wise.
    vol = jnp.stack([jnp.transpose(cvv[0], (1, 0, 2, 3)).reshape(D, C, P)
                     for cvv in can_view_vol_list], axis=0).astype(jnp.bfloat16)
    vis = jnp.stack([jnp.transpose(vw[0], (1, 0, 2, 3)).reshape(D, 1, P)
                     for vw in vis_weights_list], axis=0).astype(jnp.bfloat16)
    imgs = deepvoxels_render(vol, vis, kernel_params, views_per_step=views_per_step)
    novel_views = [imgs[i].reshape(3, H, W)[None] for i in range(imgs.shape[0])]
    depth_maps = [None] * len(can_view_vol_list)  # TODO(synk): OcclusionNet depth maps undefined in source
    return novel_views, depth_maps


# --------------------------- pure-JAX references ------------------------------
def _reference_view_bf16(cvv, vw, kparams):
    """Plain-XLA, channel-last replay of the kernel math (same bf16 rounding points)."""
    H, W = FRUSTRUM_IMG_DIMS
    D, C = FRUSTRUM_DEPTH, N_GRID_FEATS
    w1f, wmid, shifts, w5f, b5 = kparams
    vol = jnp.transpose(cvv[0], (1, 0, 2, 3)).reshape(D, C, H * W).astype(jnp.bfloat16)
    vis = jnp.transpose(vw[0], (1, 0, 2, 3)).reshape(D, 1, H * W).astype(jnp.bfloat16)
    x = (vis * vol).reshape(D * C, -1).T                               # (P, D*C) bf16
    z = jnp.dot(x, w1f.T, preferred_element_type=jnp.float32) + shifts[0, :, 0]
    h = jnp.maximum(z, 0.0).astype(jnp.bfloat16)
    for i in range(3):
        z = jnp.dot(h, wmid[i].T, preferred_element_type=jnp.float32) + shifts[i + 1, :, 0]
        h = jnp.maximum(z, 0.0).astype(jnp.bfloat16)
    y = jnp.dot(h, w5f.T, preferred_element_type=jnp.float32) + b5[:, 0]
    y = 0.5 * jnp.tanh(y)                                              # (P, 3)
    return jnp.transpose(y.reshape(H, W, 3), (2, 0, 1))[None]


def _module_reference_view(cvv, vw, raw):
    """Full-f32 replay of the PyTorch module math: mean-over-depth collapse, 1x1 conv
    stack with eval-mode BatchNorm + ReLU, final conv + bias, Tanh, * 0.5."""
    H, W = FRUSTRUM_IMG_DIMS
    col = jnp.mean(vw * cvv, axis=2)[0]                                # (C, H, W)
    h = col.reshape(N_GRID_FEATS, -1)                                  # (C, P)
    for (w, g, b, m, v) in raw["hidden"]:
        z = jnp.dot(w.T, h)                                            # (Cout, P)
        z = (z - m[:, None]) / jnp.sqrt(v[:, None] + BN_EPS) * g[:, None] + b[:, None]
        h = jnp.maximum(z, 0.0)
    y = jnp.dot(raw["w5"].T, h) + raw["b5"][:, None]
    return (0.5 * jnp.tanh(y)).reshape(3, H, W)[None]


# ------------------------------------ main -----------------------------------
if __name__ == "__main__":
    key = jax.random.PRNGKey(0)
    key, kp = jax.random.split(key)

    raw_params = init_rendering_params(kp)
    kernel_params = fold_params_for_kernel(raw_params, FRUSTRUM_DEPTH)

    H, W = FRUSTRUM_IMG_DIMS
    D, C = FRUSTRUM_DEPTH, N_GRID_FEATS

    # DeepVoxels grid buffer + coord-conv volume + channel concat (pure glue,
    # fully specified in the module __init__/forward).
    deepvoxels_buf = jnp.zeros((1, C, *GRID_DIMS), jnp.float32)
    cc = np.mgrid[-GRID_DIMS[0] // 2:GRID_DIMS[0] // 2,
                  -GRID_DIMS[1] // 2:GRID_DIMS[1] // 2,
                  -GRID_DIMS[2] // 2:GRID_DIMS[2] // 2]
    coord_conv_volume = (np.stack(cc, 0).astype(np.float32) / GRID_DIMS[0])[None]
    inpainting_input = jnp.concatenate(
        [deepvoxels_buf, jnp.asarray(coord_conv_volume)], axis=1)      # (1, C+3, 8, 8, 8)
    # TODO(synk): Unet3d inpainting_net would consume `inpainting_input`; not defined in source.

    # Four views worth of synthetic canonical view volumes / visibility weights.
    n_views = 4
    can_view_vols, vis_weights = [], []
    for _ in range(n_views):
        key, k1, k2 = jax.random.split(key, 3)
        can_view_vols.append(jax.random.normal(k1, (1, C, D, H, W), jnp.float32))
        vis_weights.append(jax.nn.softmax(
            jax.random.normal(k2, (1, 1, D, H, W), jnp.float32), axis=2))

    novel_views, depth_maps = deepvoxels_forward(
        can_view_vols, vis_weights, kernel_params, views_per_step=2)
    novel_views = [jax.block_until_ready(v) for v in novel_views]

    # sanity checks
    for v, cvv, vw in zip(novel_views, can_view_vols, vis_weights):
        assert v.shape == (1, 3, H, W)
        # tight: same math / rounding points as the kernel, plain XLA, channel-last
        ref = _reference_view_bf16(cvv, vw, kernel_params)
        assert np.allclose(np.asarray(v), np.asarray(ref), atol=2e-3, rtol=2e-3)
        # loose: full-f32 module semantics (validates the BN / depth-collapse folds)
        ref_f32 = _module_reference_view(cvv, vw, raw_params)
        assert np.allclose(np.asarray(v), np.asarray(ref_f32), atol=5e-2, rtol=5e-2)

    print("KERNEL_OK")
</pallas_src>

<mosaic_0001>
module attributes {stable_mosaic.version = 11 : i64} {
  func.func @_fused_chunk_kernel(%arg0: i32, %arg1: memref<1x12x16x512xbf16, #tpu.memory_space<vmem>>, %arg2: memref<1x12x1x512xbf16, #tpu.memory_space<vmem>>, %arg3: memref<128x192xbf16, #tpu.memory_space<vmem>>, %arg4: memref<3x128x128xbf16, #tpu.memory_space<vmem>>, %arg5: memref<4x128x1xf32, #tpu.memory_space<vmem>>, %arg6: memref<3x128xbf16, #tpu.memory_space<vmem>>, %arg7: memref<3x1xf32, #tpu.memory_space<vmem>>, %arg8: memref<1x3x512xf32, #tpu.memory_space<vmem>>) attributes {dimension_semantics = [#tpu.dimension_semantics<parallel>], iteration_bounds = array<i64: 2>, scalar_prefetch = 0 : i64, scratch_operands = 0 : i64, tpu.core_type = #tpu.core_type<tc>, window_params = [{transform_indices = @transform_0, window_bounds = array<i64: 1, 12, 16, 512>}, {transform_indices = @transform_1, window_bounds = array<i64: 1, 12, 1, 512>}, {pipeline_mode = #tpu.pipeline_mode<synchronous>, transform_indices = @transform_2, window_bounds = array<i64: 128, 192>}, {pipeline_mode = #tpu.pipeline_mode<synchronous>, transform_indices = @transform_3, window_bounds = array<i64: 3, 128, 128>}, {pipeline_mode = #tpu.pipeline_mode<synchronous>, transform_indices = @transform_4, window_bounds = array<i64: 4, 128, 1>}, {pipeline_mode = #tpu.pipeline_mode<synchronous>, transform_indices = @transform_5, window_bounds = array<i64: 3, 128>}, {pipeline_mode = #tpu.pipeline_mode<synchronous>, transform_indices = @transform_6, window_bounds = array<i64: 3, 1>}, {transform_indices = @transform_7, window_bounds = array<i64: 1, 3, 512>}]} {
    %c0 = arith.constant 0 : index
    %c0_0 = arith.constant 0 : index
    %c0_1 = arith.constant 0 : index
    %c0_2 = arith.constant 0 : index
    %0 = vector.load %arg1[%c0, %c0_0, %c0_1, %c0_2] : memref<1x12x16x512xbf16, #tpu.memory_space<vmem>>, vector<1x12x16x512xbf16>
    %1 = vector.shape_cast %0 : vector<1x12x16x512xbf16> to vector<12x16x512xbf16>
    %c0_3 = arith.constant 0 : index
    %c0_4 = arith.constant 0 : index
    %c0_5 = arith.constant 0 : index
    %c0_6 = arith.constant 0 : index
    %2 = vector.load %arg2[%c0_3, %c0_4, %c0_5, %c0_6] : memref<1x12x1x512xbf16, #tpu.memory_space<vmem>>, vector<1x12x1x512xbf16>
    %3 = vector.shape_cast %2 : vector<1x12x1x512xbf16> to vector<12x1x512xbf16>
    %4 = vector.broadcast %3 : vector<12x1x512xbf16> to vector<12x16x512xbf16>
    %5 = arith.mulf %4, %1 : vector<12x16x512xbf16>
    %6 = vector.shape_cast %5 : vector<12x16x512xbf16> to vector<192x512xbf16>
    %c0_7 = arith.constant 0 : index
    %c0_8 = arith.constant 0 : index
    %7 = vector.load %arg3[%c0_7, %c0_8] : memref<128x192xbf16, #tpu.memory_space<vmem>>, vector<128x192xbf16>
    %cst = arith.constant dense<0.000000e+00> : vector<128x512xf32>
    %8 = tpu.matmul %7, %6, %cst {dimension_numbers = #tpu.dot_dimension_numbers<[1], [0], [0], [1], [0, 0, 1, 1], [], []>} : vector<128x192xbf16>, vector<192x512xbf16>, vector<128x512xf32> -> vector<128x512xf32>
    %c0_9 = arith.constant 0 : index
    %c0_10 = arith.constant 0 : index
    %c0_11 = arith.constant 0 : index
    %9 = vector.load %arg5[%c0_9, %c0_10, %c0_11] : memref<4x128x1xf32, #tpu.memory_space<vmem>>, vector<1x128x1xf32>
    %10 = vector.shape_cast %9 : vector<1x128x1xf32> to vector<128x1xf32>
    %11 = vector.broadcast %10 : vector<128x1xf32> to vector<128x512xf32>
    %12 = arith.addf %8, %11 : vector<128x512xf32>
    %cst_12 = arith.constant 0.000000e+00 : f32
    %13 = vector.broadcast %cst_12 : f32 to vector<128x512xf32>
    %14 = arith.maximumf %12, %13 : vector<128x512xf32>
    %15 = arith.truncf %14 : vector<128x512xf32> to vector<128x512xbf16>
    %c0_13 = arith.constant 0 : index
    %c0_14 = arith.constant 0 : index
    %c0_15 = arith.constant 0 : index
    %16 = vector.load %arg4[%c0_13, %c0_14, %c0_15] : memref<3x128x128xbf16, #tpu.memory_space<vmem>>, vector<1x128x128xbf16>
    %17 = vector.shape_cast %16 : vector<1x128x128xbf16> to vector<128x128xbf16>
    %cst_16 = arith.constant dense<0.000000e+00> : vector<128x512xf32>
    %18 = tpu.matmul %17, %15, %cst_16 {dimension_numbers = #tpu.dot_dimension_numbers<[1], [0], [0], [1], [0, 0, 1, 1], [], []>} : vector<128x128xbf16>, vector<128x512xbf16>, vector<128x512xf32> -> vector<128x512xf32>
    %c1 = arith.constant 1 : index
    %c0_17 = arith.constant 0 : index
    %c0_18 = arith.constant 0 : index
    %19 = vector.load %arg5[%c1, %c0_17, %c0_18] : memref<4x128x1xf32, #tpu.memory_space<vmem>>, vector<1x128x1xf32>
    %20 = vector.shape_cast %19 : vector<1x128x1xf32> to vector<128x1xf32>
    %21 = vector.broadcast %20 : vector<128x1xf32> to vector<128x512xf32>
    %22 = arith.addf %18, %21 : vector<128x512xf32>
    %cst_19 = arith.constant 0.000000e+00 : f32
    %23 = vector.broadcast %cst_19 : f32 to vector<128x512xf32>
    %24 = arith.maximumf %22, %23 : vector<128x512xf32>
    %25 = arith.truncf %24 : vector<128x512xf32> to vector<128x512xbf16>
    %c1_20 = arith.constant 1 : index
    %c0_21 = arith.constant 0 : index
    %c0_22 = arith.constant 0 : index
    %26 = vector.load %arg4[%c1_20, %c0_21, %c0_22] : memref<3x128x128xbf16, #tpu.memory_space<vmem>>, vector<1x128x128xbf16>
    %27 = vector.shape_cast %26 : vector<1x128x128xbf16> to vector<128x128xbf16>
    %cst_23 = arith.constant dense<0.000000e+00> : vector<128x512xf32>
    %28 = tpu.matmul %27, %25, %cst_23 {dimension_numbers = #tpu.dot_dimension_numbers<[1], [0], [0], [1], [0, 0, 1, 1], [], []>} : vector<128x128xbf16>, vector<128x512xbf16>, vector<128x512xf32> -> vector<128x512xf32>
    %c2 = arith.constant 2 : index
    %c0_24 = arith.constant 0 : index
    %c0_25 = arith.constant 0 : index
    %29 = vector.load %arg5[%c2, %c0_24, %c0_25] : memref<4x128x1xf32, #tpu.memory_space<vmem>>, vector<1x128x1xf32>
    %30 = vector.shape_cast %29 : vector<1x128x1xf32> to vector<128x1xf32>
    %31 = vector.broadcast %30 : vector<128x1xf32> to vector<128x512xf32>
    %32 = arith.addf %28, %31 : vector<128x512xf32>
    %cst_26 = arith.constant 0.000000e+00 : f32
    %33 = vector.broadcast %cst_26 : f32 to vector<128x512xf32>
    %34 = arith.maximumf %32, %33 : vector<128x512xf32>
    %35 = arith.truncf %34 : vector<128x512xf32> to vector<128x512xbf16>
    %c2_27 = arith.constant 2 : index
    %c0_28 = arith.constant 0 : index
    %c0_29 = arith.constant 0 : index
    %36 = vector.load %arg4[%c2_27, %c0_28, %c0_29] : memref<3x128x128xbf16, #tpu.memory_space<vmem>>, vector<1x128x128xbf16>
    %37 = vector.shape_cast %36 : vector<1x128x128xbf16> to vector<128x128xbf16>
    %cst_30 = arith.constant dense<0.000000e+00> : vector<128x512xf32>
    %38 = tpu.matmul %37, %35, %cst_30 {dimension_numbers = #tpu.dot_dimension_numbers<[1], [0], [0], [1], [0, 0, 1, 1], [], []>} : vector<128x128xbf16>, vector<128x512xbf16>, vector<128x512xf32> -> vector<128x512xf32>
    %c3 = arith.constant 3 : index
    %c0_31 = arith.constant 0 : index
    %c0_32 = arith.constant 0 : index
    %39 = vector.load %arg5[%c3, %c0_31, %c0_32] : memref<4x128x1xf32, #tpu.memory_space<vmem>>, vector<1x128x1xf32>
    %40 = vector.shape_cast %39 : vector<1x128x1xf32> to vector<128x1xf32>
    %41 = vector.broadcast %40 : vector<128x1xf32> to vector<128x512xf32>
    %42 = arith.addf %38, %41 : vector<128x512xf32>
    %cst_33 = arith.constant 0.000000e+00 : f32
    %43 = vector.broadcast %cst_33 : f32 to vector<128x512xf32>
    %44 = arith.maximumf %42, %43 : vector<128x512xf32>
    %45 = arith.truncf %44 : vector<128x512xf32> to vector<128x512xbf16>
    %c0_34 = arith.constant 0 : index
    %c0_35 = arith.constant 0 : index
    %46 = vector.load %arg6[%c0_34, %c0_35] : memref<3x128xbf16, #tpu.memory_space<vmem>>, vector<3x128xbf16>
    %cst_36 = arith.constant dense<0.000000e+00> : vector<3x512xf32>
    %47 = tpu.matmul %46, %45, %cst_36 {dimension_numbers = #tpu.dot_dimension_numbers<[1], [0], [0], [1], [0, 0, 1, 1], [], []>} : vector<3x128xbf16>, vector<128x512xbf16>, vector<3x512xf32> -> vector<3x512xf32>
    %c0_37 = arith.constant 0 : index
    %c0_38 = arith.constant 0 : index
    %48 = vector.load %arg7[%c0_37, %c0_38] : memref<3x1xf32, #tpu.memory_space<vmem>>, vector<3x1xf32>
    %49 = vector.broadcast %48 : vector<3x1xf32> to vector<3x512xf32>
    %50 = arith.addf %47, %49 : vector<3x512xf32>
    %51 = math.tanh %50 : vector<3x512xf32>
    %cst_39 = arith.constant 5.000000e-01 : f32
    %52 = vector.broadcast %cst_39 : f32 to vector<3x512xf32>
    %53 = arith.mulf %52, %51 : vector<3x512xf32>
    %c0_40 = arith.constant 0 : index
    %c0_41 = arith.constant 0 : index
    %c0_42 = arith.constant 0 : index
    %54 = vector.load %arg8[%c0_40, %c0_41, %c0_42] : memref<1x3x512xf32, #tpu.memory_space<vmem>>, vector<1x3x512xf32>
    %55 = vector.shape_cast %54 : vector<1x3x512xf32> to vector<3x512xf32>
    %56 = vector.shape_cast %53 : vector<3x512xf32> to vector<1x3x512xf32>
    tpu.vector_store %arg8[%c0_40, %c0_41, %c0_42], %56 {strides = array<i32>} : memref<1x3x512xf32, #tpu.memory_space<vmem>>, vector<1x3x512xf32>,
    return
  }
  func.func @transform_0(%arg0: i32) -> (i32, i32, i32, i32) {
    %c0_i32 = arith.constant 0 : i32
    %c0_i32_0 = arith.constant 0 : i32
    %c0_i32_1 = arith.constant 0 : i32
    %c0_i32_2 = arith.constant 0 : i32
    return %arg0, %c0_i32, %c0_i32_0, %c0_i32_1 : i32, i32, i32, i32
  }
  func.func @transform_1(%arg0: i32) -> (i32, i32, i32, i32) {
    %c0_i32 = arith.constant 0 : i32
    %c0_i32_0 = arith.constant 0 : i32
    %c0_i32_1 = arith.constant 0 : i32
    %c0_i32_2 = arith.constant 0 : i32
    return %arg0, %c0_i32, %c0_i32_0, %c0_i32_1 : i32, i32, i32, i32
  }
  func.func @transform_2(%arg0: i32) -> (i32, i32) {
    %c0_i32 = arith.constant 0 : i32
    %c0_i32_0 = arith.constant 0 : i32
    %c0_i32_1 = arith.constant 0 : i32
    return %c0_i32, %c0_i32_0 : i32, i32
  }
  func.func @transform_3(%arg0: i32) -> (i32, i32, i32) {
    %c0_i32 = arith.constant 0 : i32
    %c0_i32_0 = arith.constant 0 : i32
    %c0_i32_1 = arith.constant 0 : i32
    %c0_i32_2 = arith.constant 0 : i32
    return %c0_i32, %c0_i32_0, %c0_i32_1 : i32, i32, i32
  }
  func.func @transform_4(%arg0: i32) -> (i32, i32, i32) {
    %c0_i32 = arith.constant 0 : i32
    %c0_i32_0 = arith.constant 0 : i32
    %c0_i32_1 = arith.constant 0 : i32
    %c0_i32_2 = arith.constant 0 : i32
    return %c0_i32, %c0_i32_0, %c0_i32_1 : i32, i32, i32
  }
  func.func @transform_5(%arg0: i32) -> (i32, i32) {
    %c0_i32 = arith.constant 0 : i32
    %c0_i32_0 = arith.constant 0 : i32
    %c0_i32_1 = arith.constant 0 : i32
    return %c0_i32, %c0_i32_0 : i32, i32
  }
  func.func @transform_6(%arg0: i32) -> (i32, i32) {
    %c0_i32 = arith.constant 0 : i32
    %c0_i32_0 = arith.constant 0 : i32
    %c0_i32_1 = arith.constant 0 : i32
    return %c0_i32, %c0_i32_0 : i32, i32
  }
  func.func @transform_7(%arg0: i32) -> (i32, i32, i32) {
    %c0_i32 = arith.constant 0 : i32
    %c0_i32_0 = arith.constant 0 : i32
    %c0_i32_1 = arith.constant 0 : i32
    return %arg0, %c0_i32, %c0_i32_0 : i32, i32, i32
  }
}

</mosaic_0001>

<llo_original>
// kernel: tpu_custom_call.1
$region0: #{tpu_custom_call.1}
  #allocation0 [shape = 'u32[]', space=smem, size = 0x4, offset = 0x4, fixed_abs, tag = 'smem constant byte address 0x4 - core index']
  #allocation1 [shape = 'u32[144,128]{1,0:T(1,128)}', space=vmem, size = 0x12000, scoped, tag = 'internal scratch']
  %s0 = inlined_call_operand.vmem [shape: bf16[2,12,16,512], index: 0, kind: input, shape index: {}]
  %s1 = inlined_call_operand.vmem [shape: bf16[2,12,1,512], index: 1, kind: input, shape index: {}]
  %s2 = inlined_call_operand.vmem [shape: bf16[128,192], index: 2, kind: input, shape index: {}]
  %s3 = inlined_call_operand.hbm [shape: bf16[3,128,128], index: 3, kind: input, shape index: {}]
  %s4 = inlined_call_operand.vmem [shape: f32[4,128,1], index: 4, kind: input, shape index: {}]
  %s5 = inlined_call_operand.vmem [shape: bf16[3,128], index: 5, kind: input, shape index: {}]
  %s6 = inlined_call_operand.vmem [shape: f32[3,1], index: 6, kind: input, shape index: {}]
  %s7 = inlined_call_operand.vmem [shape: f32[2,3,512], index: 7, kind: output, shape index: {}]
  %s8 = sld [smem:[#allocation0]]
  $region65: #{tpu_custom_call.1} parent=0
    _
  %s10 = ssub.s32 1, %s8
  %s11 = scalar_select 0, %s10, %s8
  $region1: #{tpu_custom_call.1} parent=0
    #allocation2 [shape = 'u8[98304]{0}', space=vmem, size = 0x18000, scoped, tag = 'input window, operand 3, single buffered']
    #allocation3 [shape = 's32[2]{0}', space=sflag, size = 0x8, scoped, tag = 'scoped memory for tpu_custom_call.1']
    %12 = vsyncpa [#allocation3], 0
    loop: start=0, step=1, limit=4
    $region2: #{tpu_custom_call.1} parent=1 // loop_pre_header
      _
    $region3: #{tpu_custom_call.1} parent=1 // loop_header
      %s14 = sphi 0, %s18
      %p15 = scmp.ge.s32.totalorder %s14, 4
      %s24 = sphi 0, %s26
      %s27 = sphi 0, %s24
      %s28 = sphi 0, %s27
      %s44 = sphi 0, %s28
      %s50 = sphi 0, %s52
      %s53 = sphi 0, %s50
      %s54 = sphi 0, %s53
      %s70 = sphi 0, %s54
      %s74 = sphi 0, %s74
      %s76 = sphi 0, %s74
      %s77 = sphi 0, %s76
      %s91 = sphi 0, %s77
      %s95 = sphi 0, %s95
      %s97 = sphi 0, %s95
      %s98 = sphi 0, %s97
      %s112 = sphi 0, %s98
      %s116 = sphi 0, %s116
      %s118 = sphi 0, %s116
      %s119 = sphi 0, %s118
      %s133 = sphi 0, %s119
      %s137 = sphi 0, %s137
      %s139 = sphi 0, %s137
      %s140 = sphi 0, %s139
      %s154 = sphi 0, %s140
      %s158 = sphi 0, %s158
      %s160 = sphi 0, %s158
      %s161 = sphi 0, %s160
      %s175 = sphi 0, %s161
      %s181 = sphi 0, %s183
      %s184 = sphi 0, %s181
      %s185 = sphi 0, %s184
      %s201 = sphi 0, %s185
    $region4: #{tpu_custom_call.1} parent=1 // loop_header_branch
      %17 = sbr.rel (%p15) target = $region8
    $region5: #{tpu_custom_call.1} parent=1 // loop_body
      %s19 = ssub.s32 %s14, 1
      %s20 = ssub.s32 %s14, 2
      %s21 = sadd.s32 %s14, 1
      %s22 = ssub.s32 %s14, %s21
      %p23 = scmp.eq.s32.totalorder %s22, 0
      %s25 = sadd.s32 %s24, 1
      %s26 = scalar_select %p23, %s24, %s25
      %p29 = pneg %p23
      %p30 = scmp.eq.s32.totalorder %s14, 1
      %p31 = por %p29, %p30
      %p32 = scmp.ne.s32.totalorder %s24, %s27
      %p33 = scmp.eq.s32.totalorder %s14, 0
      %p34 = por %p32, %p33
      %p35 = scmp.ne.s32.totalorder %s24, %s27
      %p36 = scmp.eq.s32.totalorder %s19, 1
      %p37 = por %p35, %p36
      %p38 = scmp.ne.s32.totalorder %s27, %s28
      %p39 = scmp.eq.s32.totalorder %s19, 0
      %p40 = por %p38, %p39
      %p41 = scmp.ne.s32.totalorder %s27, %s28
      %p42 = scmp.eq.s32.totalorder %s20, 1
      %p43 = por %p41, %p42
      %p45 = scmp.ne.s32.totalorder %s28, %s44
      %p46 = scmp.eq.s32.totalorder %s20, 0
      %p47 = por %p45, %p46
      %s48 = ssub.s32 %s14, %s21
      %p49 = scmp.eq.s32.totalorder %s48, 0
      %s51 = sadd.s32 %s50, 1
      %s52 = scalar_select %p49, %s50, %s51
      %p55 = pneg %p49
      %p56 = scmp.eq.s32.totalorder %s14, 1
      %p57 = por %p55, %p56
      %p58 = scmp.ne.s32.totalorder %s50, %s53
      %p59 = scmp.eq.s32.totalorder %s14, 0
      %p60 = por %p58, %p59
      %p61 = scmp.ne.s32.totalorder %s50, %s53
      %p62 = scmp.eq.s32.totalorder %s19, 1
      %p63 = por %p61, %p62
      %p64 = scmp.ne.s32.totalorder %s53, %s54
      %p65 = scmp.eq.s32.totalorder %s19, 0
      %p66 = por %p64, %p65
      %p67 = scmp.ne.s32.totalorder %s53, %s54
      %p68 = scmp.eq.s32.totalorder %s20, 1
      %p69 = por %p67, %p68
      %p71 = scmp.ne.s32.totalorder %s54, %s70
      %p72 = scmp.eq.s32.totalorder %s20, 0
      %p73 = por %p71, %p72
      %s75 = sadd.s32 %s74, 1
      %p78 = scmp.eq.s32.totalorder %s14, 1
      %p79 = scmp.ne.s32.totalorder %s74, %s76
      %p80 = scmp.eq.s32.totalorder %s14, 0
      %p81 = por %p79, %p80
      %p82 = scmp.ne.s32.totalorder %s74, %s76
      %p83 = scmp.eq.s32.totalorder %s19, 1
      %p84 = por %p82, %p83
      %p85 = scmp.ne.s32.totalorder %s76, %s77
      %p86 = scmp.eq.s32.totalorder %s19, 0
      %p87 = por %p85, %p86
      %p88 = scmp.ne.s32.totalorder %s76, %s77
      %p89 = scmp.eq.s32.totalorder %s20, 1
      %p90 = por %p88, %p89
      %p92 = scmp.ne.s32.totalorder %s77, %s91
      %p93 = scmp.eq.s32.totalorder %s20, 0
      %p94 = por %p92, %p93
      %s96 = sadd.s32 %s95, 1
      %p99 = scmp.eq.s32.totalorder %s14, 1
      %p100 = scmp.ne.s32.totalorder %s95, %s97
      %p101 = scmp.eq.s32.totalorder %s14, 0
      %p102 = por %p100, %p101
      %p103 = scmp.ne.s32.totalorder %s95, %s97
      %p104 = scmp.eq.s32.totalorder %s19, 1
      %p105 = por %p103, %p104
      %p106 = scmp.ne.s32.totalorder %s97, %s98
      %p107 = scmp.eq.s32.totalorder %s19, 0
      %p108 = por %p106, %p107
      %p109 = scmp.ne.s32.totalorder %s97, %s98
      %p110 = scmp.eq.s32.totalorder %s20, 1
      %p111 = por %p109, %p110
      %p113 = scmp.ne.s32.totalorder %s98, %s112
      %p114 = scmp.eq.s32.totalorder %s20, 0
      %p115 = por %p113, %p114
      %s117 = sadd.s32 %s116, 1
      %p120 = scmp.eq.s32.totalorder %s14, 1
      %p121 = scmp.ne.s32.totalorder %s116, %s118
      %p122 = scmp.eq.s32.totalorder %s14, 0
      %p123 = por %p121, %p122
      %p124 = scmp.ne.s32.totalorder %s116, %s118
      %p125 = scmp.eq.s32.totalorder %s19, 1
      %p126 = por %p124, %p125
      %p127 = scmp.ne.s32.totalorder %s118, %s119
      %p128 = scmp.eq.s32.totalorder %s19, 0
      %p129 = por %p127, %p128
      %p130 = scmp.ne.s32.totalorder %s118, %s119
      %p131 = scmp.eq.s32.totalorder %s20, 1
      %p132 = por %p130, %p131
      %p134 = scmp.ne.s32.totalorder %s119, %s133
      %p135 = scmp.eq.s32.totalorder %s20, 0
      %p136 = por %p134, %p135
      %s138 = sadd.s32 %s137, 1
      %p141 = scmp.eq.s32.totalorder %s14, 1
      %p142 = scmp.ne.s32.totalorder %s137, %s139
      %p143 = scmp.eq.s32.totalorder %s14, 0
      %p144 = por %p142, %p143
      %p145 = scmp.ne.s32.totalorder %s137, %s139
      %p146 = scmp.eq.s32.totalorder %s19, 1
      %p147 = por %p145, %p146
      %p148 = scmp.ne.s32.totalorder %s139, %s140
      %p149 = scmp.eq.s32.totalorder %s19, 0
      %p150 = por %p148, %p149
      %p151 = scmp.ne.s32.totalorder %s139, %s140
      %p152 = scmp.eq.s32.totalorder %s20, 1
      %p153 = por %p151, %p152
      %p155 = scmp.ne.s32.totalorder %s140, %s154
      %p156 = scmp.eq.s32.totalorder %s20, 0
      %p157 = por %p155, %p156
      %s159 = sadd.s32 %s158, 1
      %p162 = scmp.eq.s32.totalorder %s14, 1
      %p163 = scmp.ne.s32.totalorder %s158, %s160
      %p164 = scmp.eq.s32.totalorder %s14, 0
      %p165 = por %p163, %p164
      %p166 = scmp.ne.s32.totalorder %s158, %s160
      %p167 = scmp.eq.s32.totalorder %s19, 1
      %p168 = por %p166, %p167
      %p169 = scmp.ne.s32.totalorder %s160, %s161
      %p170 = scmp.eq.s32.totalorder %s19, 0
      %p171 = por %p169, %p170
      %p172 = scmp.ne.s32.totalorder %s160, %s161
      %p173 = scmp.eq.s32.totalorder %s20, 1
      %p174 = por %p172, %p173
      %p176 = scmp.ne.s32.totalorder %s161, %s175
      %p177 = scmp.eq.s32.totalorder %s20, 0
      %p178 = por %p176, %p177
      %s179 = ssub.s32 %s14, %s21
      %p180 = scmp.eq.s32.totalorder %s179, 0
      %s182 = sadd.s32 %s181, 1
      %s183 = scalar_select %p180, %s181, %s182
      %p186 = pneg %p180
      %p187 = scmp.eq.s32.totalorder %s14, 1
      %p188 = por %p186, %p187
      %p189 = scmp.ne.s32.totalorder %s181, %s184
      %p190 = scmp.eq.s32.totalorder %s14, 0
      %p191 = por %p189, %p190
      %p192 = scmp.ne.s32.totalorder %s181, %s184
      %p193 = scmp.eq.s32.totalorder %s19, 1
      %p194 = por %p192, %p193
      %p195 = scmp.ne.s32.totalorder %s184, %s185
      %p196 = scmp.eq.s32.totalorder %s19, 0
      %p197 = por %p195, %p196
      %p198 = scmp.ne.s32.totalorder %s184, %s185
      %p199 = scmp.eq.s32.totalorder %s20, 1
      %p200 = por %p198, %p199
      %p202 = scmp.ne.s32.totalorder %s185, %s201
      %p203 = scmp.eq.s32.totalorder %s20, 0
      %p204 = por %p202, %p203
      %p205 = scmp.le.s32.totalorder 1, %s14
      %p206 = scmp.lt.s32.totalorder %s14, 3
      %p207 = pnand %p205, %p206
      %p208 = pneg %p207
      // Predicated region
      $region9: #{tpu_custom_call.1} parent=5 // pred_check
        _
      $region10: #{tpu_custom_call.1} parent=5 // pred_check_branch
        %210 = sbr.rel (%p207) target = $region12
      $region11: #{tpu_custom_call.1} parent=5 // pred_region
        %s211 = ssub.s32 %s14, 1
        // Predicated region
        $region13: #{tpu_custom_call.1} parent=11 // pred_check
          %p212 = pneg %p87
        $region14: #{tpu_custom_call.1} parent=11 // pred_check_branch
          %214 = sbr.rel (%p212) target = $region16
        $region15: #{tpu_custom_call.1} parent=11 // pred_region
          _
        $region16: #{tpu_custom_call.1} parent=11 // pred_fallthru
          _
        // Predicated region
        $region17: #{tpu_custom_call.1} parent=11 // pred_check
          %p215 = pneg %p108
        $region18: #{tpu_custom_call.1} parent=11 // pred_check_branch
          %217 = sbr.rel (%p215) target = $region20
        $region19: #{tpu_custom_call.1} parent=11 // pred_region
          %s219 = ssub.s32 3072, 3072
          %220 = vsyncadd [#allocation3], %s219
          %s221 = sshll.u32 [#allocation2], 4
          %s222 = int_to_ptr.vmem [resolvable:$true] %s221
          %227 = dma.hbm_to_vmem [thread:$0]  %s3, 3072, %s222, [#allocation3], 64, 64, 4
        $region20: #{tpu_custom_call.1} parent=11 // pred_fallthru
          _
        // Predicated region
        $region21: #{tpu_custom_call.1} parent=11 // pred_check
          %p228 = pneg %p129
        $region22: #{tpu_custom_call.1} parent=11 // pred_check_branch
          %230 = sbr.rel (%p228) target = $region24
        $region23: #{tpu_custom_call.1} parent=11 // pred_region
          _
        $region24: #{tpu_custom_call.1} parent=11 // pred_fallthru
          _
        // Predicated region
        $region25: #{tpu_custom_call.1} parent=11 // pred_check
          %p231 = pneg %p150
        $region26: #{tpu_custom_call.1} parent=11 // pred_check_branch
          %233 = sbr.rel (%p231) target = $region28
        $region27: #{tpu_custom_call.1} parent=11 // pred_region
          _
        $region28: #{tpu_custom_call.1} parent=11 // pred_fallthru
          _
        // Predicated region
        $region29: #{tpu_custom_call.1} parent=11 // pred_check
          %p234 = pneg %p171
        $region30: #{tpu_custom_call.1} parent=11 // pred_check_branch
          %236 = sbr.rel (%p234) target = $region32
        $region31: #{tpu_custom_call.1} parent=11 // pred_region
          _
        $region32: #{tpu_custom_call.1} parent=11 // pred_fallthru
          _
      $region12: #{tpu_custom_call.1} parent=5 // pred_fallthru
        _
      %p237 = scmp.lt.s32.totalorder %s14, 2
      // Predicated region
      $region33: #{tpu_custom_call.1} parent=5 // pred_check
        %p238 = pneg %p237
      $region34: #{tpu_custom_call.1} parent=5 // pred_check_branch
        %240 = sbr.rel (%p238) target = $region36
      $region35: #{tpu_custom_call.1} parent=5 // pred_region
        // Predicated region
        $region37: #{tpu_custom_call.1} parent=35 // pred_check
          %p241 = pneg %p34
        $region38: #{tpu_custom_call.1} parent=35 // pred_check_branch
          %243 = sbr.rel (%p241) target = $region40
        $region39: #{tpu_custom_call.1} parent=35 // pred_region
          %p244 = scmp.lt.s32.totalorder %s14, 1
          %s245 = scalar_select %p244, %s14, 1
          %s246 = smul.addr %s245, 96
          %s247 = smul.addr %s246, 4
          %s248 = scalar_lea.vmem %s0, %s247
        $region40: #{tpu_custom_call.1} parent=35 // pred_fallthru
          _
        // Predicated region
        $region41: #{tpu_custom_call.1} parent=35 // pred_check
          %p249 = pneg %p60
        $region42: #{tpu_custom_call.1} parent=35 // pred_check_branch
          %251 = sbr.rel (%p249) target = $region44
        $region43: #{tpu_custom_call.1} parent=35 // pred_region
          %p252 = scmp.lt.s32.totalorder %s14, 1
          %s253 = scalar_select %p252, %s14, 1
          %s254 = smul.addr %s253, 48
          %s255 = scalar_lea.vmem %s1, %s254
        $region44: #{tpu_custom_call.1} parent=35 // pred_fallthru
          _
      $region36: #{tpu_custom_call.1} parent=5 // pred_fallthru
        _
      %p256 = scmp.le.s32.totalorder 1, %s14
      %p257 = scmp.lt.s32.totalorder %s14, 3
      %p258 = pnand %p256, %p257
      %p259 = pneg %p258
      // Predicated region
      $region45: #{tpu_custom_call.1} parent=5 // pred_check
        _
      $region46: #{tpu_custom_call.1} parent=5 // pred_check_branch
        %261 = sbr.rel (%p258) target = $region48
      $region47: #{tpu_custom_call.1} parent=5 // pred_region
        %s262 = ssub.s32 %s14, 1
        // Predicated region
        $region49: #{tpu_custom_call.1} parent=47 // pred_check
          %p263 = pneg %p108
        $region50: #{tpu_custom_call.1} parent=47 // pred_check_branch
          %265 = sbr.rel (%p263) target = $region52
        $region51: #{tpu_custom_call.1} parent=47 // pred_region
          %266 = dma.done [#allocation3], 3072
        $region52: #{tpu_custom_call.1} parent=47 // pred_fallthru
          _
        %p267 = scmp.lt.s32.totalorder %s19, 1
        %s268 = scalar_select %p267, %s19, 1
        %s269 = smul.addr %s268, 96
        %s270 = smul.addr %s269, 4
        %s271 = scalar_lea.vmem %s0, %s270
        %p272 = pneg %p40
        %p273 = pneg %p37
        %p274 = scmp.lt.s32.totalorder %s19, 1
        %s275 = scalar_select %p274, %s19, 1
        %s276 = smul.addr %s275, 48
        %s277 = scalar_lea.vmem %s1, %s276
        %p278 = pneg %p66
        %p279 = pneg %p63
        %p280 = pneg %p87
        %p281 = pneg %p84
        %p282 = pneg %p108
        %p283 = pneg %p105
        %p284 = pneg %p129
        %p285 = pneg %p126
        %p286 = pneg %p150
        %p287 = pneg %p147
        %p288 = pneg %p171
        %p289 = pneg %p168
        %p290 = pneg %p197
        %p291 = pneg %p194
        %p292 = scmp.lt.s32.totalorder %s19, 1
        %s293 = scalar_select %p292, %s19, 1
        %s294 = smul.addr %s293, 4
        %s295 = smul.addr %s294, 4
        %s296 = scalar_lea.vmem %s7, %s295
        %p297 = scmp.lt.s32.totalorder %s19, 1
        %s298 = scalar_select %p297, %s19, 1
        %s299 = smul.addr %s298, 96
        %s300 = smul.addr %s299, 4
        %s301 = scalar_lea.vmem %s0, %s300
        %p302 = scmp.lt.s32.totalorder %s19, 1
        %s303 = scalar_select %p302, %s19, 1
        %s304 = smul.addr %s303, 48
        %s305 = scalar_lea.vmem %s1, %s304
        %p306 = scmp.lt.s32.totalorder %s19, 1
        %s307 = scalar_select %p306, %s19, 1
        %s308 = smul.addr %s307, 4
        %s309 = smul.addr %s308, 4
        %s310 = scalar_lea.vmem %s7, %s309
        %v312 = vld [vmem:[%s301] sm:$0xff]
        %v313 = vld [vmem:[%s301 + $0x8] sm:$0xff]
        %v314 = vld [vmem:[%s301 + $0x10] sm:$0xff]
        %v315 = vld [vmem:[%s301 + $0x18] sm:$0xff]
        %v316 = vld [vmem:[%s301 + $0x20] sm:$0xff]
        %v317 = vld [vmem:[%s301 + $0x28] sm:$0xff]
        %v318 = vld [vmem:[%s301 + $0x30] sm:$0xff]
        %v319 = vld [vmem:[%s301 + $0x38] sm:$0xff]
        %v320 = vld [vmem:[%s301 + $0x40] sm:$0xff]
        %v321 = vld [vmem:[%s301 + $0x48] sm:$0xff]
        %v322 = vld [vmem:[%s301 + $0x50] sm:$0xff]
        %v323 = vld [vmem:[%s301 + $0x58] sm:$0xff]
        %v324 = vld [vmem:[%s301 + $0x60] sm:$0xff]
        %v325 = vld [vmem:[%s301 + $0x68] sm:$0xff]
        %v326 = vld [vmem:[%s301 + $0x70] sm:$0xff]
        %v327 = vld [vmem:[%s301 + $0x78] sm:$0xff]
        %v328 = vld [vmem:[%s301 + $0x80] sm:$0xff]
        %v329 = vld [vmem:[%s301 + $0x88] sm:$0xff]
        %v330 = vld [vmem:[%s301 + $0x90] sm:$0xff]
        %v331 = vld [vmem:[%s301 + $0x98] sm:$0xff]
        %v332 = vld [vmem:[%s301 + $0xa0] sm:$0xff]
        %v333 = vld [vmem:[%s301 + $0xa8] sm:$0xff]
        %v334 = vld [vmem:[%s301 + $0xb0] sm:$0xff]
        %v335 = vld [vmem:[%s301 + $0xb8] sm:$0xff]
        %v336 = vld [vmem:[%s301 + $0xc0] sm:$0xff]
        %v337 = vld [vmem:[%s301 + $0xc8] sm:$0xff]
        %v338 = vld [vmem:[%s301 + $0xd0] sm:$0xff]
        %v339 = vld [vmem:[%s301 + $0xd8] sm:$0xff]
        %v340 = vld [vmem:[%s301 + $0xe0] sm:$0xff]
        %v341 = vld [vmem:[%s301 + $0xe8] sm:$0xff]
        %v342 = vld [vmem:[%s301 + $0xf0] sm:$0xff]
        %v343 = vld [vmem:[%s301 + $0xf8] sm:$0xff]
        %v344 = vld [vmem:[%s301 + $0x100] sm:$0xff]
        %v345 = vld [vmem:[%s301 + $0x108] sm:$0xff]
        %v346 = vld [vmem:[%s301 + $0x110] sm:$0xff]
        %v347 = vld [vmem:[%s301 + $0x118] sm:$0xff]
        %v348 = vld [vmem:[%s301 + $0x120] sm:$0xff]
        %v349 = vld [vmem:[%s301 + $0x128] sm:$0xff]
        %v350 = vld [vmem:[%s301 + $0x130] sm:$0xff]
        %v351 = vld [vmem:[%s301 + $0x138] sm:$0xff]
        %v352 = vld [vmem:[%s301 + $0x140] sm:$0xff]
        %v353 = vld [vmem:[%s301 + $0x148] sm:$0xff]
        %v354 = vld [vmem:[%s301 + $0x150] sm:$0xff]
        %v355 = vld [vmem:[%s301 + $0x158] sm:$0xff]
        %v356 = vld [vmem:[%s301 + $0x160] sm:$0xff]
        %v357 = vld [vmem:[%s301 + $0x168] sm:$0xff]
        %v358 = vld [vmem:[%s301 + $0x170] sm:$0xff]
        %v359 = vld [vmem:[%s301 + $0x178] sm:$0xff]
        %v360 = vld [vmem:[%s305] sm:$0xf]
        %v361 = vld [vmem:[%s305 + $0x4] sm:$0xf]
        %v362 = vld [vmem:[%s305 + $0x8] sm:$0xf]
        %v363 = vld [vmem:[%s305 + $0xc] sm:$0xf]
        %v364 = vld [vmem:[%s305 + $0x10] sm:$0xf]
        %v365 = vld [vmem:[%s305 + $0x14] sm:$0xf]
        %v366 = vld [vmem:[%s305 + $0x18] sm:$0xf]
        %v367 = vld [vmem:[%s305 + $0x1c] sm:$0xf]
        %v368 = vld [vmem:[%s305 + $0x20] sm:$0xf]
        %v369 = vld [vmem:[%s305 + $0x24] sm:$0xf]
        %v370 = vld [vmem:[%s305 + $0x28] sm:$0xf]
        %v371 = vld [vmem:[%s305 + $0x2c] sm:$0xf]
        %v385 = vunpack.c.l.s4 1966171168
        %v386 = vunpack.c.0.s8 %v385
        %v387 = vlaneseq
        %v388 = vshrl.u32 %v387, 7
        %v389 = vsub.s32 %v386, %v388
        %v390 = vrot.slane %v360, %v389
        %v391 = vcombine.high %v390, %v390
        %v393 = vunpack.c.l.s4 1966171168
        %v394 = vunpack.c.0.s8 %v393
        %v395 = vlaneseq
        %v396 = vshrl.u32 %v395, 7
        %v397 = vsub.s32 %v394, %v396
        %v398 = vrot.slane %v390, %v397
        %v400 = vunpack.c.l.s4 1966171168
        %v401 = vunpack.c.0.s8 %v400
        %v402 = vlaneseq
        %v403 = vshrl.u32 %v402, 7
        %v404 = vsub.s32 %v401, %v403
        %v405 = vrot.slane %v391, %v404
        %v406 = vcombine.high %v398, %v398
        %v407 = vcombine.high %v405, %v405
        %v409 = vunpack.c.l.s4 1966171168
        %v410 = vunpack.c.0.s8 %v409
        %v411 = vlaneseq
        %v412 = vshrl.u32 %v411, 7
        %v413 = vsub.s32 %v410, %v412
        %v414 = vrot.slane %v361, %v413
        %v415 = vcombine.high %v414, %v414
        %v417 = vunpack.c.l.s4 1966171168
        %v418 = vunpack.c.0.s8 %v417
        %v419 = vlaneseq
        %v420 = vshrl.u32 %v419, 7
        %v421 = vsub.s32 %v418, %v420
        %v422 = vrot.slane %v414, %v421
        %v424 = vunpack.c.l.s4 1966171168
        %v425 = vunpack.c.0.s8 %v424
        %v426 = vlaneseq
        %v427 = vshrl.u32 %v426, 7
        %v428 = vsub.s32 %v425, %v427
        %v429 = vrot.slane %v415, %v428
        %v430 = vcombine.high %v422, %v422
        %v431 = vcombine.high %v429, %v429
        %v433 = vunpack.c.l.s4 1966171168
        %v434 = vunpack.c.0.s8 %v433
        %v435 = vlaneseq
        %v436 = vshrl.u32 %v435, 7
        %v437 = vsub.s32 %v434, %v436
        %v438 = vrot.slane %v362, %v437
        %v439 = vcombine.high %v438, %v438
        %v441 = vunpack.c.l.s4 1966171168
        %v442 = vunpack.c.0.s8 %v441
        %v443 = vlaneseq
        %v444 = vshrl.u32 %v443, 7
        %v445 = vsub.s32 %v442, %v444
        %v446 = vrot.slane %v438, %v445
        %v448 = vunpack.c.l.s4 1966171168
        %v449 = vunpack.c.0.s8 %v448
        %v450 = vlaneseq
        %v451 = vshrl.u32 %v450, 7
        %v452 = vsub.s32 %v449, %v451
        %v453 = vrot.slane %v439, %v452
        %v454 = vcombine.high %v446, %v446
        %v455 = vcombine.high %v453, %v453
        %v457 = vunpack.c.l.s4 1966171168
        %v458 = vunpack.c.0.s8 %v457
        %v459 = vlaneseq
        %v460 = vshrl.u32 %v459, 7
        %v461 = vsub.s32 %v458, %v460
        %v462 = vrot.slane %v363, %v461
        %v463 = vcombine.high %v462, %v462
        %v465 = vunpack.c.l.s4 1966171168
        %v466 = vunpack.c.0.s8 %v465
        %v467 = vlaneseq
        %v468 = vshrl.u32 %v467, 7
        %v469 = vsub.s32 %v466, %v468
        %v470 = vrot.slane %v462, %v469
        %v472 = vunpack.c.l.s4 1966171168
        %v473 = vunpack.c.0.s8 %v472
        %v474 = vlaneseq
        %v475 = vshrl.u32 %v474, 7
        %v476 = vsub.s32 %v473, %v475
        %v477 = vrot.slane %v463, %v476
        %v478 = vcombine.high %v470, %v470
        %v479 = vcombine.high %v477, %v477
        %v481 = vunpack.c.l.s4 1966171168
        %v482 = vunpack.c.0.s8 %v481
        %v483 = vlaneseq
        %v484 = vshrl.u32 %v483, 7
        %v485 = vsub.s32 %v482, %v484
        %v486 = vrot.slane %v364, %v485
        %v487 = vcombine.high %v486, %v486
        %v489 = vunpack.c.l.s4 1966171168
        %v490 = vunpack.c.0.s8 %v489
        %v491 = vlaneseq
        %v492 = vshrl.u32 %v491, 7
        %v493 = vsub.s32 %v490, %v492
        %v494 = vrot.slane %v486, %v493
        %v496 = vunpack.c.l.s4 1966171168
        %v497 = vunpack.c.0.s8 %v496
        %v498 = vlaneseq
        %v499 = vshrl.u32 %v498, 7
        %v500 = vsub.s32 %v497, %v499
        %v501 = vrot.slane %v487, %v500
        %v502 = vcombine.high %v494, %v494
        %v503 = vcombine.high %v501, %v501
        %v505 = vunpack.c.l.s4 1966171168
        %v506 = vunpack.c.0.s8 %v505
        %v507 = vlaneseq
        %v508 = vshrl.u32 %v507, 7
        %v509 = vsub.s32 %v506, %v508
        %v510 = vrot.slane %v365, %v509
        %v511 = vcombine.high %v510, %v510
        %v513 = vunpack.c.l.s4 1966171168
        %v514 = vunpack.c.0.s8 %v513
        %v515 = vlaneseq
        %v516 = vshrl.u32 %v515, 7
        %v517 = vsub.s32 %v514, %v516
        %v518 = vrot.slane %v510, %v517
        %v520 = vunpack.c.l.s4 1966171168
        %v521 = vunpack.c.0.s8 %v520
        %v522 = vlaneseq
        %v523 = vshrl.u32 %v522, 7
        %v524 = vsub.s32 %v521, %v523
        %v525 = vrot.slane %v511, %v524
        %v526 = vcombine.high %v518, %v518
        %v527 = vcombine.high %v525, %v525
        %v529 = vunpack.c.l.s4 1966171168
        %v530 = vunpack.c.0.s8 %v529
        %v531 = vlaneseq
        %v532 = vshrl.u32 %v531, 7
        %v533 = vsub.s32 %v530, %v532
        %v534 = vrot.slane %v366, %v533
        %v535 = vcombine.high %v534, %v534
        %v537 = vunpack.c.l.s4 1966171168
        %v538 = vunpack.c.0.s8 %v537
        %v539 = vlaneseq
        %v540 = vshrl.u32 %v539, 7
        %v541 = vsub.s32 %v538, %v540
        %v542 = vrot.slane %v534, %v541
        %v544 = vunpack.c.l.s4 1966171168
        %v545 = vunpack.c.0.s8 %v544
        %v546 = vlaneseq
        %v547 = vshrl.u32 %v546, 7
        %v548 = vsub.s32 %v545, %v547
        %v549 = vrot.slane %v535, %v548
        %v550 = vcombine.high %v542, %v542
        %v551 = vcombine.high %v549, %v549
        %v553 = vunpack.c.l.s4 1966171168
        %v554 = vunpack.c.0.s8 %v553
        %v555 = vlaneseq
        %v556 = vshrl.u32 %v555, 7
        %v557 = vsub.s32 %v554, %v556
        %v558 = vrot.slane %v367, %v557
        %v559 = vcombine.high %v558, %v558
        %v561 = vunpack.c.l.s4 1966171168
        %v562 = vunpack.c.0.s8 %v561
        %v563 = vlaneseq
        %v564 = vshrl.u32 %v563, 7
        %v565 = vsub.s32 %v562, %v564
        %v566 = vrot.slane %v558, %v565
        %v568 = vunpack.c.l.s4 1966171168
        %v569 = vunpack.c.0.s8 %v568
        %v570 = vlaneseq
        %v571 = vshrl.u32 %v570, 7
        %v572 = vsub.s32 %v569, %v571
        %v573 = vrot.slane %v559, %v572
        %v574 = vcombine.high %v566, %v566
        %v575 = vcombine.high %v573, %v573
        %v577 = vunpack.c.l.s4 1966171168
        %v578 = vunpack.c.0.s8 %v577
        %v579 = vlaneseq
        %v580 = vshrl.u32 %v579, 7
        %v581 = vsub.s32 %v578, %v580
        %v582 = vrot.slane %v368, %v581
        %v583 = vcombine.high %v582, %v582
        %v585 = vunpack.c.l.s4 1966171168
        %v586 = vunpack.c.0.s8 %v585
        %v587 = vlaneseq
        %v588 = vshrl.u32 %v587, 7
        %v589 = vsub.s32 %v586, %v588
        %v590 = vrot.slane %v582, %v589
        %v592 = vunpack.c.l.s4 1966171168
        %v593 = vunpack.c.0.s8 %v592
        %v594 = vlaneseq
        %v595 = vshrl.u32 %v594, 7
        %v596 = vsub.s32 %v593, %v595
        %v597 = vrot.slane %v583, %v596
        %v598 = vcombine.high %v590, %v590
        %v599 = vcombine.high %v597, %v597
        %v601 = vunpack.c.l.s4 1966171168
        %v602 = vunpack.c.0.s8 %v601
        %v603 = vlaneseq
        %v604 = vshrl.u32 %v603, 7
        %v605 = vsub.s32 %v602, %v604
        %v606 = vrot.slane %v369, %v605
        %v607 = vcombine.high %v606, %v606
        %v609 = vunpack.c.l.s4 1966171168
        %v610 = vunpack.c.0.s8 %v609
        %v611 = vlaneseq
        %v612 = vshrl.u32 %v611, 7
        %v613 = vsub.s32 %v610, %v612
        %v614 = vrot.slane %v606, %v613
        %v616 = vunpack.c.l.s4 1966171168
        %v617 = vunpack.c.0.s8 %v616
        %v618 = vlaneseq
        %v619 = vshrl.u32 %v618, 7
        %v620 = vsub.s32 %v617, %v619
        %v621 = vrot.slane %v607, %v620
        %v622 = vcombine.high %v614, %v614
        %v623 = vcombine.high %v621, %v621
        %v625 = vunpack.c.l.s4 1966171168
        %v626 = vunpack.c.0.s8 %v625
        %v627 = vlaneseq
        %v628 = vshrl.u32 %v627, 7
        %v629 = vsub.s32 %v626, %v628
        %v630 = vrot.slane %v370, %v629
        %v631 = vcombine.high %v630, %v630
        %v633 = vunpack.c.l.s4 1966171168
        %v634 = vunpack.c.0.s8 %v633
        %v635 = vlaneseq
        %v636 = vshrl.u32 %v635, 7
        %v637 = vsub.s32 %v634, %v636
        %v638 = vrot.slane %v630, %v637
        %v640 = vunpack.c.l.s4 1966171168
        %v641 = vunpack.c.0.s8 %v640
        %v642 = vlaneseq
        %v643 = vshrl.u32 %v642, 7
        %v644 = vsub.s32 %v641, %v643
        %v645 = vrot.slane %v631, %v644
        %v646 = vcombine.high %v638, %v638
        %v647 = vcombine.high %v645, %v645
        %v649 = vunpack.c.l.s4 1966171168
        %v650 = vunpack.c.0.s8 %v649
        %v651 = vlaneseq
        %v652 = vshrl.u32 %v651, 7
        %v653 = vsub.s32 %v650, %v652
        %v654 = vrot.slane %v371, %v653
        %v655 = vcombine.high %v654, %v654
        %v657 = vunpack.c.l.s4 1966171168
        %v658 = vunpack.c.0.s8 %v657
        %v659 = vlaneseq
        %v660 = vshrl.u32 %v659, 7
        %v661 = vsub.s32 %v658, %v660
        %v662 = vrot.slane %v654, %v661
        %v664 = vunpack.c.l.s4 1966171168
        %v665 = vunpack.c.0.s8 %v664
        %v666 = vlaneseq
        %v667 = vshrl.u32 %v666, 7
        %v668 = vsub.s32 %v665, %v667
        %v669 = vrot.slane %v655, %v668
        %v670 = vcombine.high %v662, %v662
        %v671 = vcombine.high %v669, %v669
        %v673 = vpack.i.b16 %v398, %v398
        %v675 = vlaneseq
        %v676 = vshrl.u32 %v675, 7
        %v677 = vsub.s32 0, %v676
        %v678 = vrot.slane %v673, %v677
        %v680 = vpack.i.b16 %v405, %v405
        %v682 = vlaneseq
        %v683 = vshrl.u32 %v682, 7
        %v684 = vsub.s32 0, %v683
        %v685 = vrot.slane %v680, %v684
        %v687 = vpack.i.b16 %v406, %v406
        %v689 = vlaneseq
        %v690 = vshrl.u32 %v689, 7
        %v691 = vsub.s32 0, %v690
        %v692 = vrot.slane %v687, %v691
        %v694 = vpack.i.b16 %v407, %v407
        %v696 = vlaneseq
        %v697 = vshrl.u32 %v696, 7
        %v698 = vsub.s32 0, %v697
        %v699 = vrot.slane %v694, %v698
        %v701 = vpack.i.b16 %v422, %v422
        %v703 = vlaneseq
        %v704 = vshrl.u32 %v703, 7
        %v705 = vsub.s32 0, %v704
        %v706 = vrot.slane %v701, %v705
        %v708 = vpack.i.b16 %v429, %v429
        %v710 = vlaneseq
        %v711 = vshrl.u32 %v710, 7
        %v712 = vsub.s32 0, %v711
        %v713 = vrot.slane %v708, %v712
        %v715 = vpack.i.b16 %v430, %v430
        %v717 = vlaneseq
        %v718 = vshrl.u32 %v717, 7
        %v719 = vsub.s32 0, %v718
        %v720 = vrot.slane %v715, %v719
        %v722 = vpack.i.b16 %v431, %v431
        %v724 = vlaneseq
        %v725 = vshrl.u32 %v724, 7
        %v726 = vsub.s32 0, %v725
        %v727 = vrot.slane %v722, %v726
        %v729 = vpack.i.b16 %v446, %v446
        %v731 = vlaneseq
        %v732 = vshrl.u32 %v731, 7
        %v733 = vsub.s32 0, %v732
        %v734 = vrot.slane %v729, %v733
        %v736 = vpack.i.b16 %v453, %v453
        %v738 = vlaneseq
        %v739 = vshrl.u32 %v738, 7
        %v740 = vsub.s32 0, %v739
        %v741 = vrot.slane %v736, %v740
        %v743 = vpack.i.b16 %v454, %v454
        %v745 = vlaneseq
        %v746 = vshrl.u32 %v745, 7
        %v747 = vsub.s32 0, %v746
        %v748 = vrot.slane %v743, %v747
        %v750 = vpack.i.b16 %v455, %v455
        %v752 = vlaneseq
        %v753 = vshrl.u32 %v752, 7
        %v754 = vsub.s32 0, %v753
        %v755 = vrot.slane %v750, %v754
        %v757 = vpack.i.b16 %v470, %v470
        %v759 = vlaneseq
        %v760 = vshrl.u32 %v759, 7
        %v761 = vsub.s32 0, %v760
        %v762 = vrot.slane %v757, %v761
        %v764 = vpack.i.b16 %v477, %v477
        %v766 = vlaneseq
        %v767 = vshrl.u32 %v766, 7
        %v768 = vsub.s32 0, %v767
        %v769 = vrot.slane %v764, %v768
        %v771 = vpack.i.b16 %v478, %v478
        %v773 = vlaneseq
        %v774 = vshrl.u32 %v773, 7
        %v775 = vsub.s32 0, %v774
        %v776 = vrot.slane %v771, %v775
        %v778 = vpack.i.b16 %v479, %v479
        %v780 = vlaneseq
        %v781 = vshrl.u32 %v780, 7
        %v782 = vsub.s32 0, %v781
        %v783 = vrot.slane %v778, %v782
        %v785 = vpack.i.b16 %v494, %v494
        %v787 = vlaneseq
        %v788 = vshrl.u32 %v787, 7
        %v789 = vsub.s32 0, %v788
        %v790 = vrot.slane %v785, %v789
        %v792 = vpack.i.b16 %v501, %v501
        %v794 = vlaneseq
        %v795 = vshrl.u32 %v794, 7
        %v796 = vsub.s32 0, %v795
        %v797 = vrot.slane %v792, %v796
        %v799 = vpack.i.b16 %v502, %v502
        %v801 = vlaneseq
        %v802 = vshrl.u32 %v801, 7
        %v803 = vsub.s32 0, %v802
        %v804 = vrot.slane %v799, %v803
        %v806 = vpack.i.b16 %v503, %v503
        %v808 = vlaneseq
        %v809 = vshrl.u32 %v808, 7
        %v810 = vsub.s32 0, %v809
        %v811 = vrot.slane %v806, %v810
        %v813 = vpack.i.b16 %v518, %v518
        %v815 = vlaneseq
        %v816 = vshrl.u32 %v815, 7
        %v817 = vsub.s32 0, %v816
        %v818 = vrot.slane %v813, %v817
        %v820 = vpack.i.b16 %v525, %v525
        %v822 = vlaneseq
        %v823 = vshrl.u32 %v822, 7
        %v824 = vsub.s32 0, %v823
        %v825 = vrot.slane %v820, %v824
        %v827 = vpack.i.b16 %v526, %v526
        %v829 = vlaneseq
        %v830 = vshrl.u32 %v829, 7
        %v831 = vsub.s32 0, %v830
        %v832 = vrot.slane %v827, %v831
        %v834 = vpack.i.b16 %v527, %v527
        %v836 = vlaneseq
        %v837 = vshrl.u32 %v836, 7
        %v838 = vsub.s32 0, %v837
        %v839 = vrot.slane %v834, %v838
        %v841 = vpack.i.b16 %v542, %v542
        %v843 = vlaneseq
        %v844 = vshrl.u32 %v843, 7
        %v845 = vsub.s32 0, %v844
        %v846 = vrot.slane %v841, %v845
        %v848 = vpack.i.b16 %v549, %v549
        %v850 = vlaneseq
        %v851 = vshrl.u32 %v850, 7
        %v852 = vsub.s32 0, %v851
        %v853 = vrot.slane %v848, %v852
        %v855 = vpack.i.b16 %v550, %v550
        %v857 = vlaneseq
        %v858 = vshrl.u32 %v857, 7
        %v859 = vsub.s32 0, %v858
        %v860 = vrot.slane %v855, %v859
        %v862 = vpack.i.b16 %v551, %v551
        %v864 = vlaneseq
        %v865 = vshrl.u32 %v864, 7
        %v866 = vsub.s32 0, %v865
        %v867 = vrot.slane %v862, %v866
        %v869 = vpack.i.b16 %v566, %v566
        %v871 = vlaneseq
        %v872 = vshrl.u32 %v871, 7
        %v873 = vsub.s32 0, %v872
        %v874 = vrot.slane %v869, %v873
        %v876 = vpack.i.b16 %v573, %v573
        %v878 = vlaneseq
        %v879 = vshrl.u32 %v878, 7
        %v880 = vsub.s32 0, %v879
        %v881 = vrot.slane %v876, %v880
        %v883 = vpack.i.b16 %v574, %v574
        %v885 = vlaneseq
        %v886 = vshrl.u32 %v885, 7
        %v887 = vsub.s32 0, %v886
        %v888 = vrot.slane %v883, %v887
        %v890 = vpack.i.b16 %v575, %v575
        %v892 = vlaneseq
        %v893 = vshrl.u32 %v892, 7
        %v894 = vsub.s32 0, %v893
        %v895 = vrot.slane %v890, %v894
        %v897 = vpack.i.b16 %v590, %v590
        %v899 = vlaneseq
        %v900 = vshrl.u32 %v899, 7
        %v901 = vsub.s32 0, %v900
        %v902 = vrot.slane %v897, %v901
        %v904 = vpack.i.b16 %v597, %v597
        %v906 = vlaneseq
        %v907 = vshrl.u32 %v906, 7
        %v908 = vsub.s32 0, %v907
        %v909 = vrot.slane %v904, %v908
        %v911 = vpack.i.b16 %v598, %v598
        %v913 = vlaneseq
        %v914 = vshrl.u32 %v913, 7
        %v915 = vsub.s32 0, %v914
        %v916 = vrot.slane %v911, %v915
        %v918 = vpack.i.b16 %v599, %v599
        %v920 = vlaneseq
        %v921 = vshrl.u32 %v920, 7
        %v922 = vsub.s32 0, %v921
        %v923 = vrot.slane %v918, %v922
        %v925 = vpack.i.b16 %v614, %v614
        %v927 = vlaneseq
        %v928 = vshrl.u32 %v927, 7
        %v929 = vsub.s32 0, %v928
        %v930 = vrot.slane %v925, %v929
        %v932 = vpack.i.b16 %v621, %v621
        %v934 = vlaneseq
        %v935 = vshrl.u32 %v934, 7
        %v936 = vsub.s32 0, %v935
        %v937 = vrot.slane %v932, %v936
        %v939 = vpack.i.b16 %v622, %v622
        %v941 = vlaneseq
        %v942 = vshrl.u32 %v941, 7
        %v943 = vsub.s32 0, %v942
        %v944 = vrot.slane %v939, %v943
        %v946 = vpack.i.b16 %v623, %v623
        %v948 = vlaneseq
        %v949 = vshrl.u32 %v948, 7
        %v950 = vsub.s32 0, %v949
        %v951 = vrot.slane %v946, %v950
        %v953 = vpack.i.b16 %v638, %v638
        %v955 = vlaneseq
        %v956 = vshrl.u32 %v955, 7
        %v957 = vsub.s32 0, %v956
        %v958 = vrot.slane %v953, %v957
        %v960 = vpack.i.b16 %v645, %v645
        %v962 = vlaneseq
        %v963 = vshrl.u32 %v962, 7
        %v964 = vsub.s32 0, %v963
        %v965 = vrot.slane %v960, %v964
        %v967 = vpack.i.b16 %v646, %v646
        %v969 = vlaneseq
        %v970 = vshrl.u32 %v969, 7
        %v971 = vsub.s32 0, %v970
        %v972 = vrot.slane %v967, %v971
        %v974 = vpack.i.b16 %v647, %v647
        %v976 = vlaneseq
        %v977 = vshrl.u32 %v976, 7
        %v978 = vsub.s32 0, %v977
        %v979 = vrot.slane %v974, %v978
        %v981 = vpack.i.b16 %v662, %v662
        %v983 = vlaneseq
        %v984 = vshrl.u32 %v983, 7
        %v985 = vsub.s32 0, %v984
        %v986 = vrot.slane %v981, %v985
        %v988 = vpack.i.b16 %v669, %v669
        %v990 = vlaneseq
        %v991 = vshrl.u32 %v990, 7
        %v992 = vsub.s32 0, %v991
        %v993 = vrot.slane %v988, %v992
        %v995 = vpack.i.b16 %v670, %v670
        %v997 = vlaneseq
        %v998 = vshrl.u32 %v997, 7
        %v999 = vsub.s32 0, %v998
        %v1000 = vrot.slane %v995, %v999
        %v1002 = vpack.i.b16 %v671, %v671
        %v1004 = vlaneseq
        %v1005 = vshrl.u32 %v1004, 7
        %v1006 = vsub.s32 0, %v1005
        %v1007 = vrot.slane %v1002, %v1006
        %v1056 = vunpack.c.l.b16 %v312
        %v1057 = vunpack.c.h.b16 %v312
        %v1058 = vunpack.c.l.b16 %v313
        %v1059 = vunpack.c.h.b16 %v313
        %v1060 = vunpack.c.l.b16 %v314
        %v1061 = vunpack.c.h.b16 %v314
        %v1062 = vunpack.c.l.b16 %v315
        %v1063 = vunpack.c.h.b16 %v315
        %v1064 = vunpack.c.l.b16 %v316
        %v1065 = vunpack.c.h.b16 %v316
        %v1066 = vunpack.c.l.b16 %v317
        %v1067 = vunpack.c.h.b16 %v317
        %v1068 = vunpack.c.l.b16 %v318
        %v1069 = vunpack.c.h.b16 %v318
        %v1070 = vunpack.c.l.b16 %v319
        %v1071 = vunpack.c.h.b16 %v319
        %v1072 = vunpack.c.l.b16 %v320
        %v1073 = vunpack.c.h.b16 %v320
        %v1074 = vunpack.c.l.b16 %v321
        %v1075 = vunpack.c.h.b16 %v321
        %v1076 = vunpack.c.l.b16 %v322
        %v1077 = vunpack.c.h.b16 %v322
        %v1078 = vunpack.c.l.b16 %v323
        %v1079 = vunpack.c.h.b16 %v323
        %v1080 = vunpack.c.l.b16 %v324
        %v1081 = vunpack.c.h.b16 %v324
        %v1082 = vunpack.c.l.b16 %v325
        %v1083 = vunpack.c.h.b16 %v325
        %v1084 = vunpack.c.l.b16 %v326
        %v1085 = vunpack.c.h.b16 %v326
        %v1086 = vunpack.c.l.b16 %v327
        %v1087 = vunpack.c.h.b16 %v327
        %v1088 = vunpack.c.l.b16 %v328
        %v1089 = vunpack.c.h.b16 %v328
        %v1090 = vunpack.c.l.b16 %v329
        %v1091 = vunpack.c.h.b16 %v329
        %v1092 = vunpack.c.l.b16 %v330
        %v1093 = vunpack.c.h.b16 %v330
        %v1094 = vunpack.c.l.b16 %v331
        %v1095 = vunpack.c.h.b16 %v331
        %v1096 = vunpack.c.l.b16 %v332
        %v1097 = vunpack.c.h.b16 %v332
        %v1098 = vunpack.c.l.b16 %v333
        %v1099 = vunpack.c.h.b16 %v333
        %v1100 = vunpack.c.l.b16 %v334
        %v1101 = vunpack.c.h.b16 %v334
        %v1102 = vunpack.c.l.b16 %v335
        %v1103 = vunpack.c.h.b16 %v335
        %v1104 = vunpack.c.l.b16 %v336
        %v1105 = vunpack.c.h.b16 %v336
        %v1106 = vunpack.c.l.b16 %v337
        %v1107 = vunpack.c.h.b16 %v337
        %v1108 = vunpack.c.l.b16 %v338
        %v1109 = vunpack.c.h.b16 %v338
        %v1110 = vunpack.c.l.b16 %v339
        %v1111 = vunpack.c.h.b16 %v339
        %v1112 = vunpack.c.l.b16 %v340
        %v1113 = vunpack.c.h.b16 %v340
        %v1114 = vunpack.c.l.b16 %v341
        %v1115 = vunpack.c.h.b16 %v341
        %v1116 = vunpack.c.l.b16 %v342
        %v1117 = vunpack.c.h.b16 %v342
        %v1118 = vunpack.c.l.b16 %v343
        %v1119 = vunpack.c.h.b16 %v343
        %v1120 = vunpack.c.l.b16 %v344
        %v1121 = vunpack.c.h.b16 %v344
        %v1122 = vunpack.c.l.b16 %v345
        %v1123 = vunpack.c.h.b16 %v345
        %v1124 = vunpack.c.l.b16 %v346
        %v1125 = vunpack.c.h.b16 %v346
        %v1126 = vunpack.c.l.b16 %v347
        %v1127 = vunpack.c.h.b16 %v347
        %v1128 = vunpack.c.l.b16 %v348
        %v1129 = vunpack.c.h.b16 %v348
        %v1130 = vunpack.c.l.b16 %v349
        %v1131 = vunpack.c.h.b16 %v349
        %v1132 = vunpack.c.l.b16 %v350
        %v1133 = vunpack.c.h.b16 %v350
        %v1134 = vunpack.c.l.b16 %v351
        %v1135 = vunpack.c.h.b16 %v351
        %v1136 = vunpack.c.l.b16 %v352
        %v1137 = vunpack.c.h.b16 %v352
        %v1138 = vunpack.c.l.b16 %v353
        %v1139 = vunpack.c.h.b16 %v353
        %v1140 = vunpack.c.l.b16 %v354
        %v1141 = vunpack.c.h.b16 %v354
        %v1142 = vunpack.c.l.b16 %v355
        %v1143 = vunpack.c.h.b16 %v355
        %v1144 = vunpack.c.l.b16 %v356
        %v1145 = vunpack.c.h.b16 %v356
        %v1146 = vunpack.c.l.b16 %v357
        %v1147 = vunpack.c.h.b16 %v357
        %v1148 = vunpack.c.l.b16 %v358
        %v1149 = vunpack.c.h.b16 %v358
        %v1150 = vunpack.c.l.b16 %v359
        %v1151 = vunpack.c.h.b16 %v359
        %v1152 = vpack.c.b16 %v1060, %v1056
        %v1153 = vpack.c.b16 %v1061, %v1057
        %v1154 = vpack.c.b16 %v1062, %v1058
        %v1155 = vpack.c.b16 %v1063, %v1059
        %v1156 = vpack.c.b16 %v1068, %v1064
        %v1157 = vpack.c.b16 %v1069, %v1065
        %v1158 = vpack.c.b16 %v1070, %v1066
        %v1159 = vpack.c.b16 %v1071, %v1067
        %v1160 = vpack.c.b16 %v1076, %v1072
        %v1161 = vpack.c.b16 %v1077, %v1073
        %v1162 = vpack.c.b16 %v1078, %v1074
        %v1163 = vpack.c.b16 %v1079, %v1075
        %v1164 = vpack.c.b16 %v1084, %v1080
        %v1165 = vpack.c.b16 %v1085, %v1081
        %v1166 = vpack.c.b16 %v1086, %v1082
        %v1167 = vpack.c.b16 %v1087, %v1083
        %v1168 = vpack.c.b16 %v1092, %v1088
        %v1169 = vpack.c.b16 %v1093, %v1089
        %v1170 = vpack.c.b16 %v1094, %v1090
        %v1171 = vpack.c.b16 %v1095, %v1091
        %v1172 = vpack.c.b16 %v1100, %v1096
        %v1173 = vpack.c.b16 %v1101, %v1097
        %v1174 = vpack.c.b16 %v1102, %v1098
        %v1175 = vpack.c.b16 %v1103, %v1099
        %v1176 = vpack.c.b16 %v1108, %v1104
        %v1177 = vpack.c.b16 %v1109, %v1105
        %v1178 = vpack.c.b16 %v1110, %v1106
        %v1179 = vpack.c.b16 %v1111, %v1107
        %v1180 = vpack.c.b16 %v1116, %v1112
        %v1181 = vpack.c.b16 %v1117, %v1113
        %v1182 = vpack.c.b16 %v1118, %v1114
        %v1183 = vpack.c.b16 %v1119, %v1115
        %v1184 = vpack.c.b16 %v1124, %v1120
        %v1185 = vpack.c.b16 %v1125, %v1121
        %v1186 = vpack.c.b16 %v1126, %v1122
        %v1187 = vpack.c.b16 %v1127, %v1123
        %v1188 = vpack.c.b16 %v1132, %v1128
        %v1189 = vpack.c.b16 %v1133, %v1129
        %v1190 = vpack.c.b16 %v1134, %v1130
        %v1191 = vpack.c.b16 %v1135, %v1131
        %v1192 = vpack.c.b16 %v1140, %v1136
        %v1193 = vpack.c.b16 %v1141, %v1137
        %v1194 = vpack.c.b16 %v1142, %v1138
        %v1195 = vpack.c.b16 %v1143, %v1139
        %v1196 = vpack.c.b16 %v1148, %v1144
        %v1197 = vpack.c.b16 %v1149, %v1145
        %v1198 = vpack.c.b16 %v1150, %v1146
        %v1199 = vpack.c.b16 %v1151, %v1147
        %v1248 = vmul.bf16 %v678, %v1152
        %v1249 = vmul.bf16 %v685, %v1153
        %v1250 = vmul.bf16 %v692, %v1154
        %v1251 = vmul.bf16 %v699, %v1155
        %v1252 = vmul.bf16 %v706, %v1156
        %v1253 = vmul.bf16 %v713, %v1157
        %v1254 = vmul.bf16 %v720, %v1158
        %v1255 = vmul.bf16 %v727, %v1159
        %v1256 = vmul.bf16 %v734, %v1160
        %v1257 = vmul.bf16 %v741, %v1161
        %v1258 = vmul.bf16 %v748, %v1162
        %v1259 = vmul.bf16 %v755, %v1163
        %v1260 = vmul.bf16 %v762, %v1164
        %v1261 = vmul.bf16 %v769, %v1165
        %v1262 = vmul.bf16 %v776, %v1166
        %v1263 = vmul.bf16 %v783, %v1167
        %v1264 = vmul.bf16 %v790, %v1168
        %v1265 = vmul.bf16 %v797, %v1169
        %v1266 = vmul.bf16 %v804, %v1170
        %v1267 = vmul.bf16 %v811, %v1171
        %v1268 = vmul.bf16 %v818, %v1172
        %v1269 = vmul.bf16 %v825, %v1173
        %v1270 = vmul.bf16 %v832, %v1174
        %v1271 = vmul.bf16 %v839, %v1175
        %v1272 = vmul.bf16 %v846, %v1176
        %v1273 = vmul.bf16 %v853, %v1177
        %v1274 = vmul.bf16 %v860, %v1178
        %v1275 = vmul.bf16 %v867, %v1179
        %v1276 = vmul.bf16 %v874, %v1180
        %v1277 = vmul.bf16 %v881, %v1181
        %v1278 = vmul.bf16 %v888, %v1182
        %v1279 = vmul.bf16 %v895, %v1183
        %v1280 = vmul.bf16 %v902, %v1184
        %v1281 = vmul.bf16 %v909, %v1185
        %v1282 = vmul.bf16 %v916, %v1186
        %v1283 = vmul.bf16 %v923, %v1187
        %v1284 = vmul.bf16 %v930, %v1188
        %v1285 = vmul.bf16 %v937, %v1189
        %v1286 = vmul.bf16 %v944, %v1190
        %v1287 = vmul.bf16 %v951, %v1191
        %v1288 = vmul.bf16 %v958, %v1192
        %v1289 = vmul.bf16 %v965, %v1193
        %v1290 = vmul.bf16 %v972, %v1194
        %v1291 = vmul.bf16 %v979, %v1195
        %v1292 = vmul.bf16 %v986, %v1196
        %v1293 = vmul.bf16 %v993, %v1197
        %v1294 = vmul.bf16 %v1000, %v1198
        %v1295 = vmul.bf16 %v1007, %v1199
        %v1296 = vld [vmem:[%s2] sm:$0xff]
        %v1297 = vld [vmem:[%s2 + $0x8] sm:$0xff]
        %v1298 = vld [vmem:[%s2 + $0x10] sm:$0xff]
        %v1299 = vld [vmem:[%s2 + $0x18] sm:$0xff]
        %v1300 = vld [vmem:[%s2 + $0x20] sm:$0xff]
        %v1301 = vld [vmem:[%s2 + $0x28] sm:$0xff]
        %v1302 = vld [vmem:[%s2 + $0x30] sm:$0xff]
        %v1303 = vld [vmem:[%s2 + $0x38] sm:$0xff]
        %v1304 = vld [vmem:[%s2 + $0x40] sm:$0xff]
        %v1305 = vld [vmem:[%s2 + $0x48] sm:$0xff]
        %v1306 = vld [vmem:[%s2 + $0x50] sm:$0xff]
        %v1307 = vld [vmem:[%s2 + $0x58] sm:$0xff]
        %v1308 = vld [vmem:[%s2 + $0x60] sm:$0xff]
        %v1309 = vld [vmem:[%s2 + $0x68] sm:$0xff]
        %v1310 = vld [vmem:[%s2 + $0x70] sm:$0xff]
        %v1311 = vld [vmem:[%s2 + $0x78] sm:$0xff]
        %v1312 = vld [vmem:[%s4] sm:$0xff]
        %v1313 = vld [vmem:[%s4 + $0x8] sm:$0xff]
        %v1314 = vld [vmem:[%s4 + $0x10] sm:$0xff]
        %v1315 = vld [vmem:[%s4 + $0x18] sm:$0xff]
        %v1316 = vld [vmem:[%s4 + $0x20] sm:$0xff]
        %v1317 = vld [vmem:[%s4 + $0x28] sm:$0xff]
        %v1318 = vld [vmem:[%s4 + $0x30] sm:$0xff]
        %v1319 = vld [vmem:[%s4 + $0x38] sm:$0xff]
        %v1320 = vld [vmem:[%s4 + $0x40] sm:$0xff]
        %v1321 = vld [vmem:[%s4 + $0x48] sm:$0xff]
        %v1322 = vld [vmem:[%s4 + $0x50] sm:$0xff]
        %v1323 = vld [vmem:[%s4 + $0x58] sm:$0xff]
        %v1324 = vld [vmem:[%s4 + $0x60] sm:$0xff]
        %v1325 = vld [vmem:[%s4 + $0x68] sm:$0xff]
        %v1326 = vld [vmem:[%s4 + $0x70] sm:$0xff]
        %v1327 = vld [vmem:[%s4 + $0x78] sm:$0xff]
        %1329 = vset.pattern.permute.xlu0 0
        %1330 = vperm.xlu0 %1329, %v1312
        %v1331 = vpop.permute.xlu0 %1330
        %1334 = vset.pattern.permute.xlu0 0
        %1335 = vperm.xlu0 %1334, %v1313
        %v1336 = vpop.permute.xlu0 %1335
        %1339 = vset.pattern.permute.xlu0 0
        %1340 = vperm.xlu0 %1339, %v1314
        %v1341 = vpop.permute.xlu0 %1340
        %1344 = vset.pattern.permute.xlu0 0
        %1345 = vperm.xlu0 %1344, %v1315
        %v1346 = vpop.permute.xlu0 %1345
        %1349 = vset.pattern.permute.xlu0 0
        %1350 = vperm.xlu0 %1349, %v1316
        %v1351 = vpop.permute.xlu0 %1350
        %1354 = vset.pattern.permute.xlu0 0
        %1355 = vperm.xlu0 %1354, %v1317
        %v1356 = vpop.permute.xlu0 %1355
        %1359 = vset.pattern.permute.xlu0 0
        %1360 = vperm.xlu0 %1359, %v1318
        %v1361 = vpop.permute.xlu0 %1360
        %1364 = vset.pattern.permute.xlu0 0
        %1365 = vperm.xlu0 %1364, %v1319
        %v1366 = vpop.permute.xlu0 %1365
        %1369 = vset.pattern.permute.xlu0 0
        %1370 = vperm.xlu0 %1369, %v1320
        %v1371 = vpop.permute.xlu0 %1370
        %1374 = vset.pattern.permute.xlu0 0
        %1375 = vperm.xlu0 %1374, %v1321
        %v1376 = vpop.permute.xlu0 %1375
        %1379 = vset.pattern.permute.xlu0 0
        %1380 = vperm.xlu0 %1379, %v1322
        %v1381 = vpop.permute.xlu0 %1380
        %1384 = vset.pattern.permute.xlu0 0
        %1385 = vperm.xlu0 %1384, %v1323
        %v1386 = vpop.permute.xlu0 %1385
        %1389 = vset.pattern.permute.xlu0 0
        %1390 = vperm.xlu0 %1389, %v1324
        %v1391 = vpop.permute.xlu0 %1390
        %1394 = vset.pattern.permute.xlu0 0
        %1395 = vperm.xlu0 %1394, %v1325
        %v1396 = vpop.permute.xlu0 %1395
        %1399 = vset.pattern.permute.xlu0 0
        %1400 = vperm.xlu0 %1399, %v1326
        %v1401 = vpop.permute.xlu0 %1400
        %1404 = vset.pattern.permute.xlu0 0
        %1405 = vperm.xlu0 %1404, %v1327
        %v1406 = vpop.permute.xlu0 %1405
        %v1424 = vunpack.c.l.b16 %v1296
        %v1425 = vunpack.c.h.b16 %v1296
        %v1426 = vunpack.c.l.b16 %v1297
        %v1427 = vunpack.c.h.b16 %v1297
        %v1428 = vunpack.c.l.b16 %v1298
        %v1429 = vunpack.c.h.b16 %v1298
        %v1430 = vunpack.c.l.b16 %v1299
        %v1431 = vunpack.c.h.b16 %v1299
        %v1432 = vunpack.c.l.b16 %v1300
        %v1433 = vunpack.c.h.b16 %v1300
        %v1434 = vunpack.c.l.b16 %v1301
        %v1435 = vunpack.c.h.b16 %v1301
        %v1436 = vunpack.c.l.b16 %v1302
        %v1437 = vunpack.c.h.b16 %v1302
        %v1438 = vunpack.c.l.b16 %v1303
        %v1439 = vunpack.c.h.b16 %v1303
        %v1440 = vunpack.c.l.b16 %v1304
        %v1441 = vunpack.c.h.b16 %v1304
        %v1442 = vunpack.c.l.b16 %v1305
        %v1443 = vunpack.c.h.b16 %v1305
        %v1444 = vunpack.c.l.b16 %v1306
        %v1445 = vunpack.c.h.b16 %v1306
        %v1446 = vunpack.c.l.b16 %v1307
        %v1447 = vunpack.c.h.b16 %v1307
        %v1448 = vunpack.c.l.b16 %v1308
        %v1449 = vunpack.c.h.b16 %v1308
        %v1450 = vunpack.c.l.b16 %v1309
        %v1451 = vunpack.c.h.b16 %v1309
        %v1452 = vunpack.c.l.b16 %v1310
        %v1453 = vunpack.c.h.b16 %v1310
        %v1454 = vunpack.c.l.b16 %v1311
        %v1455 = vunpack.c.h.b16 %v1311
        %v1456 = vpack.c.b16 %v1426, %v1424
        %v1457 = vpack.c.b16 %v1427, %v1425
        %v1458 = vpack.c.b16 %v1430, %v1428
        %v1459 = vpack.c.b16 %v1431, %v1429
        %v1460 = vpack.c.b16 %v1434, %v1432
        %v1461 = vpack.c.b16 %v1435, %v1433
        %v1462 = vpack.c.b16 %v1438, %v1436
        %v1463 = vpack.c.b16 %v1439, %v1437
        %v1464 = vpack.c.b16 %v1442, %v1440
        %v1465 = vpack.c.b16 %v1443, %v1441
        %v1466 = vpack.c.b16 %v1446, %v1444
        %v1467 = vpack.c.b16 %v1447, %v1445
        %v1468 = vpack.c.b16 %v1450, %v1448
        %v1469 = vpack.c.b16 %v1451, %v1449
        %v1470 = vpack.c.b16 %v1454, %v1452
        %v1471 = vpack.c.b16 %v1455, %v1453
        %vm1480 = vcmask 523264
        %v1482 = vsel %vm1480, %v1457, 0
        %v1485 = vsel %vm1480, %v1459, 0
        %v1488 = vsel %vm1480, %v1461, 0
        %v1491 = vsel %vm1480, %v1463, 0
        %v1494 = vsel %vm1480, %v1465, 0
        %v1497 = vsel %vm1480, %v1467, 0
        %v1500 = vsel %vm1480, %v1469, 0
        %v1503 = vsel %vm1480, %v1471, 0
        %1505 = vmatprep.subr.bf16.mxu0 %v1249
        %1506 = vmatpush1.bf16.msra.mxu0 %v1248
        %1507 = vmatprep.subr.bf16.mxu0 %v1253
        %1508 = vmatpush1.bf16.msra.mxu0 %v1252
        %1509 = vmatprep.subr.bf16.mxu0 %v1257
        %1510 = vmatpush1.bf16.msra.mxu0 %v1256
        %1511 = vmatprep.subr.bf16.mxu0 %v1261
        %1512 = vmatpush1.bf16.msra.mxu0 %v1260
        %1513 = vmatprep.subr.bf16.mxu0 %v1265
        %1514 = vmatpush1.bf16.msra.mxu0 %v1264
        %1515 = vmatprep.subr.bf16.mxu0 %v1269
        %1516 = vmatpush1.bf16.msra.mxu0 %v1268
        %1517 = vmatprep.subr.bf16.mxu0 %v1273
        %1518 = vmatpush1.bf16.msra.mxu0 %v1272
        %1519 = vmatprep.subr.bf16.mxu0 %v1277
        %1520 = vmatpush1.bf16.msra.mxu0 %v1276
        %1521 = vmatprep.subr.bf16.mxu0 %v1281
        %1522 = vmatpush1.bf16.msra.mxu0 %v1280
        %1523 = vmatprep.subr.bf16.mxu0 %v1285
        %1524 = vmatpush1.bf16.msra.mxu0 %v1284
        %1525 = vmatprep.subr.bf16.mxu0 %v1289
        %1526 = vmatpush1.bf16.msra.mxu0 %v1288
        %1527 = vmatprep.subr.bf16.mxu0 %v1293
        %1528 = vmatpush1.bf16.msra.mxu0 %v1292
        %1529 = vmatprep.subr.bf16.mxu0 0
        %1530 = vmatpush1.bf16.msra.mxu0 0
        %1531 = vmatprep.subr.bf16.mxu0 0
        %1532 = vmatpush1.bf16.msra.mxu0 0
        %1533 = vmatprep.subr.bf16.mxu0 0
        %1534 = vmatpush1.bf16.msra.mxu0 0
        %1535 = vmatprep.subr.bf16.mxu0 0
        %1536 = vmatpush1.bf16.msra.mxu0 0
        %1537 = vmatprep.mubr.bf16.mxu0 %v1482
        %1538 = vmatmul.mubr.bf16.gmra.mrb[0].mxu0 %v1456
        %v1539 = vpop.f32.mrb[0].mxu0
        %v1540 = vadd.f32 %v1331, %v1539
        %v1541 = vpop.f32.mrb[0].mxu0
        %v1542 = vadd.f32 %v1331, %v1541
        %v1543 = vpop.f32.mrb[0].mxu0
        %v1544 = vadd.f32 %v1336, %v1543
        %v1545 = vpop.f32.mrb[0].mxu0
        %v1546 = vadd.f32 %v1336, %v1545
        %1547 = vmatprep.mubr.bf16.mxu0 %v1485
        %1548 = vmatmul.mubr.bf16.gmra.mrb[0].mxu0 %v1458
        %v1549 = vpop.f32.mrb[0].mxu0
        %v1550 = vadd.f32 %v1341, %v1549
        %v1551 = vpop.f32.mrb[0].mxu0
        %v1552 = vadd.f32 %v1341, %v1551
        %v1553 = vpop.f32.mrb[0].mxu0
        %v1554 = vadd.f32 %v1346, %v1553
        %v1555 = vpop.f32.mrb[0].mxu0
        %v1556 = vadd.f32 %v1346, %v1555
        %1557 = vmatprep.mubr.bf16.mxu0 %v1488
        %1558 = vmatmul.mubr.bf16.gmra.mrb[0].mxu0 %v1460
        %v1559 = vpop.f32.mrb[0].mxu0
        %v1560 = vadd.f32 %v1351, %v1559
        %v1561 = vpop.f32.mrb[0].mxu0
        %v1562 = vadd.f32 %v1351, %v1561
        %v1563 = vpop.f32.mrb[0].mxu0
        %v1564 = vadd.f32 %v1356, %v1563
        %v1565 = vpop.f32.mrb[0].mxu0
        %v1566 = vadd.f32 %v1356, %v1565
        %1567 = vmatprep.mubr.bf16.mxu0 %v1491
        %1568 = vmatmul.mubr.bf16.gmra.mrb[0].mxu0 %v1462
        %v1569 = vpop.f32.mrb[0].mxu0
        %v1570 = vadd.f32 %v1361, %v1569
        %v1571 = vpop.f32.mrb[0].mxu0
        %v1572 = vadd.f32 %v1361, %v1571
        %v1573 = vpop.f32.mrb[0].mxu0
        %v1574 = vadd.f32 %v1366, %v1573
        %v1575 = vpop.f32.mrb[0].mxu0
        %v1576 = vadd.f32 %v1366, %v1575
        %1577 = vmatprep.mubr.bf16.mxu0 %v1494
        %1578 = vmatmul.mubr.bf16.gmra.mrb[0].mxu0 %v1464
        %v1579 = vpop.f32.mrb[0].mxu0
        %v1580 = vadd.f32 %v1371, %v1579
        %v1581 = vpop.f32.mrb[0].mxu0
        %v1582 = vadd.f32 %v1371, %v1581
        %v1583 = vpop.f32.mrb[0].mxu0
        %v1584 = vadd.f32 %v1376, %v1583
        %v1585 = vpop.f32.mrb[0].mxu0
        %v1586 = vadd.f32 %v1376, %v1585
        %1587 = vmatprep.mubr.bf16.mxu0 %v1497
        %1588 = vmatmul.mubr.bf16.gmra.mrb[0].mxu0 %v1466
        %v1589 = vpop.f32.mrb[0].mxu0
        %v1590 = vadd.f32 %v1381, %v1589
        %v1591 = vpop.f32.mrb[0].mxu0
        %v1592 = vadd.f32 %v1381, %v1591
        %v1593 = vpop.f32.mrb[0].mxu0
        %v1594 = vadd.f32 %v1386, %v1593
        %v1595 = vpop.f32.mrb[0].mxu0
        %v1596 = vadd.f32 %v1386, %v1595
        %1597 = vmatprep.mubr.bf16.mxu0 %v1500
        %1598 = vmatmul.mubr.bf16.gmra.mrb[0].mxu0 %v1468
        %v1599 = vpop.f32.mrb[0].mxu0
        %v1600 = vadd.f32 %v1391, %v1599
        %v1601 = vpop.f32.mrb[0].mxu0
        %v1602 = vadd.f32 %v1391, %v1601
        %v1603 = vpop.f32.mrb[0].mxu0
        %v1604 = vadd.f32 %v1396, %v1603
        %v1605 = vpop.f32.mrb[0].mxu0
        %v1606 = vadd.f32 %v1396, %v1605
        %1607 = vmatprep.mubr.bf16.mxu0 %v1503
        %1608 = vmatmul.mubr.bf16.gmra.mrb[0].mxu0 %v1470
        %v1609 = vpop.f32.mrb[0].mxu0
        %v1610 = vadd.f32 %v1401, %v1609
        %v1611 = vpop.f32.mrb[0].mxu0
        %v1612 = vadd.f32 %v1401, %v1611
        %v1613 = vpop.f32.mrb[0].mxu0
        %v1614 = vadd.f32 %v1406, %v1613
        %v1615 = vpop.f32.mrb[0].mxu0
        %v1616 = vadd.f32 %v1406, %v1615
        %1617 = vdwg.mxu0
        %1618 = vmatprep.subr.bf16.mxu0 %v1251
        %1619 = vmatpush1.bf16.msra.mxu0 %v1250
        %1620 = vmatprep.subr.bf16.mxu0 %v1255
        %1621 = vmatpush1.bf16.msra.mxu0 %v1254
        %1622 = vmatprep.subr.bf16.mxu0 %v1259
        %1623 = vmatpush1.bf16.msra.mxu0 %v1258
        %1624 = vmatprep.subr.bf16.mxu0 %v1263
        %1625 = vmatpush1.bf16.msra.mxu0 %v1262
        %1626 = vmatprep.subr.bf16.mxu0 %v1267
        %1627 = vmatpush1.bf16.msra.mxu0 %v1266
        %1628 = vmatprep.subr.bf16.mxu0 %v1271
        %1629 = vmatpush1.bf16.msra.mxu0 %v1270
        %1630 = vmatprep.subr.bf16.mxu0 %v1275
        %1631 = vmatpush1.bf16.msra.mxu0 %v1274
        %1632 = vmatprep.subr.bf16.mxu0 %v1279
        %1633 = vmatpush1.bf16.msra.mxu0 %v1278
        %1634 = vmatprep.subr.bf16.mxu0 %v1283
        %1635 = vmatpush1.bf16.msra.mxu0 %v1282
        %1636 = vmatprep.subr.bf16.mxu0 %v1287
        %1637 = vmatpush1.bf16.msra.mxu0 %v1286
        %1638 = vmatprep.subr.bf16.mxu0 %v1291
        %1639 = vmatpush1.bf16.msra.mxu0 %v1290
        %1640 = vmatprep.subr.bf16.mxu0 %v1295
        %1641 = vmatpush1.bf16.msra.mxu0 %v1294
        %1642 = vmatprep.subr.bf16.mxu0 0
        %1643 = vmatpush1.bf16.msra.mxu0 0
        %1644 = vmatprep.subr.bf16.mxu0 0
        %1645 = vmatpush1.bf16.msra.mxu0 0
        %1646 = vmatprep.subr.bf16.mxu0 0
        %1647 = vmatpush1.bf16.msra.mxu0 0
        %1648 = vmatprep.subr.bf16.mxu0 0
        %1649 = vmatpush1.bf16.msra.mxu0 0
        %1650 = vmatprep.mubr.bf16.mxu0 %v1482
        %1651 = vmatmul.mubr.bf16.gmra.mrb[0].mxu0 %v1456
        %v1652 = vpop.f32.mrb[0].mxu0
        %v1653 = vadd.f32 %v1331, %v1652
        %v1654 = vpop.f32.mrb[0].mxu0
        %v1655 = vadd.f32 %v1331, %v1654
        %v1656 = vpop.f32.mrb[0].mxu0
        %v1657 = vadd.f32 %v1336, %v1656
        %v1658 = vpop.f32.mrb[0].mxu0
        %v1659 = vadd.f32 %v1336, %v1658
        %1660 = vmatprep.mubr.bf16.mxu0 %v1485
        %1661 = vmatmul.mubr.bf16.gmra.mrb[0].mxu0 %v1458
        %v1662 = vpop.f32.mrb[0].mxu0
        %v1663 = vadd.f32 %v1341, %v1662
        %v1664 = vpop.f32.mrb[0].mxu0
        %v1665 = vadd.f32 %v1341, %v1664
        %v1666 = vpop.f32.mrb[0].mxu0
        %v1667 = vadd.f32 %v1346, %v1666
        %v1668 = vpop.f32.mrb[0].mxu0
        %v1669 = vadd.f32 %v1346, %v1668
        %1670 = vmatprep.mubr.bf16.mxu0 %v1488
        %1671 = vmatmul.mubr.bf16.gmra.mrb[0].mxu0 %v1460
        %v1672 = vpop.f32.mrb[0].mxu0
        %v1673 = vadd.f32 %v1351, %v1672
        %v1674 = vpop.f32.mrb[0].mxu0
        %v1675 = vadd.f32 %v1351, %v1674
        %v1676 = vpop.f32.mrb[0].mxu0
        %v1677 = vadd.f32 %v1356, %v1676
        %v1678 = vpop.f32.mrb[0].mxu0
        %v1679 = vadd.f32 %v1356, %v1678
        %1680 = vmatprep.mubr.bf16.mxu0 %v1491
        %1681 = vmatmul.mubr.bf16.gmra.mrb[0].mxu0 %v1462
        %v1682 = vpop.f32.mrb[0].mxu0
        %v1683 = vadd.f32 %v1361, %v1682
        %v1684 = vpop.f32.mrb[0].mxu0
        %v1685 = vadd.f32 %v1361, %v1684
        %v1686 = vpop.f32.mrb[0].mxu0
        %v1687 = vadd.f32 %v1366, %v1686
        %v1688 = vpop.f32.mrb[0].mxu0
        %v1689 = vadd.f32 %v1366, %v1688
        %1690 = vmatprep.mubr.bf16.mxu0 %v1494
        %1691 = vmatmul.mubr.bf16.gmra.mrb[0].mxu0 %v1464
        %v1692 = vpop.f32.mrb[0].mxu0
        %v1693 = vadd.f32 %v1371, %v1692
        %v1694 = vpop.f32.mrb[0].mxu0
        %v1695 = vadd.f32 %v1371, %v1694
        %v1696 = vpop.f32.mrb[0].mxu0
        %v1697 = vadd.f32 %v1376, %v1696
        %v1698 = vpop.f32.mrb[0].mxu0
        %v1699 = vadd.f32 %v1376, %v1698
        %1700 = vmatprep.mubr.bf16.mxu0 %v1497
        %1701 = vmatmul.mubr.bf16.gmra.mrb[0].mxu0 %v1466
        %v1702 = vpop.f32.mrb[0].mxu0
        %v1703 = vadd.f32 %v1381, %v1702
        %v1704 = vpop.f32.mrb[0].mxu0
        %v1705 = vadd.f32 %v1381, %v1704
        %v1706 = vpop.f32.mrb[0].mxu0
        %v1707 = vadd.f32 %v1386, %v1706
        %v1708 = vpop.f32.mrb[0].mxu0
        %v1709 = vadd.f32 %v1386, %v1708
        %1710 = vmatprep.mubr.bf16.mxu0 %v1500
        %1711 = vmatmul.mubr.bf16.gmra.mrb[0].mxu0 %v1468
        %v1712 = vpop.f32.mrb[0].mxu0
        %v1713 = vadd.f32 %v1391, %v1712
        %v1714 = vpop.f32.mrb[0].mxu0
        %v1715 = vadd.f32 %v1391, %v1714
        %v1716 = vpop.f32.mrb[0].mxu0
        %v1717 = vadd.f32 %v1396, %v1716
        %v1718 = vpop.f32.mrb[0].mxu0
        %v1719 = vadd.f32 %v1396, %v1718
        %1720 = vmatprep.mubr.bf16.mxu0 %v1503
        %1721 = vmatmul.mubr.bf16.gmra.mrb[0].mxu0 %v1470
        %v1722 = vpop.f32.mrb[0].mxu0
        %v1723 = vadd.f32 %v1401, %v1722
        %v1724 = vpop.f32.mrb[0].mxu0
        %v1725 = vadd.f32 %v1401, %v1724
        %v1726 = vpop.f32.mrb[0].mxu0
        %v1727 = vadd.f32 %v1406, %v1726
        %v1728 = vpop.f32.mrb[0].mxu0
        %v1729 = vadd.f32 %v1406, %v1728
        %1730 = vdwg.mxu0
        %v1731 = vmax.f32 %v1540, 0.0
        %v1732 = vmax.f32 %v1542, 0.0
        %v1733 = vmax.f32 %v1653, 0.0
        %v1734 = vmax.f32 %v1655, 0.0
        %v1735 = vmax.f32 %v1544, 0.0
        %v1736 = vmax.f32 %v1546, 0.0
        %v1737 = vmax.f32 %v1657, 0.0
        %v1738 = vmax.f32 %v1659, 0.0
        %v1739 = vmax.f32 %v1550, 0.0
        %v1740 = vmax.f32 %v1552, 0.0
        %v1741 = vmax.f32 %v1663, 0.0
        %v1742 = vmax.f32 %v1665, 0.0
        %v1743 = vmax.f32 %v1554, 0.0
        %v1744 = vmax.f32 %v1556, 0.0
        %v1745 = vmax.f32 %v1667, 0.0
        %v1746 = vmax.f32 %v1669, 0.0
        %v1747 = vmax.f32 %v1560, 0.0
        %v1748 = vmax.f32 %v1562, 0.0
        %v1749 = vmax.f32 %v1673, 0.0
        %v1750 = vmax.f32 %v1675, 0.0
        %v1751 = vmax.f32 %v1564, 0.0
        %v1752 = vmax.f32 %v1566, 0.0
        %v1753 = vmax.f32 %v1677, 0.0
        %v1754 = vmax.f32 %v1679, 0.0
        %v1755 = vmax.f32 %v1570, 0.0
        %v1756 = vmax.f32 %v1572, 0.0
        %v1757 = vmax.f32 %v1683, 0.0
        %v1758 = vmax.f32 %v1685, 0.0
        %v1759 = vmax.f32 %v1574, 0.0
        %v1760 = vmax.f32 %v1576, 0.0
        %v1761 = vmax.f32 %v1687, 0.0
        %v1762 = vmax.f32 %v1689, 0.0
        %v1763 = vmax.f32 %v1580, 0.0
        %v1764 = vmax.f32 %v1582, 0.0
        %v1765 = vmax.f32 %v1693, 0.0
        %v1766 = vmax.f32 %v1695, 0.0
        %v1767 = vmax.f32 %v1584, 0.0
        %v1768 = vmax.f32 %v1586, 0.0
        %v1769 = vmax.f32 %v1697, 0.0
        %v1770 = vmax.f32 %v1699, 0.0
        %v1771 = vmax.f32 %v1590, 0.0
        %v1772 = vmax.f32 %v1592, 0.0
        %v1773 = vmax.f32 %v1703, 0.0
        %v1774 = vmax.f32 %v1705, 0.0
        %v1775 = vmax.f32 %v1594, 0.0
        %v1776 = vmax.f32 %v1596, 0.0
        %v1777 = vmax.f32 %v1707, 0.0
        %v1778 = vmax.f32 %v1709, 0.0
        %v1779 = vmax.f32 %v1600, 0.0
        %v1780 = vmax.f32 %v1602, 0.0
        %v1781 = vmax.f32 %v1713, 0.0
        %v1782 = vmax.f32 %v1715, 0.0
        %v1783 = vmax.f32 %v1604, 0.0
        %v1784 = vmax.f32 %v1606, 0.0
        %v1785 = vmax.f32 %v1717, 0.0
        %v1786 = vmax.f32 %v1719, 0.0
        %v1787 = vmax.f32 %v1610, 0.0
        %v1788 = vmax.f32 %v1612, 0.0
        %v1789 = vmax.f32 %v1723, 0.0
        %v1790 = vmax.f32 %v1725, 0.0
        %v1791 = vmax.f32 %v1614, 0.0
        %v1792 = vmax.f32 %v1616, 0.0
        %v1793 = vmax.f32 %v1727, 0.0
        %v1794 = vmax.f32 %v1729, 0.0
        %v1795 = vpack.c.bf16 %v1735, %v1731
        %v1796 = vpack.c.bf16 %v1736, %v1732
        %v1797 = vpack.c.bf16 %v1737, %v1733
        %v1798 = vpack.c.bf16 %v1738, %v1734
        %v1799 = vpack.c.bf16 %v1743, %v1739
        %v1800 = vpack.c.bf16 %v1744, %v1740
        %v1801 = vpack.c.bf16 %v1745, %v1741
        %v1802 = vpack.c.bf16 %v1746, %v1742
        %v1803 = vpack.c.bf16 %v1751, %v1747
        %v1804 = vpack.c.bf16 %v1752, %v1748
        %v1805 = vpack.c.bf16 %v1753, %v1749
        %v1806 = vpack.c.bf16 %v1754, %v1750
        %v1807 = vpack.c.bf16 %v1759, %v1755
        %v1808 = vpack.c.bf16 %v1760, %v1756
        %v1809 = vpack.c.bf16 %v1761, %v1757
        %v1810 = vpack.c.bf16 %v1762, %v1758
        %v1811 = vpack.c.bf16 %v1767, %v1763
        %v1812 = vpack.c.bf16 %v1768, %v1764
        %v1813 = vpack.c.bf16 %v1769, %v1765
        %v1814 = vpack.c.bf16 %v1770, %v1766
        %v1815 = vpack.c.bf16 %v1775, %v1771
        %v1816 = vpack.c.bf16 %v1776, %v1772
        %v1817 = vpack.c.bf16 %v1777, %v1773
        %v1818 = vpack.c.bf16 %v1778, %v1774
        %v1819 = vpack.c.bf16 %v1783, %v1779
        %v1820 = vpack.c.bf16 %v1784, %v1780
        %v1821 = vpack.c.bf16 %v1785, %v1781
        %v1822 = vpack.c.bf16 %v1786, %v1782
        %v1823 = vpack.c.bf16 %v1791, %v1787
        %v1824 = vpack.c.bf16 %v1792, %v1788
        %v1825 = vpack.c.bf16 %v1793, %v1789
        %v1826 = vpack.c.bf16 %v1794, %v1790
        %v1827 = vld [vmem:[#allocation2] sm:$0xf]
        %v1828 = vld [vmem:[#allocation2 + $0x4] sm:$0xf]
        %v1829 = vld [vmem:[#allocation2 + $0x8] sm:$0xf]
        %v1830 = vld [vmem:[#allocation2 + $0xc] sm:$0xf]
        %v1831 = vld [vmem:[#allocation2 + $0x10] sm:$0xf]
        %v1832 = vld [vmem:[#allocation2 + $0x14] sm:$0xf]
        %v1833 = vld [vmem:[#allocation2 + $0x18] sm:$0xf]
        %v1834 = vld [vmem:[#allocation2 + $0x1c] sm:$0xf]
        %v1835 = vld [vmem:[#allocation2 + $0x20] sm:$0xf]
        %v1836 = vld [vmem:[#allocation2 + $0x24] sm:$0xf]
        %v1837 = vld [vmem:[#allocation2 + $0x28] sm:$0xf]
        %v1838 = vld [vmem:[#allocation2 + $0x2c] sm:$0xf]
        %v1839 = vld [vmem:[#allocation2 + $0x30] sm:$0xf]
        %v1840 = vld [vmem:[#allocation2 + $0x34] sm:$0xf]
        %v1841 = vld [vmem:[#allocation2 + $0x38] sm:$0xf]
        %v1842 = vld [vmem:[#allocation2 + $0x3c] sm:$0xf]
        %s1843 = scalar_lea.vmem %s4, 128
        %v1844 = vld [vmem:[%s1843] sm:$0xff]
        %v1845 = vld [vmem:[%s1843 + $0x8] sm:$0xff]
        %v1846 = vld [vmem:[%s1843 + $0x10] sm:$0xff]
        %v1847 = vld [vmem:[%s1843 + $0x18] sm:$0xff]
        %v1848 = vld [vmem:[%s1843 + $0x20] sm:$0xff]
        %v1849 = vld [vmem:[%s1843 + $0x28] sm:$0xff]
        %v1850 = vld [vmem:[%s1843 + $0x30] sm:$0xff]
        %v1851 = vld [vmem:[%s1843 + $0x38] sm:$0xff]
        %v1852 = vld [vmem:[%s1843 + $0x40] sm:$0xff]
        %v1853 = vld [vmem:[%s1843 + $0x48] sm:$0xff]
        %v1854 = vld [vmem:[%s1843 + $0x50] sm:$0xff]
        %v1855 = vld [vmem:[%s1843 + $0x58] sm:$0xff]
        %v1856 = vld [vmem:[%s1843 + $0x60] sm:$0xff]
        %v1857 = vld [vmem:[%s1843 + $0x68] sm:$0xff]
        %v1858 = vld [vmem:[%s1843 + $0x70] sm:$0xff]
        %v1859 = vld [vmem:[%s1843 + $0x78] sm:$0xff]
        %1861 = vset.pattern.permute.xlu0 0
        %1862 = vperm.xlu0 %1861, %v1844
        %v1863 = vpop.permute.xlu0 %1862
        %1866 = vset.pattern.permute.xlu0 0
        %1867 = vperm.xlu0 %1866, %v1845
        %v1868 = vpop.permute.xlu0 %1867
        %1871 = vset.pattern.permute.xlu0 0
        %1872 = vperm.xlu0 %1871, %v1846
        %v1873 = vpop.permute.xlu0 %1872
        %1876 = vset.pattern.permute.xlu0 0
        %1877 = vperm.xlu0 %1876, %v1847
        %v1878 = vpop.permute.xlu0 %1877
        %1881 = vset.pattern.permute.xlu0 0
        %1882 = vperm.xlu0 %1881, %v1848
        %v1883 = vpop.permute.xlu0 %1882
        %1886 = vset.pattern.permute.xlu0 0
        %1887 = vperm.xlu0 %1886, %v1849
        %v1888 = vpop.permute.xlu0 %1887
        %1891 = vset.pattern.permute.xlu0 0
        %1892 = vperm.xlu0 %1891, %v1850
        %v1893 = vpop.permute.xlu0 %1892
        %1896 = vset.pattern.permute.xlu0 0
        %1897 = vperm.xlu0 %1896, %v1851
        %v1898 = vpop.permute.xlu0 %1897
        %1901 = vset.pattern.permute.xlu0 0
        %1902 = vperm.xlu0 %1901, %v1852
        %v1903 = vpop.permute.xlu0 %1902
        %1906 = vset.pattern.permute.xlu0 0
        %1907 = vperm.xlu0 %1906, %v1853
        %v1908 = vpop.permute.xlu0 %1907
        %1911 = vset.pattern.permute.xlu0 0
        %1912 = vperm.xlu0 %1911, %v1854
        %v1913 = vpop.permute.xlu0 %1912
        %1916 = vset.pattern.permute.xlu0 0
        %1917 = vperm.xlu0 %1916, %v1855
        %v1918 = vpop.permute.xlu0 %1917
        %1921 = vset.pattern.permute.xlu0 0
        %1922 = vperm.xlu0 %1921, %v1856
        %v1923 = vpop.permute.xlu0 %1922
        %1926 = vset.pattern.permute.xlu0 0
        %1927 = vperm.xlu0 %1926, %v1857
        %v1928 = vpop.permute.xlu0 %1927
        %1931 = vset.pattern.permute.xlu0 0
        %1932 = vperm.xlu0 %1931, %v1858
        %v1933 = vpop.permute.xlu0 %1932
        %1936 = vset.pattern.permute.xlu0 0
        %1937 = vperm.xlu0 %1936, %v1859
        %v1938 = vpop.permute.xlu0 %1937
        %v1956 = vunpack.c.l.b16 %v1827
        %v1957 = vunpack.c.l.b16 %v1828
        %v1958 = vunpack.c.l.b16 %v1829
        %v1959 = vunpack.c.l.b16 %v1830
        %v1960 = vunpack.c.l.b16 %v1831
        %v1961 = vunpack.c.l.b16 %v1832
        %v1962 = vunpack.c.l.b16 %v1833
        %v1963 = vunpack.c.l.b16 %v1834
        %v1964 = vunpack.c.l.b16 %v1835
        %v1965 = vunpack.c.l.b16 %v1836
        %v1966 = vunpack.c.l.b16 %v1837
        %v1967 = vunpack.c.l.b16 %v1838
        %v1968 = vunpack.c.l.b16 %v1839
        %v1969 = vunpack.c.l.b16 %v1840
        %v1970 = vunpack.c.l.b16 %v1841
        %v1971 = vunpack.c.l.b16 %v1842
        %v1972 = vpack.c.b16 %v1957, %v1956
        %v1973 = vpack.c.b16 %v1959, %v1958
        %v1974 = vpack.c.b16 %v1961, %v1960
        %v1975 = vpack.c.b16 %v1963, %v1962
        %v1976 = vpack.c.b16 %v1965, %v1964
        %v1977 = vpack.c.b16 %v1967, %v1966
        %v1978 = vpack.c.b16 %v1969, %v1968
        %v1979 = vpack.c.b16 %v1971, %v1970
        %1988 = vmatprep.subr.bf16.mxu0 %v1796
        %1989 = vmatpush1.bf16.msra.mxu0 %v1795
        %1990 = vmatprep.subr.bf16.mxu0 %v1800
        %1991 = vmatpush1.bf16.msra.mxu0 %v1799
        %1992 = vmatprep.subr.bf16.mxu0 %v1804
        %1993 = vmatpush1.bf16.msra.mxu0 %v1803
        %1994 = vmatprep.subr.bf16.mxu0 %v1808
        %1995 = vmatpush1.bf16.msra.mxu0 %v1807
        %1996 = vmatprep.subr.bf16.mxu0 %v1812
        %1997 = vmatpush1.bf16.msra.mxu0 %v1811
        %1998 = vmatprep.subr.bf16.mxu0 %v1816
        %1999 = vmatpush1.bf16.msra.mxu0 %v1815
        %2000 = vmatprep.subr.bf16.mxu0 %v1820
        %2001 = vmatpush1.bf16.msra.mxu0 %v1819
        %2002 = vmatprep.subr.bf16.mxu0 %v1824
        %2003 = vmatpush1.bf16.msra.mxu0 %v1823
        %2004 = vmatprep.subr.bf16.mxu0 0
        %2005 = vmatpush1.bf16.msra.mxu0 0
        %2006 = vmatprep.subr.bf16.mxu0 0
        %2007 = vmatpush1.bf16.msra.mxu0 0
        %2008 = vmatprep.subr.bf16.mxu0 0
        %2009 = vmatpush1.bf16.msra.mxu0 0
        %2010 = vmatprep.subr.bf16.mxu0 0
        %2011 = vmatpush1.bf16.msra.mxu0 0
        %2012 = vmatprep.subr.bf16.mxu0 0
        %2013 = vmatpush1.bf16.msra.mxu0 0
        %2014 = vmatprep.subr.bf16.mxu0 0
        %2015 = vmatpush1.bf16.msra.mxu0 0
        %2016 = vmatprep.subr.bf16.mxu0 0
        %2017 = vmatpush1.bf16.msra.mxu0 0
        %2018 = vmatprep.subr.bf16.mxu0 0
        %2019 = vmatpush1.bf16.msra.mxu0 0
        %2020 = vmatprep.mubr.bf16.mxu0 0
        %2021 = vmatmul.mubr.bf16.gmra.mrb[0].mxu0 %v1972
        %v2022 = vpop.f32.mrb[0].mxu0
        %v2023 = vadd.f32 %v1863, %v2022
        %v2024 = vpop.f32.mrb[0].mxu0
        %v2025 = vadd.f32 %v1863, %v2024
        %v2026 = vpop.f32.mrb[0].mxu0
        %v2027 = vadd.f32 %v1868, %v2026
        %v2028 = vpop.f32.mrb[0].mxu0
        %v2029 = vadd.f32 %v1868, %v2028
        %2030 = vmatprep.mubr.bf16.mxu0 0
        %2031 = vmatmul.mubr.bf16.gmra.mrb[0].mxu0 %v1973
        %v2032 = vpop.f32.mrb[0].mxu0
        %v2033 = vadd.f32 %v1873, %v2032
        %v2034 = vpop.f32.mrb[0].mxu0
        %v2035 = vadd.f32 %v1873, %v2034
        %v2036 = vpop.f32.mrb[0].mxu0
        %v2037 = vadd.f32 %v1878, %v2036
        %v2038 = vpop.f32.mrb[0].mxu0
        %v2039 = vadd.f32 %v1878, %v2038
        %2040 = vmatprep.mubr.bf16.mxu0 0
        %2041 = vmatmul.mubr.bf16.gmra.mrb[0].mxu0 %v1974
        %v2042 = vpop.f32.mrb[0].mxu0
        %v2043 = vadd.f32 %v1883, %v2042
        %v2044 = vpop.f32.mrb[0].mxu0
        %v2045 = vadd.f32 %v1883, %v2044
        %v2046 = vpop.f32.mrb[0].mxu0
        %v2047 = vadd.f32 %v1888, %v2046
        %v2048 = vpop.f32.mrb[0].mxu0
        %v2049 = vadd.f32 %v1888, %v2048
        %2050 = vmatprep.mubr.bf16.mxu0 0
        %2051 = vmatmul.mubr.bf16.gmra.mrb[0].mxu0 %v1975
        %v2052 = vpop.f32.mrb[0].mxu0
        %v2053 = vadd.f32 %v1893, %v2052
        %v2054 = vpop.f32.mrb[0].mxu0
        %v2055 = vadd.f32 %v1893, %v2054
        %v2056 = vpop.f32.mrb[0].mxu0
        %v2057 = vadd.f32 %v1898, %v2056
        %v2058 = vpop.f32.mrb[0].mxu0
        %v2059 = vadd.f32 %v1898, %v2058
        %2060 = vmatprep.mubr.bf16.mxu0 0
        %2061 = vmatmul.mubr.bf16.gmra.mrb[0].mxu0 %v1976
        %v2062 = vpop.f32.mrb[0].mxu0
        %v2063 = vadd.f32 %v1903, %v2062
        %v2064 = vpop.f32.mrb[0].mxu0
        %v2065 = vadd.f32 %v1903, %v2064
        %v2066 = vpop.f32.mrb[0].mxu0
        %v2067 = vadd.f32 %v1908, %v2066
        %v2068 = vpop.f32.mrb[0].mxu0
        %v2069 = vadd.f32 %v1908, %v2068
        %2070 = vmatprep.mubr.bf16.mxu0 0
        %2071 = vmatmul.mubr.bf16.gmra.mrb[0].mxu0 %v1977
        %v2072 = vpop.f32.mrb[0].mxu0
        %v2073 = vadd.f32 %v1913, %v2072
        %v2074 = vpop.f32.mrb[0].mxu0
        %v2075 = vadd.f32 %v1913, %v2074
        %v2076 = vpop.f32.mrb[0].mxu0
        %v2077 = vadd.f32 %v1918, %v2076
        %v2078 = vpop.f32.mrb[0].mxu0
        %v2079 = vadd.f32 %v1918, %v2078
        %2080 = vmatprep.mubr.bf16.mxu0 0
        %2081 = vmatmul.mubr.bf16.gmra.mrb[0].mxu0 %v1978
        %v2082 = vpop.f32.mrb[0].mxu0
        %v2083 = vadd.f32 %v1923, %v2082
        %v2084 = vpop.f32.mrb[0].mxu0
        %v2085 = vadd.f32 %v1923, %v2084
        %v2086 = vpop.f32.mrb[0].mxu0
        %v2087 = vadd.f32 %v1928, %v2086
        %v2088 = vpop.f32.mrb[0].mxu0
        %v2089 = vadd.f32 %v1928, %v2088
        %2090 = vmatprep.mubr.bf16.mxu0 0
        %2091 = vmatmul.mubr.bf16.gmra.mrb[0].mxu0 %v1979
        %v2092 = vpop.f32.mrb[0].mxu0
        %v2093 = vadd.f32 %v1933, %v2092
        %v2094 = vpop.f32.mrb[0].mxu0
        %v2095 = vadd.f32 %v1933, %v2094
        %v2096 = vpop.f32.mrb[0].mxu0
        %v2097 = vadd.f32 %v1938, %v2096
        %v2098 = vpop.f32.mrb[0].mxu0
        %v2099 = vadd.f32 %v1938, %v2098
        %2100 = vdwg.mxu0
        %2101 = vmatprep.subr.bf16.mxu0 %v1798
        %2102 = vmatpush1.bf16.msra.mxu0 %v1797
        %2103 = vmatprep.subr.bf16.mxu0 %v1802
        %2104 = vmatpush1.bf16.msra.mxu0 %v1801
        %2105 = vmatprep.subr.bf16.mxu0 %v1806
        %2106 = vmatpush1.bf16.msra.mxu0 %v1805
        %2107 = vmatprep.subr.bf16.mxu0 %v1810
        %2108 = vmatpush1.bf16.msra.mxu0 %v1809
        %2109 = vmatprep.subr.bf16.mxu0 %v1814
        %2110 = vmatpush1.bf16.msra.mxu0 %v1813
        %2111 = vmatprep.subr.bf16.mxu0 %v1818
        %2112 = vmatpush1.bf16.msra.mxu0 %v1817
        %2113 = vmatprep.subr.bf16.mxu0 %v1822
        %2114 = vmatpush1.bf16.msra.mxu0 %v1821
        %2115 = vmatprep.subr.bf16.mxu0 %v1826
        %2116 = vmatpush1.bf16.msra.mxu0 %v1825
        %2117 = vmatprep.subr.bf16.mxu0 0
        %2118 = vmatpush1.bf16.msra.mxu0 0
        %2119 = vmatprep.subr.bf16.mxu0 0
        %2120 = vmatpush1.bf16.msra.mxu0 0
        %2121 = vmatprep.subr.bf16.mxu0 0
        %2122 = vmatpush1.bf16.msra.mxu0 0
        %2123 = vmatprep.subr.bf16.mxu0 0
        %2124 = vmatpush1.bf16.msra.mxu0 0
        %2125 = vmatprep.subr.bf16.mxu0 0
        %2126 = vmatpush1.bf16.msra.mxu0 0
        %2127 = vmatprep.subr.bf16.mxu0 0
        %2128 = vmatpush1.bf16.msra.mxu0 0
        %2129 = vmatprep.subr.bf16.mxu0 0
        %2130 = vmatpush1.bf16.msra.mxu0 0
        %2131 = vmatprep.subr.bf16.mxu0 0
        %2132 = vmatpush1.bf16.msra.mxu0 0
        %2133 = vmatprep.mubr.bf16.mxu0 0
        %2134 = vmatmul.mubr.bf16.gmra.mrb[0].mxu0 %v1972
        %v2135 = vpop.f32.mrb[0].mxu0
        %v2136 = vadd.f32 %v1863, %v2135
        %v2137 = vpop.f32.mrb[0].mxu0
        %v2138 = vadd.f32 %v1863, %v2137
        %v2139 = vpop.f32.mrb[0].mxu0
        %v2140 = vadd.f32 %v1868, %v2139
        %v2141 = vpop.f32.mrb[0].mxu0
        %v2142 = vadd.f32 %v1868, %v2141
        %2143 = vmatprep.mubr.bf16.mxu0 0
        %2144 = vmatmul.mubr.bf16.gmra.mrb[0].mxu0 %v1973
        %v2145 = vpop.f32.mrb[0].mxu0
        %v2146 = vadd.f32 %v1873, %v2145
        %v2147 = vpop.f32.mrb[0].mxu0
        %v2148 = vadd.f32 %v1873, %v2147
        %v2149 = vpop.f32.mrb[0].mxu0
        %v2150 = vadd.f32 %v1878, %v2149
        %v2151 = vpop.f32.mrb[0].mxu0
        %v2152 = vadd.f32 %v1878, %v2151
        %2153 = vmatprep.mubr.bf16.mxu0 0
        %2154 = vmatmul.mubr.bf16.gmra.mrb[0].mxu0 %v1974
        %v2155 = vpop.f32.mrb[0].mxu0
        %v2156 = vadd.f32 %v1883, %v2155
        %v2157 = vpop.f32.mrb[0].mxu0
        %v2158 = vadd.f32 %v1883, %v2157
        %v2159 = vpop.f32.mrb[0].mxu0
        %v2160 = vadd.f32 %v1888, %v2159
        %v2161 = vpop.f32.mrb[0].mxu0
        %v2162 = vadd.f32 %v1888, %v2161
        %2163 = vmatprep.mubr.bf16.mxu0 0
        %2164 = vmatmul.mubr.bf16.gmra.mrb[0].mxu0 %v1975
        %v2165 = vpop.f32.mrb[0].mxu0
        %v2166 = vadd.f32 %v1893, %v2165
        %v2167 = vpop.f32.mrb[0].mxu0
        %v2168 = vadd.f32 %v1893, %v2167
        %v2169 = vpop.f32.mrb[0].mxu0
        %v2170 = vadd.f32 %v1898, %v2169
        %v2171 = vpop.f32.mrb[0].mxu0
        %v2172 = vadd.f32 %v1898, %v2171
        %2173 = vmatprep.mubr.bf16.mxu0 0
        %2174 = vmatmul.mubr.bf16.gmra.mrb[0].mxu0 %v1976
        %v2175 = vpop.f32.mrb[0].mxu0
        %v2176 = vadd.f32 %v1903, %v2175
        %v2177 = vpop.f32.mrb[0].mxu0
        %v2178 = vadd.f32 %v1903, %v2177
        %v2179 = vpop.f32.mrb[0].mxu0
        %v2180 = vadd.f32 %v1908, %v2179
        %v2181 = vpop.f32.mrb[0].mxu0
        %v2182 = vadd.f32 %v1908, %v2181
        %2183 = vmatprep.mubr.bf16.mxu0 0
        %2184 = vmatmul.mubr.bf16.gmra.mrb[0].mxu0 %v1977
        %v2185 = vpop.f32.mrb[0].mxu0
        %v2186 = vadd.f32 %v1913, %v2185
        %v2187 = vpop.f32.mrb[0].mxu0
        %v2188 = vadd.f32 %v1913, %v2187
        %v2189 = vpop.f32.mrb[0].mxu0
        %v2190 = vadd.f32 %v1918, %v2189
        %v2191 = vpop.f32.mrb[0].mxu0
        %v2192 = vadd.f32 %v1918, %v2191
        %2193 = vmatprep.mubr.bf16.mxu0 0
        %2194 = vmatmul.mubr.bf16.gmra.mrb[0].mxu0 %v1978
        %v2195 = vpop.f32.mrb[0].mxu0
        %v2196 = vadd.f32 %v1923, %v2195
        %v2197 = vpop.f32.mrb[0].mxu0
        %v2198 = vadd.f32 %v1923, %v2197
        %v2199 = vpop.f32.mrb[0].mxu0
        %v2200 = vadd.f32 %v1928, %v2199
        %v2201 = vpop.f32.mrb[0].mxu0
        %v2202 = vadd.f32 %v1928, %v2201
        %2203 = vmatprep.mubr.bf16.mxu0 0
        %2204 = vmatmul.mubr.bf16.gmra.mrb[0].mxu0 %v1979
        %v2205 = vpop.f32.mrb[0].mxu0
        %v2206 = vadd.f32 %v1933, %v2205
        %v2207 = vpop.f32.mrb[0].mxu0
        %v2208 = vadd.f32 %v1933, %v2207
        %v2209 = vpop.f32.mrb[0].mxu0
        %v2210 = vadd.f32 %v1938, %v2209
        %v2211 = vpop.f32.mrb[0].mxu0
        %v2212 = vadd.f32 %v1938, %v2211
        %2213 = vdwg.mxu0
        %v2214 = vmax.f32 %v2023, 0.0
        %v2215 = vmax.f32 %v2025, 0.0
        %v2216 = vmax.f32 %v2136, 0.0
        %v2217 = vmax.f32 %v2138, 0.0
        %v2218 = vmax.f32 %v2027, 0.0
        %v2219 = vmax.f32 %v2029, 0.0
        %v2220 = vmax.f32 %v2140, 0.0
        %v2221 = vmax.f32 %v2142, 0.0
        %v2222 = vmax.f32 %v2033, 0.0
        %v2223 = vmax.f32 %v2035, 0.0
        %v2224 = vmax.f32 %v2146, 0.0
        %v2225 = vmax.f32 %v2148, 0.0
        %v2226 = vmax.f32 %v2037, 0.0
        %v2227 = vmax.f32 %v2039, 0.0
        %v2228 = vmax.f32 %v2150, 0.0
        %v2229 = vmax.f32 %v2152, 0.0
        %v2230 = vmax.f32 %v2043, 0.0
        %v2231 = vmax.f32 %v2045, 0.0
        %v2232 = vmax.f32 %v2156, 0.0
        %v2233 = vmax.f32 %v2158, 0.0
        %v2234 = vmax.f32 %v2047, 0.0
        %v2235 = vmax.f32 %v2049, 0.0
        %v2236 = vmax.f32 %v2160, 0.0
        %v2237 = vmax.f32 %v2162, 0.0
        %v2238 = vmax.f32 %v2053, 0.0
        %v2239 = vmax.f32 %v2055, 0.0
        %v2240 = vmax.f32 %v2166, 0.0
        %v2241 = vmax.f32 %v2168, 0.0
        %v2242 = vmax.f32 %v2057, 0.0
        %v2243 = vmax.f32 %v2059, 0.0
        %v2244 = vmax.f32 %v2170, 0.0
        %v2245 = vmax.f32 %v2172, 0.0
        %v2246 = vmax.f32 %v2063, 0.0
        %v2247 = vmax.f32 %v2065, 0.0
        %v2248 = vmax.f32 %v2176, 0.0
        %v2249 = vmax.f32 %v2178, 0.0
        %v2250 = vmax.f32 %v2067, 0.0
        %v2251 = vmax.f32 %v2069, 0.0
        %v2252 = vmax.f32 %v2180, 0.0
        %v2253 = vmax.f32 %v2182, 0.0
        %v2254 = vmax.f32 %v2073, 0.0
        %v2255 = vmax.f32 %v2075, 0.0
        %v2256 = vmax.f32 %v2186, 0.0
        %v2257 = vmax.f32 %v2188, 0.0
        %v2258 = vmax.f32 %v2077, 0.0
        %v2259 = vmax.f32 %v2079, 0.0
        %v2260 = vmax.f32 %v2190, 0.0
        %v2261 = vmax.f32 %v2192, 0.0
        %v2262 = vmax.f32 %v2083, 0.0
        %v2263 = vmax.f32 %v2085, 0.0
        %v2264 = vmax.f32 %v2196, 0.0
        %v2265 = vmax.f32 %v2198, 0.0
        %v2266 = vmax.f32 %v2087, 0.0
        %v2267 = vmax.f32 %v2089, 0.0
        %v2268 = vmax.f32 %v2200, 0.0
        %v2269 = vmax.f32 %v2202, 0.0
        %v2270 = vmax.f32 %v2093, 0.0
        %v2271 = vmax.f32 %v2095, 0.0
        %v2272 = vmax.f32 %v2206, 0.0
        %v2273 = vmax.f32 %v2208, 0.0
        %v2274 = vmax.f32 %v2097, 0.0
        %v2275 = vmax.f32 %v2099, 0.0
        %v2276 = vmax.f32 %v2210, 0.0
        %v2277 = vmax.f32 %v2212, 0.0
        %v2278 = vpack.c.bf16 %v2218, %v2214
        %v2279 = vpack.c.bf16 %v2219, %v2215
        %v2280 = vpack.c.bf16 %v2220, %v2216
        %v2281 = vpack.c.bf16 %v2221, %v2217
        %v2282 = vpack.c.bf16 %v2226, %v2222
        %v2283 = vpack.c.bf16 %v2227, %v2223
        %v2284 = vpack.c.bf16 %v2228, %v2224
        %v2285 = vpack.c.bf16 %v2229, %v2225
        %v2286 = vpack.c.bf16 %v2234, %v2230
        %v2287 = vpack.c.bf16 %v2235, %v2231
        %v2288 = vpack.c.bf16 %v2236, %v2232
        %v2289 = vpack.c.bf16 %v2237, %v2233
        %v2290 = vpack.c.bf16 %v2242, %v2238
        %v2291 = vpack.c.bf16 %v2243, %v2239
        %v2292 = vpack.c.bf16 %v2244, %v2240
        %v2293 = vpack.c.bf16 %v2245, %v2241
        %v2294 = vpack.c.bf16 %v2250, %v2246
        %v2295 = vpack.c.bf16 %v2251, %v2247
        %v2296 = vpack.c.bf16 %v2252, %v2248
        %v2297 = vpack.c.bf16 %v2253, %v2249
        %v2298 = vpack.c.bf16 %v2258, %v2254
        %v2299 = vpack.c.bf16 %v2259, %v2255
        %v2300 = vpack.c.bf16 %v2260, %v2256
        %v2301 = vpack.c.bf16 %v2261, %v2257
        %v2302 = vpack.c.bf16 %v2266, %v2262
        %v2303 = vpack.c.bf16 %v2267, %v2263
        %v2304 = vpack.c.bf16 %v2268, %v2264
        %v2305 = vpack.c.bf16 %v2269, %v2265
        %v2306 = vpack.c.bf16 %v2274, %v2270
        %v2307 = vpack.c.bf16 %v2275, %v2271
        %v2308 = vpack.c.bf16 %v2276, %v2272
        %v2309 = vpack.c.bf16 %v2277, %v2273
        %s2310 = scalar_lea.vmem [#allocation2], 64
        %v2311 = vld [vmem:[%s2310] sm:$0xf]
        %v2312 = vld [vmem:[%s2310 + $0x4] sm:$0xf]
        %v2313 = vld [vmem:[%s2310 + $0x8] sm:$0xf]
        %v2314 = vld [vmem:[%s2310 + $0xc] sm:$0xf]
        %v2315 = vld [vmem:[%s2310 + $0x10] sm:$0xf]
        %v2316 = vld [vmem:[%s2310 + $0x14] sm:$0xf]
        %v2317 = vld [vmem:[%s2310 + $0x18] sm:$0xf]
        %v2318 = vld [vmem:[%s2310 + $0x1c] sm:$0xf]
        %v2319 = vld [vmem:[%s2310 + $0x20] sm:$0xf]
        %v2320 = vld [vmem:[%s2310 + $0x24] sm:$0xf]
        %v2321 = vld [vmem:[%s2310 + $0x28] sm:$0xf]
        %v2322 = vld [vmem:[%s2310 + $0x2c] sm:$0xf]
        %v2323 = vld [vmem:[%s2310 + $0x30] sm:$0xf]
        %v2324 = vld [vmem:[%s2310 + $0x34] sm:$0xf]
        %v2325 = vld [vmem:[%s2310 + $0x38] sm:$0xf]
        %v2326 = vld [vmem:[%s2310 + $0x3c] sm:$0xf]
        %s2327 = scalar_lea.vmem %s4, 256
        %v2328 = vld [vmem:[%s2327] sm:$0xff]
        %v2329 = vld [vmem:[%s2327 + $0x8] sm:$0xff]
        %v2330 = vld [vmem:[%s2327 + $0x10] sm:$0xff]
        %v2331 = vld [vmem:[%s2327 + $0x18] sm:$0xff]
        %v2332 = vld [vmem:[%s2327 + $0x20] sm:$0xff]
        %v2333 = vld [vmem:[%s2327 + $0x28] sm:$0xff]
        %v2334 = vld [vmem:[%s2327 + $0x30] sm:$0xff]
        %v2335 = vld [vmem:[%s2327 + $0x38] sm:$0xff]
        %v2336 = vld [vmem:[%s2327 + $0x40] sm:$0xff]
        %v2337 = vld [vmem:[%s2327 + $0x48] sm:$0xff]
        %v2338 = vld [vmem:[%s2327 + $0x50] sm:$0xff]
        %v2339 = vld [vmem:[%s2327 + $0x58] sm:$0xff]
        %v2340 = vld [vmem:[%s2327 + $0x60] sm:$0xff]
        %v2341 = vld [vmem:[%s2327 + $0x68] sm:$0xff]
        %v2342 = vld [vmem:[%s2327 + $0x70] sm:$0xff]
        %v2343 = vld [vmem:[%s2327 + $0x78] sm:$0xff]
        %2345 = vset.pattern.permute.xlu0 0
        %2346 = vperm.xlu0 %2345, %v2328
        %v2347 = vpop.permute.xlu0 %2346
        %2350 = vset.pattern.permute.xlu0 0
        %2351 = vperm.xlu0 %2350, %v2329
        %v2352 = vpop.permute.xlu0 %2351
        %2355 = vset.pattern.permute.xlu0 0
        %2356 = vperm.xlu0 %2355, %v2330
        %v2357 = vpop.permute.xlu0 %2356
        %2360 = vset.pattern.permute.xlu0 0
        %2361 = vperm.xlu0 %2360, %v2331
        %v2362 = vpop.permute.xlu0 %2361
        %2365 = vset.pattern.permute.xlu0 0
        %2366 = vperm.xlu0 %2365, %v2332
        %v2367 = vpop.permute.xlu0 %2366
        %2370 = vset.pattern.permute.xlu0 0
        %2371 = vperm.xlu0 %2370, %v2333
        %v2372 = vpop.permute.xlu0 %2371
        %2375 = vset.pattern.permute.xlu0 0
        %2376 = vperm.xlu0 %2375, %v2334
        %v2377 = vpop.permute.xlu0 %2376
        %2380 = vset.pattern.permute.xlu0 0
        %2381 = vperm.xlu0 %2380, %v2335
        %v2382 = vpop.permute.xlu0 %2381
        %2385 = vset.pattern.permute.xlu0 0
        %2386 = vperm.xlu0 %2385, %v2336
        %v2387 = vpop.permute.xlu0 %2386
        %2390 = vset.pattern.permute.xlu0 0
        %2391 = vperm.xlu0 %2390, %v2337
        %v2392 = vpop.permute.xlu0 %2391
        %2395 = vset.pattern.permute.xlu0 0
        %2396 = vperm.xlu0 %2395, %v2338
        %v2397 = vpop.permute.xlu0 %2396
        %2400 = vset.pattern.permute.xlu0 0
        %2401 = vperm.xlu0 %2400, %v2339
        %v2402 = vpop.permute.xlu0 %2401
        %2405 = vset.pattern.permute.xlu0 0
        %2406 = vperm.xlu0 %2405, %v2340
        %v2407 = vpop.permute.xlu0 %2406
        %2410 = vset.pattern.permute.xlu0 0
        %2411 = vperm.xlu0 %2410, %v2341
        %v2412 = vpop.permute.xlu0 %2411
        %2415 = vset.pattern.permute.xlu0 0
        %2416 = vperm.xlu0 %2415, %v2342
        %v2417 = vpop.permute.xlu0 %2416
        %2420 = vset.pattern.permute.xlu0 0
        %2421 = vperm.xlu0 %2420, %v2343
        %v2422 = vpop.permute.xlu0 %2421
        %v2440 = vunpack.c.l.b16 %v2311
        %v2441 = vunpack.c.l.b16 %v2312
        %v2442 = vunpack.c.l.b16 %v2313
        %v2443 = vunpack.c.l.b16 %v2314
        %v2444 = vunpack.c.l.b16 %v2315
        %v2445 = vunpack.c.l.b16 %v2316
        %v2446 = vunpack.c.l.b16 %v2317
        %v2447 = vunpack.c.l.b16 %v2318
        %v2448 = vunpack.c.l.b16 %v2319
        %v2449 = vunpack.c.l.b16 %v2320
        %v2450 = vunpack.c.l.b16 %v2321
        %v2451 = vunpack.c.l.b16 %v2322
        %v2452 = vunpack.c.l.b16 %v2323
        %v2453 = vunpack.c.l.b16 %v2324
        %v2454 = vunpack.c.l.b16 %v2325
        %v2455 = vunpack.c.l.b16 %v2326
        %v2456 = vpack.c.b16 %v2441, %v2440
        %v2457 = vpack.c.b16 %v2443, %v2442
        %v2458 = vpack.c.b16 %v2445, %v2444
        %v2459 = vpack.c.b16 %v2447, %v2446
        %v2460 = vpack.c.b16 %v2449, %v2448
        %v2461 = vpack.c.b16 %v2451, %v2450
        %v2462 = vpack.c.b16 %v2453, %v2452
        %v2463 = vpack.c.b16 %v2455, %v2454
        %2472 = vmatprep.subr.bf16.mxu0 %v2279
        %2473 = vmatpush1.bf16.msra.mxu0 %v2278
        %2474 = vmatprep.subr.bf16.mxu0 %v2283
        %2475 = vmatpush1.bf16.msra.mxu0 %v2282
        %2476 = vmatprep.subr.bf16.mxu0 %v2287
        %2477 = vmatpush1.bf16.msra.mxu0 %v2286
        %2478 = vmatprep.subr.bf16.mxu0 %v2291
        %2479 = vmatpush1.bf16.msra.mxu0 %v2290
        %2480 = vmatprep.subr.bf16.mxu0 %v2295
        %2481 = vmatpush1.bf16.msra.mxu0 %v2294
        %2482 = vmatprep.subr.bf16.mxu0 %v2299
        %2483 = vmatpush1.bf16.msra.mxu0 %v2298
        %2484 = vmatprep.subr.bf16.mxu0 %v2303
        %2485 = vmatpush1.bf16.msra.mxu0 %v2302
        %2486 = vmatprep.subr.bf16.mxu0 %v2307
        %2487 = vmatpush1.bf16.msra.mxu0 %v2306
        %2488 = vmatprep.subr.bf16.mxu0 0
        %2489 = vmatpush1.bf16.msra.mxu0 0
        %2490 = vmatprep.subr.bf16.mxu0 0
        %2491 = vmatpush1.bf16.msra.mxu0 0
        %2492 = vmatprep.subr.bf16.mxu0 0
        %2493 = vmatpush1.bf16.msra.mxu0 0
        %2494 = vmatprep.subr.bf16.mxu0 0
        %2495 = vmatpush1.bf16.msra.mxu0 0
        %2496 = vmatprep.subr.bf16.mxu0 0
        %2497 = vmatpush1.bf16.msra.mxu0 0
        %2498 = vmatprep.subr.bf16.mxu0 0
        %2499 = vmatpush1.bf16.msra.mxu0 0
        %2500 = vmatprep.subr.bf16.mxu0 0
        %2501 = vmatpush1.bf16.msra.mxu0 0
        %2502 = vmatprep.subr.bf16.mxu0 0
        %2503 = vmatpush1.bf16.msra.mxu0 0
        %2504 = vmatprep.mubr.bf16.mxu0 0
        %2505 = vmatmul.mubr.bf16.gmra.mrb[0].mxu0 %v2456
        %v2506 = vpop.f32.mrb[0].mxu0
        %v2507 = vadd.f32 %v2347, %v2506
        %v2508 = vpop.f32.mrb[0].mxu0
        %v2509 = vadd.f32 %v2347, %v2508
        %v2510 = vpop.f32.mrb[0].mxu0
        %v2511 = vadd.f32 %v2352, %v2510
        %v2512 = vpop.f32.mrb[0].mxu0
        %v2513 = vadd.f32 %v2352, %v2512
        %2514 = vmatprep.mubr.bf16.mxu0 0
        %2515 = vmatmul.mubr.bf16.gmra.mrb[0].mxu0 %v2457
        %v2516 = vpop.f32.mrb[0].mxu0
        %v2517 = vadd.f32 %v2357, %v2516
        %v2518 = vpop.f32.mrb[0].mxu0
        %v2519 = vadd.f32 %v2357, %v2518
        %v2520 = vpop.f32.mrb[0].mxu0
        %v2521 = vadd.f32 %v2362, %v2520
        %v2522 = vpop.f32.mrb[0].mxu0
        %v2523 = vadd.f32 %v2362, %v2522
        %2524 = vmatprep.mubr.bf16.mxu0 0
        %2525 = vmatmul.mubr.bf16.gmra.mrb[0].mxu0 %v2458
        %v2526 = vpop.f32.mrb[0].mxu0
        %v2527 = vadd.f32 %v2367, %v2526
        %v2528 = vpop.f32.mrb[0].mxu0
        %v2529 = vadd.f32 %v2367, %v2528
        %v2530 = vpop.f32.mrb[0].mxu0
        %v2531 = vadd.f32 %v2372, %v2530
        %v2532 = vpop.f32.mrb[0].mxu0
        %v2533 = vadd.f32 %v2372, %v2532
        %2534 = vmatprep.mubr.bf16.mxu0 0
        %2535 = vmatmul.mubr.bf16.gmra.mrb[0].mxu0 %v2459
        %v2536 = vpop.f32.mrb[0].mxu0
        %v2537 = vadd.f32 %v2377, %v2536
        %v2538 = vpop.f32.mrb[0].mxu0
        %v2539 = vadd.f32 %v2377, %v2538
        %v2540 = vpop.f32.mrb[0].mxu0
        %v2541 = vadd.f32 %v2382, %v2540
        %v2542 = vpop.f32.mrb[0].mxu0
        %v2543 = vadd.f32 %v2382, %v2542
        %2544 = vmatprep.mubr.bf16.mxu0 0
        %2545 = vmatmul.mubr.bf16.gmra.mrb[0].mxu0 %v2460
        %v2546 = vpop.f32.mrb[0].mxu0
        %v2547 = vadd.f32 %v2387, %v2546
        %v2548 = vpop.f32.mrb[0].mxu0
        %v2549 = vadd.f32 %v2387, %v2548
        %v2550 = vpop.f32.mrb[0].mxu0
        %v2551 = vadd.f32 %v2392, %v2550
        %v2552 = vpop.f32.mrb[0].mxu0
        %v2553 = vadd.f32 %v2392, %v2552
        %2554 = vmatprep.mubr.bf16.mxu0 0
        %2555 = vmatmul.mubr.bf16.gmra.mrb[0].mxu0 %v2461
        %v2556 = vpop.f32.mrb[0].mxu0
        %v2557 = vadd.f32 %v2397, %v2556
        %v2558 = vpop.f32.mrb[0].mxu0
        %v2559 = vadd.f32 %v2397, %v2558
        %v2560 = vpop.f32.mrb[0].mxu0
        %v2561 = vadd.f32 %v2402, %v2560
        %v2562 = vpop.f32.mrb[0].mxu0
        %v2563 = vadd.f32 %v2402, %v2562
        %2564 = vmatprep.mubr.bf16.mxu0 0
        %2565 = vmatmul.mubr.bf16.gmra.mrb[0].mxu0 %v2462
        %v2566 = vpop.f32.mrb[0].mxu0
        %v2567 = vadd.f32 %v2407, %v2566
        %v2568 = vpop.f32.mrb[0].mxu0
        %v2569 = vadd.f32 %v2407, %v2568
        %v2570 = vpop.f32.mrb[0].mxu0
        %v2571 = vadd.f32 %v2412, %v2570
        %v2572 = vpop.f32.mrb[0].mxu0
        %v2573 = vadd.f32 %v2412, %v2572
        %2574 = vmatprep.mubr.bf16.mxu0 0
        %2575 = vmatmul.mubr.bf16.gmra.mrb[0].mxu0 %v2463
        %v2576 = vpop.f32.mrb[0].mxu0
        %v2577 = vadd.f32 %v2417, %v2576
        %v2578 = vpop.f32.mrb[0].mxu0
        %v2579 = vadd.f32 %v2417, %v2578
        %v2580 = vpop.f32.mrb[0].mxu0
        %v2581 = vadd.f32 %v2422, %v2580
        %v2582 = vpop.f32.mrb[0].mxu0
        %v2583 = vadd.f32 %v2422, %v2582
        %2584 = vdwg.mxu0
        %2585 = vmatprep.subr.bf16.mxu0 %v2281
        %2586 = vmatpush1.bf16.msra.mxu0 %v2280
        %2587 = vmatprep.subr.bf16.mxu0 %v2285
        %2588 = vmatpush1.bf16.msra.mxu0 %v2284
        %2589 = vmatprep.subr.bf16.mxu0 %v2289
        %2590 = vmatpush1.bf16.msra.mxu0 %v2288
        %2591 = vmatprep.subr.bf16.mxu0 %v2293
        %2592 = vmatpush1.bf16.msra.mxu0 %v2292
        %2593 = vmatprep.subr.bf16.mxu0 %v2297
        %2594 = vmatpush1.bf16.msra.mxu0 %v2296
        %2595 = vmatprep.subr.bf16.mxu0 %v2301
        %2596 = vmatpush1.bf16.msra.mxu0 %v2300
        %2597 = vmatprep.subr.bf16.mxu0 %v2305
        %2598 = vmatpush1.bf16.msra.mxu0 %v2304
        %2599 = vmatprep.subr.bf16.mxu0 %v2309
        %2600 = vmatpush1.bf16.msra.mxu0 %v2308
        %2601 = vmatprep.subr.bf16.mxu0 0
        %2602 = vmatpush1.bf16.msra.mxu0 0
        %2603 = vmatprep.subr.bf16.mxu0 0
        %2604 = vmatpush1.bf16.msra.mxu0 0
        %2605 = vmatprep.subr.bf16.mxu0 0
        %2606 = vmatpush1.bf16.msra.mxu0 0
        %2607 = vmatprep.subr.bf16.mxu0 0
        %2608 = vmatpush1.bf16.msra.mxu0 0
        %2609 = vmatprep.subr.bf16.mxu0 0
        %2610 = vmatpush1.bf16.msra.mxu0 0
        %2611 = vmatprep.subr.bf16.mxu0 0
        %2612 = vmatpush1.bf16.msra.mxu0 0
        %2613 = vmatprep.subr.bf16.mxu0 0
        %2614 = vmatpush1.bf16.msra.mxu0 0
        %2615 = vmatprep.subr.bf16.mxu0 0
        %2616 = vmatpush1.bf16.msra.mxu0 0
        %2617 = vmatprep.mubr.bf16.mxu0 0
        %2618 = vmatmul.mubr.bf16.gmra.mrb[0].mxu0 %v2456
        %v2619 = vpop.f32.mrb[0].mxu0
        %v2620 = vadd.f32 %v2347, %v2619
        %v2621 = vpop.f32.mrb[0].mxu0
        %v2622 = vadd.f32 %v2347, %v2621
        %v2623 = vpop.f32.mrb[0].mxu0
        %v2624 = vadd.f32 %v2352, %v2623
        %v2625 = vpop.f32.mrb[0].mxu0
        %v2626 = vadd.f32 %v2352, %v2625
        %2627 = vmatprep.mubr.bf16.mxu0 0
        %2628 = vmatmul.mubr.bf16.gmra.mrb[0].mxu0 %v2457
        %v2629 = vpop.f32.mrb[0].mxu0
        %v2630 = vadd.f32 %v2357, %v2629
        %v2631 = vpop.f32.mrb[0].mxu0
        %v2632 = vadd.f32 %v2357, %v2631
        %v2633 = vpop.f32.mrb[0].mxu0
        %v2634 = vadd.f32 %v2362, %v2633
        %v2635 = vpop.f32.mrb[0].mxu0
        %v2636 = vadd.f32 %v2362, %v2635
        %2637 = vmatprep.mubr.bf16.mxu0 0
        %2638 = vmatmul.mubr.bf16.gmra.mrb[0].mxu0 %v2458
        %v2639 = vpop.f32.mrb[0].mxu0
        %v2640 = vadd.f32 %v2367, %v2639
        %v2641 = vpop.f32.mrb[0].mxu0
        %v2642 = vadd.f32 %v2367, %v2641
        %v2643 = vpop.f32.mrb[0].mxu0
        %v2644 = vadd.f32 %v2372, %v2643
        %v2645 = vpop.f32.mrb[0].mxu0
        %v2646 = vadd.f32 %v2372, %v2645
        %2647 = vmatprep.mubr.bf16.mxu0 0
        %2648 = vmatmul.mubr.bf16.gmra.mrb[0].mxu0 %v2459
        %v2649 = vpop.f32.mrb[0].mxu0
        %v2650 = vadd.f32 %v2377, %v2649
        %v2651 = vpop.f32.mrb[0].mxu0
        %v2652 = vadd.f32 %v2377, %v2651
        %v2653 = vpop.f32.mrb[0].mxu0
        %v2654 = vadd.f32 %v2382, %v2653
        %v2655 = vpop.f32.mrb[0].mxu0
        %v2656 = vadd.f32 %v2382, %v2655
        %2657 = vmatprep.mubr.bf16.mxu0 0
        %2658 = vmatmul.mubr.bf16.gmra.mrb[0].mxu0 %v2460
        %v2659 = vpop.f32.mrb[0].mxu0
        %v2660 = vadd.f32 %v2387, %v2659
        %v2661 = vpop.f32.mrb[0].mxu0
        %v2662 = vadd.f32 %v2387, %v2661
        %v2663 = vpop.f32.mrb[0].mxu0
        %v2664 = vadd.f32 %v2392, %v2663
        %v2665 = vpop.f32.mrb[0].mxu0
        %v2666 = vadd.f32 %v2392, %v2665
        %2667 = vmatprep.mubr.bf16.mxu0 0
        %2668 = vmatmul.mubr.bf16.gmra.mrb[0].mxu0 %v2461
        %v2669 = vpop.f32.mrb[0].mxu0
        %v2670 = vadd.f32 %v2397, %v2669
        %v2671 = vpop.f32.mrb[0].mxu0
        %v2672 = vadd.f32 %v2397, %v2671
        %v2673 = vpop.f32.mrb[0].mxu0
        %v2674 = vadd.f32 %v2402, %v2673
        %v2675 = vpop.f32.mrb[0].mxu0
        %v2676 = vadd.f32 %v2402, %v2675
        %2677 = vmatprep.mubr.bf16.mxu0 0
        %2678 = vmatmul.mubr.bf16.gmra.mrb[0].mxu0 %v2462
        %v2679 = vpop.f32.mrb[0].mxu0
        %v2680 = vadd.f32 %v2407, %v2679
        %v2681 = vpop.f32.mrb[0].mxu0
        %v2682 = vadd.f32 %v2407, %v2681
        %v2683 = vpop.f32.mrb[0].mxu0
        %v2684 = vadd.f32 %v2412, %v2683
        %v2685 = vpop.f32.mrb[0].mxu0
        %v2686 = vadd.f32 %v2412, %v2685
        %2687 = vmatprep.mubr.bf16.mxu0 0
        %2688 = vmatmul.mubr.bf16.gmra.mrb[0].mxu0 %v2463
        %v2689 = vpop.f32.mrb[0].mxu0
        %v2690 = vadd.f32 %v2417, %v2689
        %v2691 = vpop.f32.mrb[0].mxu0
        %v2692 = vadd.f32 %v2417, %v2691
        %v2693 = vpop.f32.mrb[0].mxu0
        %v2694 = vadd.f32 %v2422, %v2693
        %v2695 = vpop.f32.mrb[0].mxu0
        %v2696 = vadd.f32 %v2422, %v2695
        %2697 = vdwg.mxu0
        %v2698 = vmax.f32 %v2507, 0.0
        %v2699 = vmax.f32 %v2509, 0.0
        %v2700 = vmax.f32 %v2620, 0.0
        %v2701 = vmax.f32 %v2622, 0.0
        %v2702 = vmax.f32 %v2511, 0.0
        %v2703 = vmax.f32 %v2513, 0.0
        %v2704 = vmax.f32 %v2624, 0.0
        %v2705 = vmax.f32 %v2626, 0.0
        %v2706 = vmax.f32 %v2517, 0.0
        %v2707 = vmax.f32 %v2519, 0.0
        %v2708 = vmax.f32 %v2630, 0.0
        %v2709 = vmax.f32 %v2632, 0.0
        %v2710 = vmax.f32 %v2521, 0.0
        %v2711 = vmax.f32 %v2523, 0.0
        %v2712 = vmax.f32 %v2634, 0.0
        %v2713 = vmax.f32 %v2636, 0.0
        %v2714 = vmax.f32 %v2527, 0.0
        %v2715 = vmax.f32 %v2529, 0.0
        %v2716 = vmax.f32 %v2640, 0.0
        %v2717 = vmax.f32 %v2642, 0.0
        %v2718 = vmax.f32 %v2531, 0.0
        %v2719 = vmax.f32 %v2533, 0.0
        %v2720 = vmax.f32 %v2644, 0.0
        %v2721 = vmax.f32 %v2646, 0.0
        %v2722 = vmax.f32 %v2537, 0.0
        %v2723 = vmax.f32 %v2539, 0.0
        %v2724 = vmax.f32 %v2650, 0.0
        %v2725 = vmax.f32 %v2652, 0.0
        %v2726 = vmax.f32 %v2541, 0.0
        %v2727 = vmax.f32 %v2543, 0.0
        %v2728 = vmax.f32 %v2654, 0.0
        %v2729 = vmax.f32 %v2656, 0.0
        %v2730 = vmax.f32 %v2547, 0.0
        %v2731 = vmax.f32 %v2549, 0.0
        %v2732 = vmax.f32 %v2660, 0.0
        %v2733 = vmax.f32 %v2662, 0.0
        %v2734 = vmax.f32 %v2551, 0.0
        %v2735 = vmax.f32 %v2553, 0.0
        %v2736 = vmax.f32 %v2664, 0.0
        %v2737 = vmax.f32 %v2666, 0.0
        %v2738 = vmax.f32 %v2557, 0.0
        %v2739 = vmax.f32 %v2559, 0.0
        %v2740 = vmax.f32 %v2670, 0.0
        %v2741 = vmax.f32 %v2672, 0.0
        %v2742 = vmax.f32 %v2561, 0.0
        %v2743 = vmax.f32 %v2563, 0.0
        %v2744 = vmax.f32 %v2674, 0.0
        %v2745 = vmax.f32 %v2676, 0.0
        %v2746 = vmax.f32 %v2567, 0.0
        %v2747 = vmax.f32 %v2569, 0.0
        %v2748 = vmax.f32 %v2680, 0.0
        %v2749 = vmax.f32 %v2682, 0.0
        %v2750 = vmax.f32 %v2571, 0.0
        %v2751 = vmax.f32 %v2573, 0.0
        %v2752 = vmax.f32 %v2684, 0.0
        %v2753 = vmax.f32 %v2686, 0.0
        %v2754 = vmax.f32 %v2577, 0.0
        %v2755 = vmax.f32 %v2579, 0.0
        %v2756 = vmax.f32 %v2690, 0.0
        %v2757 = vmax.f32 %v2692, 0.0
        %v2758 = vmax.f32 %v2581, 0.0
        %v2759 = vmax.f32 %v2583, 0.0
        %v2760 = vmax.f32 %v2694, 0.0
        %v2761 = vmax.f32 %v2696, 0.0
        %v2762 = vpack.c.bf16 %v2702, %v2698
        %v2763 = vpack.c.bf16 %v2703, %v2699
        %v2764 = vpack.c.bf16 %v2704, %v2700
        %v2765 = vpack.c.bf16 %v2705, %v2701
        %v2766 = vpack.c.bf16 %v2710, %v2706
        %v2767 = vpack.c.bf16 %v2711, %v2707
        %v2768 = vpack.c.bf16 %v2712, %v2708
        %v2769 = vpack.c.bf16 %v2713, %v2709
        %v2770 = vpack.c.bf16 %v2718, %v2714
        %v2771 = vpack.c.bf16 %v2719, %v2715
        %v2772 = vpack.c.bf16 %v2720, %v2716
        %v2773 = vpack.c.bf16 %v2721, %v2717
        %v2774 = vpack.c.bf16 %v2726, %v2722
        %v2775 = vpack.c.bf16 %v2727, %v2723
        %v2776 = vpack.c.bf16 %v2728, %v2724
        %v2777 = vpack.c.bf16 %v2729, %v2725
        %v2778 = vpack.c.bf16 %v2734, %v2730
        %v2779 = vpack.c.bf16 %v2735, %v2731
        %v2780 = vpack.c.bf16 %v2736, %v2732
        %v2781 = vpack.c.bf16 %v2737, %v2733
        %v2782 = vpack.c.bf16 %v2742, %v2738
        %v2783 = vpack.c.bf16 %v2743, %v2739
        %v2784 = vpack.c.bf16 %v2744, %v2740
        %v2785 = vpack.c.bf16 %v2745, %v2741
        %v2786 = vpack.c.bf16 %v2750, %v2746
        %v2787 = vpack.c.bf16 %v2751, %v2747
        %v2788 = vpack.c.bf16 %v2752, %v2748
        %v2789 = vpack.c.bf16 %v2753, %v2749
        %v2790 = vpack.c.bf16 %v2758, %v2754
        %v2791 = vpack.c.bf16 %v2759, %v2755
        %v2792 = vpack.c.bf16 %v2760, %v2756
        %v2793 = vpack.c.bf16 %v2761, %v2757
        %s2794 = scalar_lea.vmem [#allocation2], 128
        %v2795 = vld [vmem:[%s2794] sm:$0xf]
        %v2796 = vld [vmem:[%s2794 + $0x4] sm:$0xf]
        %v2797 = vld [vmem:[%s2794 + $0x8] sm:$0xf]
        %v2798 = vld [vmem:[%s2794 + $0xc] sm:$0xf]
        %v2799 = vld [vmem:[%s2794 + $0x10] sm:$0xf]
        %v2800 = vld [vmem:[%s2794 + $0x14] sm:$0xf]
        %v2801 = vld [vmem:[%s2794 + $0x18] sm:$0xf]
        %v2802 = vld [vmem:[%s2794 + $0x1c] sm:$0xf]
        %v2803 = vld [vmem:[%s2794 + $0x20] sm:$0xf]
        %v2804 = vld [vmem:[%s2794 + $0x24] sm:$0xf]
        %v2805 = vld [vmem:[%s2794 + $0x28] sm:$0xf]
        %v2806 = vld [vmem:[%s2794 + $0x2c] sm:$0xf]
        %v2807 = vld [vmem:[%s2794 + $0x30] sm:$0xf]
        %v2808 = vld [vmem:[%s2794 + $0x34] sm:$0xf]
        %v2809 = vld [vmem:[%s2794 + $0x38] sm:$0xf]
        %v2810 = vld [vmem:[%s2794 + $0x3c] sm:$0xf]
        %s2811 = scalar_lea.vmem %s4, 384
        %v2812 = vld [vmem:[%s2811] sm:$0xff]
        %v2813 = vld [vmem:[%s2811 + $0x8] sm:$0xff]
        %v2814 = vld [vmem:[%s2811 + $0x10] sm:$0xff]
        %v2815 = vld [vmem:[%s2811 + $0x18] sm:$0xff]
        %v2816 = vld [vmem:[%s2811 + $0x20] sm:$0xff]
        %v2817 = vld [vmem:[%s2811 + $0x28] sm:$0xff]
        %v2818 = vld [vmem:[%s2811 + $0x30] sm:$0xff]
        %v2819 = vld [vmem:[%s2811 + $0x38] sm:$0xff]
        %v2820 = vld [vmem:[%s2811 + $0x40] sm:$0xff]
        %v2821 = vld [vmem:[%s2811 + $0x48] sm:$0xff]
        %v2822 = vld [vmem:[%s2811 + $0x50] sm:$0xff]
        %v2823 = vld [vmem:[%s2811 + $0x58] sm:$0xff]
        %v2824 = vld [vmem:[%s2811 + $0x60] sm:$0xff]
        %v2825 = vld [vmem:[%s2811 + $0x68] sm:$0xff]
        %v2826 = vld [vmem:[%s2811 + $0x70] sm:$0xff]
        %v2827 = vld [vmem:[%s2811 + $0x78] sm:$0xff]
        %2829 = vset.pattern.permute.xlu0 0
        %2830 = vperm.xlu0 %2829, %v2812
        %v2831 = vpop.permute.xlu0 %2830
        %2834 = vset.pattern.permute.xlu0 0
        %2835 = vperm.xlu0 %2834, %v2813
        %v2836 = vpop.permute.xlu0 %2835
        %2839 = vset.pattern.permute.xlu0 0
        %2840 = vperm.xlu0 %2839, %v2814
        %v2841 = vpop.permute.xlu0 %2840
        %2844 = vset.pattern.permute.xlu0 0
        %2845 = vperm.xlu0 %2844, %v2815
        %v2846 = vpop.permute.xlu0 %2845
        %2849 = vset.pattern.permute.xlu0 0
        %2850 = vperm.xlu0 %2849, %v2816
        %v2851 = vpop.permute.xlu0 %2850
        %2854 = vset.pattern.permute.xlu0 0
        %2855 = vperm.xlu0 %2854, %v2817
        %v2856 = vpop.permute.xlu0 %2855
        %2859 = vset.pattern.permute.xlu0 0
        %2860 = vperm.xlu0 %2859, %v2818
        %v2861 = vpop.permute.xlu0 %2860
        %2864 = vset.pattern.permute.xlu0 0
        %2865 = vperm.xlu0 %2864, %v2819
        %v2866 = vpop.permute.xlu0 %2865
        %2869 = vset.pattern.permute.xlu0 0
        %2870 = vperm.xlu0 %2869, %v2820
        %v2871 = vpop.permute.xlu0 %2870
        %2874 = vset.pattern.permute.xlu0 0
        %2875 = vperm.xlu0 %2874, %v2821
        %v2876 = vpop.permute.xlu0 %2875
        %2879 = vset.pattern.permute.xlu0 0
        %2880 = vperm.xlu0 %2879, %v2822
        %v2881 = vpop.permute.xlu0 %2880
        %2884 = vset.pattern.permute.xlu0 0
        %2885 = vperm.xlu0 %2884, %v2823
        %v2886 = vpop.permute.xlu0 %2885
        %2889 = vset.pattern.permute.xlu0 0
        %2890 = vperm.xlu0 %2889, %v2824
        %v2891 = vpop.permute.xlu0 %2890
        %2894 = vset.pattern.permute.xlu0 0
        %2895 = vperm.xlu0 %2894, %v2825
        %v2896 = vpop.permute.xlu0 %2895
        %2899 = vset.pattern.permute.xlu0 0
        %2900 = vperm.xlu0 %2899, %v2826
        %v2901 = vpop.permute.xlu0 %2900
        %2904 = vset.pattern.permute.xlu0 0
        %2905 = vperm.xlu0 %2904, %v2827
        %v2906 = vpop.permute.xlu0 %2905
        %v2924 = vunpack.c.l.b16 %v2795
        %v2925 = vunpack.c.l.b16 %v2796
        %v2926 = vunpack.c.l.b16 %v2797
        %v2927 = vunpack.c.l.b16 %v2798
        %v2928 = vunpack.c.l.b16 %v2799
        %v2929 = vunpack.c.l.b16 %v2800
        %v2930 = vunpack.c.l.b16 %v2801
        %v2931 = vunpack.c.l.b16 %v2802
        %v2932 = vunpack.c.l.b16 %v2803
        %v2933 = vunpack.c.l.b16 %v2804
        %v2934 = vunpack.c.l.b16 %v2805
        %v2935 = vunpack.c.l.b16 %v2806
        %v2936 = vunpack.c.l.b16 %v2807
        %v2937 = vunpack.c.l.b16 %v2808
        %v2938 = vunpack.c.l.b16 %v2809
        %v2939 = vunpack.c.l.b16 %v2810
        %v2940 = vpack.c.b16 %v2925, %v2924
        %v2941 = vpack.c.b16 %v2927, %v2926
        %v2942 = vpack.c.b16 %v2929, %v2928
        %v2943 = vpack.c.b16 %v2931, %v2930
        %v2944 = vpack.c.b16 %v2933, %v2932
        %v2945 = vpack.c.b16 %v2935, %v2934
        %v2946 = vpack.c.b16 %v2937, %v2936
        %v2947 = vpack.c.b16 %v2939, %v2938
        %2956 = vmatprep.subr.bf16.mxu0 %v2763
        %2957 = vmatpush1.bf16.msra.mxu0 %v2762
        %2958 = vmatprep.subr.bf16.mxu0 %v2767
        %2959 = vmatpush1.bf16.msra.mxu0 %v2766
        %2960 = vmatprep.subr.bf16.mxu0 %v2771
        %2961 = vmatpush1.bf16.msra.mxu0 %v2770
        %2962 = vmatprep.subr.bf16.mxu0 %v2775
        %2963 = vmatpush1.bf16.msra.mxu0 %v2774
        %2964 = vmatprep.subr.bf16.mxu0 %v2779
        %2965 = vmatpush1.bf16.msra.mxu0 %v2778
        %2966 = vmatprep.subr.bf16.mxu0 %v2783
        %2967 = vmatpush1.bf16.msra.mxu0 %v2782
        %2968 = vmatprep.subr.bf16.mxu0 %v2787
        %2969 = vmatpush1.bf16.msra.mxu0 %v2786
        %2970 = vmatprep.subr.bf16.mxu0 %v2791
        %2971 = vmatpush1.bf16.msra.mxu0 %v2790
        %2972 = vmatprep.subr.bf16.mxu0 0
        %2973 = vmatpush1.bf16.msra.mxu0 0
        %2974 = vmatprep.subr.bf16.mxu0 0
        %2975 = vmatpush1.bf16.msra.mxu0 0
        %2976 = vmatprep.subr.bf16.mxu0 0
        %2977 = vmatpush1.bf16.msra.mxu0 0
        %2978 = vmatprep.subr.bf16.mxu0 0
        %2979 = vmatpush1.bf16.msra.mxu0 0
        %2980 = vmatprep.subr.bf16.mxu0 0
        %2981 = vmatpush1.bf16.msra.mxu0 0
        %2982 = vmatprep.subr.bf16.mxu0 0
        %2983 = vmatpush1.bf16.msra.mxu0 0
        %2984 = vmatprep.subr.bf16.mxu0 0
        %2985 = vmatpush1.bf16.msra.mxu0 0
        %2986 = vmatprep.subr.bf16.mxu0 0
        %2987 = vmatpush1.bf16.msra.mxu0 0
        %2988 = vmatprep.mubr.bf16.mxu0 0
        %2989 = vmatmul.mubr.bf16.gmra.mrb[0].mxu0 %v2940
        %v2990 = vpop.f32.mrb[0].mxu0
        %v2991 = vadd.f32 %v2831, %v2990
        %v2992 = vpop.f32.mrb[0].mxu0
        %v2993 = vadd.f32 %v2831, %v2992
        %v2994 = vpop.f32.mrb[0].mxu0
        %v2995 = vadd.f32 %v2836, %v2994
        %v2996 = vpop.f32.mrb[0].mxu0
        %v2997 = vadd.f32 %v2836, %v2996
        %2998 = vmatprep.mubr.bf16.mxu0 0
        %2999 = vmatmul.mubr.bf16.gmra.mrb[0].mxu0 %v2941
        %v3000 = vpop.f32.mrb[0].mxu0
        %v3001 = vadd.f32 %v2841, %v3000
        %v3002 = vpop.f32.mrb[0].mxu0
        %v3003 = vadd.f32 %v2841, %v3002
        %v3004 = vpop.f32.mrb[0].mxu0
        %v3005 = vadd.f32 %v2846, %v3004
        %v3006 = vpop.f32.mrb[0].mxu0
        %v3007 = vadd.f32 %v2846, %v3006
        %3008 = vmatprep.mubr.bf16.mxu0 0
        %3009 = vmatmul.mubr.bf16.gmra.mrb[0].mxu0 %v2942
        %v3010 = vpop.f32.mrb[0].mxu0
        %v3011 = vadd.f32 %v2851, %v3010
        %v3012 = vpop.f32.mrb[0].mxu0
        %v3013 = vadd.f32 %v2851, %v3012
        %v3014 = vpop.f32.mrb[0].mxu0
        %v3015 = vadd.f32 %v2856, %v3014
        %v3016 = vpop.f32.mrb[0].mxu0
        %v3017 = vadd.f32 %v2856, %v3016
        %3018 = vmatprep.mubr.bf16.mxu0 0
        %3019 = vmatmul.mubr.bf16.gmra.mrb[0].mxu0 %v2943
        %v3020 = vpop.f32.mrb[0].mxu0
        %v3021 = vadd.f32 %v2861, %v3020
        %v3022 = vpop.f32.mrb[0].mxu0
        %v3023 = vadd.f32 %v2861, %v3022
        %v3024 = vpop.f32.mrb[0].mxu0
        %v3025 = vadd.f32 %v2866, %v3024
        %v3026 = vpop.f32.mrb[0].mxu0
        %v3027 = vadd.f32 %v2866, %v3026
        %3028 = vmatprep.mubr.bf16.mxu0 0
        %3029 = vmatmul.mubr.bf16.gmra.mrb[0].mxu0 %v2944
        %v3030 = vpop.f32.mrb[0].mxu0
        %v3031 = vadd.f32 %v2871, %v3030
        %v3032 = vpop.f32.mrb[0].mxu0
        %v3033 = vadd.f32 %v2871, %v3032
        %v3034 = vpop.f32.mrb[0].mxu0
        %v3035 = vadd.f32 %v2876, %v3034
        %v3036 = vpop.f32.mrb[0].mxu0
        %v3037 = vadd.f32 %v2876, %v3036
        %3038 = vmatprep.mubr.bf16.mxu0 0
        %3039 = vmatmul.mubr.bf16.gmra.mrb[0].mxu0 %v2945
        %v3040 = vpop.f32.mrb[0].mxu0
        %v3041 = vadd.f32 %v2881, %v3040
        %v3042 = vpop.f32.mrb[0].mxu0
        %v3043 = vadd.f32 %v2881, %v3042
        %v3044 = vpop.f32.mrb[0].mxu0
        %v3045 = vadd.f32 %v2886, %v3044
        %v3046 = vpop.f32.mrb[0].mxu0
        %v3047 = vadd.f32 %v2886, %v3046
        %3048 = vmatprep.mubr.bf16.mxu0 0
        %3049 = vmatmul.mubr.bf16.gmra.mrb[0].mxu0 %v2946
        %v3050 = vpop.f32.mrb[0].mxu0
        %v3051 = vadd.f32 %v2891, %v3050
        %v3052 = vpop.f32.mrb[0].mxu0
        %v3053 = vadd.f32 %v2891, %v3052
        %v3054 = vpop.f32.mrb[0].mxu0
        %v3055 = vadd.f32 %v2896, %v3054
        %v3056 = vpop.f32.mrb[0].mxu0
        %v3057 = vadd.f32 %v2896, %v3056
        %3058 = vmatprep.mubr.bf16.mxu0 0
        %3059 = vmatmul.mubr.bf16.gmra.mrb[0].mxu0 %v2947
        %v3060 = vpop.f32.mrb[0].mxu0
        %v3061 = vadd.f32 %v2901, %v3060
        %v3062 = vpop.f32.mrb[0].mxu0
        %v3063 = vadd.f32 %v2901, %v3062
        %v3064 = vpop.f32.mrb[0].mxu0
        %v3065 = vadd.f32 %v2906, %v3064
        %v3066 = vpop.f32.mrb[0].mxu0
        %v3067 = vadd.f32 %v2906, %v3066
        %3068 = vdwg.mxu0
        %3069 = vmatprep.subr.bf16.mxu0 %v2765
        %3070 = vmatpush1.bf16.msra.mxu0 %v2764
        %3071 = vmatprep.subr.bf16.mxu0 %v2769
        %3072 = vmatpush1.bf16.msra.mxu0 %v2768
        %3073 = vmatprep.subr.bf16.mxu0 %v2773
        %3074 = vmatpush1.bf16.msra.mxu0 %v2772
        %3075 = vmatprep.subr.bf16.mxu0 %v2777
        %3076 = vmatpush1.bf16.msra.mxu0 %v2776
        %3077 = vmatprep.subr.bf16.mxu0 %v2781
        %3078 = vmatpush1.bf16.msra.mxu0 %v2780
        %3079 = vmatprep.subr.bf16.mxu0 %v2785
        %3080 = vmatpush1.bf16.msra.mxu0 %v2784
        %3081 = vmatprep.subr.bf16.mxu0 %v2789
        %3082 = vmatpush1.bf16.msra.mxu0 %v2788
        %3083 = vmatprep.subr.bf16.mxu0 %v2793
        %3084 = vmatpush1.bf16.msra.mxu0 %v2792
        %3085 = vmatprep.subr.bf16.mxu0 0
        %3086 = vmatpush1.bf16.msra.mxu0 0
        %3087 = vmatprep.subr.bf16.mxu0 0
        %3088 = vmatpush1.bf16.msra.mxu0 0
        %3089 = vmatprep.subr.bf16.mxu0 0
        %3090 = vmatpush1.bf16.msra.mxu0 0
        %3091 = vmatprep.subr.bf16.mxu0 0
        %3092 = vmatpush1.bf16.msra.mxu0 0
        %3093 = vmatprep.subr.bf16.mxu0 0
        %3094 = vmatpush1.bf16.msra.mxu0 0
        %3095 = vmatprep.subr.bf16.mxu0 0
        %3096 = vmatpush1.bf16.msra.mxu0 0
        %3097 = vmatprep.subr.bf16.mxu0 0
        %3098 = vmatpush1.bf16.msra.mxu0 0
        %3099 = vmatprep.subr.bf16.mxu0 0
        %3100 = vmatpush1.bf16.msra.mxu0 0
        %3101 = vmatprep.mubr.bf16.mxu0 0
        %3102 = vmatmul.mubr.bf16.gmra.mrb[0].mxu0 %v2940
        %v3103 = vpop.f32.mrb[0].mxu0
        %v3104 = vadd.f32 %v2831, %v3103
        %v3105 = vpop.f32.mrb[0].mxu0
        %v3106 = vadd.f32 %v2831, %v3105
        %v3107 = vpop.f32.mrb[0].mxu0
        %v3108 = vadd.f32 %v2836, %v3107
        %v3109 = vpop.f32.mrb[0].mxu0
        %v3110 = vadd.f32 %v2836, %v3109
        %3111 = vmatprep.mubr.bf16.mxu0 0
        %3112 = vmatmul.mubr.bf16.gmra.mrb[0].mxu0 %v2941
        %v3113 = vpop.f32.mrb[0].mxu0
        %v3114 = vadd.f32 %v2841, %v3113
        %v3115 = vpop.f32.mrb[0].mxu0
        %v3116 = vadd.f32 %v2841, %v3115
        %v3117 = vpop.f32.mrb[0].mxu0
        %v3118 = vadd.f32 %v2846, %v3117
        %v3119 = vpop.f32.mrb[0].mxu0
        %v3120 = vadd.f32 %v2846, %v3119
        %3121 = vmatprep.mubr.bf16.mxu0 0
        %3122 = vmatmul.mubr.bf16.gmra.mrb[0].mxu0 %v2942
        %v3123 = vpop.f32.mrb[0].mxu0
        %v3124 = vadd.f32 %v2851, %v3123
        %v3125 = vpop.f32.mrb[0].mxu0
        %v3126 = vadd.f32 %v2851, %v3125
        %v3127 = vpop.f32.mrb[0].mxu0
        %v3128 = vadd.f32 %v2856, %v3127
        %v3129 = vpop.f32.mrb[0].mxu0
        %v3130 = vadd.f32 %v2856, %v3129
        %3131 = vmatprep.mubr.bf16.mxu0 0
        %3132 = vmatmul.mubr.bf16.gmra.mrb[0].mxu0 %v2943
        %v3133 = vpop.f32.mrb[0].mxu0
        %v3134 = vadd.f32 %v2861, %v3133
        %v3135 = vpop.f32.mrb[0].mxu0
        %v3136 = vadd.f32 %v2861, %v3135
        %v3137 = vpop.f32.mrb[0].mxu0
        %v3138 = vadd.f32 %v2866, %v3137
        %v3139 = vpop.f32.mrb[0].mxu0
        %v3140 = vadd.f32 %v2866, %v3139
        %3141 = vmatprep.mubr.bf16.mxu0 0
        %3142 = vmatmul.mubr.bf16.gmra.mrb[0].mxu0 %v2944
        %v3143 = vpop.f32.mrb[0].mxu0
        %v3144 = vadd.f32 %v2871, %v3143
        %v3145 = vpop.f32.mrb[0].mxu0
        %v3146 = vadd.f32 %v2871, %v3145
        %v3147 = vpop.f32.mrb[0].mxu0
        %v3148 = vadd.f32 %v2876, %v3147
        %v3149 = vpop.f32.mrb[0].mxu0
        %v3150 = vadd.f32 %v2876, %v3149
        %3151 = vmatprep.mubr.bf16.mxu0 0
        %3152 = vmatmul.mubr.bf16.gmra.mrb[0].mxu0 %v2945
        %v3153 = vpop.f32.mrb[0].mxu0
        %v3154 = vadd.f32 %v2881, %v3153
        %v3155 = vpop.f32.mrb[0].mxu0
        %v3156 = vadd.f32 %v2881, %v3155
        %v3157 = vpop.f32.mrb[0].mxu0
        %v3158 = vadd.f32 %v2886, %v3157
        %v3159 = vpop.f32.mrb[0].mxu0
        %v3160 = vadd.f32 %v2886, %v3159
        %3161 = vmatprep.mubr.bf16.mxu0 0
        %3162 = vmatmul.mubr.bf16.gmra.mrb[0].mxu0 %v2946
        %v3163 = vpop.f32.mrb[0].mxu0
        %v3164 = vadd.f32 %v2891, %v3163
        %v3165 = vpop.f32.mrb[0].mxu0
        %v3166 = vadd.f32 %v2891, %v3165
        %v3167 = vpop.f32.mrb[0].mxu0
        %v3168 = vadd.f32 %v2896, %v3167
        %v3169 = vpop.f32.mrb[0].mxu0
        %v3170 = vadd.f32 %v2896, %v3169
        %3171 = vmatprep.mubr.bf16.mxu0 0
        %3172 = vmatmul.mubr.bf16.gmra.mrb[0].mxu0 %v2947
        %v3173 = vpop.f32.mrb[0].mxu0
        %v3174 = vadd.f32 %v2901, %v3173
        %v3175 = vpop.f32.mrb[0].mxu0
        %v3176 = vadd.f32 %v2901, %v3175
        %v3177 = vpop.f32.mrb[0].mxu0
        %v3178 = vadd.f32 %v2906, %v3177
        %v3179 = vpop.f32.mrb[0].mxu0
        %v3180 = vadd.f32 %v2906, %v3179
        %3181 = vdwg.mxu0
        %v3182 = vmax.f32 %v2991, 0.0
        %v3183 = vmax.f32 %v2993, 0.0
        %v3184 = vmax.f32 %v3104, 0.0
        %v3185 = vmax.f32 %v3106, 0.0
        %v3186 = vmax.f32 %v2995, 0.0
        %v3187 = vmax.f32 %v2997, 0.0
        %v3188 = vmax.f32 %v3108, 0.0
        %v3189 = vmax.f32 %v3110, 0.0
        %v3190 = vmax.f32 %v3001, 0.0
        %v3191 = vmax.f32 %v3003, 0.0
        %v3192 = vmax.f32 %v3114, 0.0
        %v3193 = vmax.f32 %v3116, 0.0
        %v3194 = vmax.f32 %v3005, 0.0
        %v3195 = vmax.f32 %v3007, 0.0
        %v3196 = vmax.f32 %v3118, 0.0
        %v3197 = vmax.f32 %v3120, 0.0
        %v3198 = vmax.f32 %v3011, 0.0
        %v3199 = vmax.f32 %v3013, 0.0
        %v3200 = vmax.f32 %v3124, 0.0
        %v3201 = vmax.f32 %v3126, 0.0
        %v3202 = vmax.f32 %v3015, 0.0
        %v3203 = vmax.f32 %v3017, 0.0
        %v3204 = vmax.f32 %v3128, 0.0
        %v3205 = vmax.f32 %v3130, 0.0
        %v3206 = vmax.f32 %v3021, 0.0
        %v3207 = vmax.f32 %v3023, 0.0
        %v3208 = vmax.f32 %v3134, 0.0
        %v3209 = vmax.f32 %v3136, 0.0
        %v3210 = vmax.f32 %v3025, 0.0
        %v3211 = vmax.f32 %v3027, 0.0
        %v3212 = vmax.f32 %v3138, 0.0
        %v3213 = vmax.f32 %v3140, 0.0
        %v3214 = vmax.f32 %v3031, 0.0
        %v3215 = vmax.f32 %v3033, 0.0
        %v3216 = vmax.f32 %v3144, 0.0
        %v3217 = vmax.f32 %v3146, 0.0
        %v3218 = vmax.f32 %v3035, 0.0
        %v3219 = vmax.f32 %v3037, 0.0
        %v3220 = vmax.f32 %v3148, 0.0
        %v3221 = vmax.f32 %v3150, 0.0
        %v3222 = vmax.f32 %v3041, 0.0
        %v3223 = vmax.f32 %v3043, 0.0
        %v3224 = vmax.f32 %v3154, 0.0
        %v3225 = vmax.f32 %v3156, 0.0
        %v3226 = vmax.f32 %v3045, 0.0
        %v3227 = vmax.f32 %v3047, 0.0
        %v3228 = vmax.f32 %v3158, 0.0
        %v3229 = vmax.f32 %v3160, 0.0
        %v3230 = vmax.f32 %v3051, 0.0
        %v3231 = vmax.f32 %v3053, 0.0
        %v3232 = vmax.f32 %v3164, 0.0
        %v3233 = vmax.f32 %v3166, 0.0
        %v3234 = vmax.f32 %v3055, 0.0
        %v3235 = vmax.f32 %v3057, 0.0
        %v3236 = vmax.f32 %v3168, 0.0
        %v3237 = vmax.f32 %v3170, 0.0
        %v3238 = vmax.f32 %v3061, 0.0
        %v3239 = vmax.f32 %v3063, 0.0
        %v3240 = vmax.f32 %v3174, 0.0
        %v3241 = vmax.f32 %v3176, 0.0
        %v3242 = vmax.f32 %v3065, 0.0
        %v3243 = vmax.f32 %v3067, 0.0
        %v3244 = vmax.f32 %v3178, 0.0
        %v3245 = vmax.f32 %v3180, 0.0
        %v3246 = vpack.c.bf16 %v3186, %v3182
        %v3247 = vpack.c.bf16 %v3187, %v3183
        %v3248 = vpack.c.bf16 %v3188, %v3184
        %v3249 = vpack.c.bf16 %v3189, %v3185
        %v3250 = vpack.c.bf16 %v3194, %v3190
        %v3251 = vpack.c.bf16 %v3195, %v3191
        %v3252 = vpack.c.bf16 %v3196, %v3192
        %v3253 = vpack.c.bf16 %v3197, %v3193
        %v3254 = vpack.c.bf16 %v3202, %v3198
        %v3255 = vpack.c.bf16 %v3203, %v3199
        %v3256 = vpack.c.bf16 %v3204, %v3200
        %v3257 = vpack.c.bf16 %v3205, %v3201
        %v3258 = vpack.c.bf16 %v3210, %v3206
        %v3259 = vpack.c.bf16 %v3211, %v3207
        %v3260 = vpack.c.bf16 %v3212, %v3208
        %v3261 = vpack.c.bf16 %v3213, %v3209
        %v3262 = vpack.c.bf16 %v3218, %v3214
        %v3263 = vpack.c.bf16 %v3219, %v3215
        %v3264 = vpack.c.bf16 %v3220, %v3216
        %v3265 = vpack.c.bf16 %v3221, %v3217
        %v3266 = vpack.c.bf16 %v3226, %v3222
        %v3267 = vpack.c.bf16 %v3227, %v3223
        %v3268 = vpack.c.bf16 %v3228, %v3224
        %v3269 = vpack.c.bf16 %v3229, %v3225
        %v3270 = vpack.c.bf16 %v3234, %v3230
        %v3271 = vpack.c.bf16 %v3235, %v3231
        %v3272 = vpack.c.bf16 %v3236, %v3232
        %v3273 = vpack.c.bf16 %v3237, %v3233
        %v3274 = vpack.c.bf16 %v3242, %v3238
        %v3275 = vpack.c.bf16 %v3243, %v3239
        %v3276 = vpack.c.bf16 %v3244, %v3240
        %v3277 = vpack.c.bf16 %v3245, %v3241
        %v3278 = vld [vmem:[%s5] sm:$0x3]
        %v3279 = vld [vmem:[%s6] sm:$0x7]
        %3281 = vset.pattern.permute.xlu0 0
        %3282 = vperm.xlu0 %3281, %v3279
        %v3283 = vpop.permute.xlu0 %3282
        %3285 = vmatprep.subr.bf16.mxu0 %v3247
        %3286 = vmatpush1.bf16.msra.mxu0 %v3246
        %3287 = vmatprep.subr.bf16.mxu0 %v3251
        %3288 = vmatpush1.bf16.msra.mxu0 %v3250
        %3289 = vmatprep.subr.bf16.mxu0 %v3255
        %3290 = vmatpush1.bf16.msra.mxu0 %v3254
        %3291 = vmatprep.subr.bf16.mxu0 %v3259
        %3292 = vmatpush1.bf16.msra.mxu0 %v3258
        %3293 = vmatprep.subr.bf16.mxu0 %v3263
        %3294 = vmatpush1.bf16.msra.mxu0 %v3262
        %3295 = vmatprep.subr.bf16.mxu0 %v3267
        %3296 = vmatpush1.bf16.msra.mxu0 %v3266
        %3297 = vmatprep.subr.bf16.mxu0 %v3271
        %3298 = vmatpush1.bf16.msra.mxu0 %v3270
        %3299 = vmatprep.subr.bf16.mxu0 %v3275
        %3300 = vmatpush1.bf16.msra.mxu0 %v3274
        %3301 = vmatprep.subr.bf16.mxu0 0
        %3302 = vmatpush1.bf16.msra.mxu0 0
        %3303 = vmatprep.subr.bf16.mxu0 0
        %3304 = vmatpush1.bf16.msra.mxu0 0
        %3305 = vmatprep.subr.bf16.mxu0 0
        %3306 = vmatpush1.bf16.msra.mxu0 0
        %3307 = vmatprep.subr.bf16.mxu0 0
        %3308 = vmatpush1.bf16.msra.mxu0 0
        %3309 = vmatprep.subr.bf16.mxu0 0
        %3310 = vmatpush1.bf16.msra.mxu0 0
        %3311 = vmatprep.subr.bf16.mxu0 0
        %3312 = vmatpush1.bf16.msra.mxu0 0
        %3313 = vmatprep.subr.bf16.mxu0 0
        %3314 = vmatpush1.bf16.msra.mxu0 0
        %3315 = vmatprep.subr.bf16.mxu0 0
        %3316 = vmatpush1.bf16.msra.mxu0 0
        %3317 = vmatprep.mubr.bf16.mxu0 0
        %3318 = vmatmul.mubr.bf16.gmra.mrb[0].mxu0 %v3278
        %v3319 = vpop.f32.mrb[0].mxu0
        %v3320 = vadd.f32 %v3283, %v3319
        %v3321 = vpop.f32.mrb[0].mxu0
        %v3322 = vadd.f32 %v3283, %v3321
        %v3323 = vpop.f32.mrb[0].mxu0
        %v3324 = vpop.f32.mrb[0].mxu0
        %3325 = vdwg.mxu0
        %3326 = vmatprep.subr.bf16.mxu0 %v3249
        %3327 = vmatpush1.bf16.msra.mxu0 %v3248
        %3328 = vmatprep.subr.bf16.mxu0 %v3253
        %3329 = vmatpush1.bf16.msra.mxu0 %v3252
        %3330 = vmatprep.subr.bf16.mxu0 %v3257
        %3331 = vmatpush1.bf16.msra.mxu0 %v3256
        %3332 = vmatprep.subr.bf16.mxu0 %v3261
        %3333 = vmatpush1.bf16.msra.mxu0 %v3260
        %3334 = vmatprep.subr.bf16.mxu0 %v3265
        %3335 = vmatpush1.bf16.msra.mxu0 %v3264
        %3336 = vmatprep.subr.bf16.mxu0 %v3269
        %3337 = vmatpush1.bf16.msra.mxu0 %v3268
        %3338 = vmatprep.subr.bf16.mxu0 %v3273
        %3339 = vmatpush1.bf16.msra.mxu0 %v3272
        %3340 = vmatprep.subr.bf16.mxu0 %v3277
        %3341 = vmatpush1.bf16.msra.mxu0 %v3276
        %3342 = vmatprep.subr.bf16.mxu0 0
        %3343 = vmatpush1.bf16.msra.mxu0 0
        %3344 = vmatprep.subr.bf16.mxu0 0
        %3345 = vmatpush1.bf16.msra.mxu0 0
        %3346 = vmatprep.subr.bf16.mxu0 0
        %3347 = vmatpush1.bf16.msra.mxu0 0
        %3348 = vmatprep.subr.bf16.mxu0 0
        %3349 = vmatpush1.bf16.msra.mxu0 0
        %3350 = vmatprep.subr.bf16.mxu0 0
        %3351 = vmatpush1.bf16.msra.mxu0 0
        %3352 = vmatprep.subr.bf16.mxu0 0
        %3353 = vmatpush1.bf16.msra.mxu0 0
        %3354 = vmatprep.subr.bf16.mxu0 0
        %3355 = vmatpush1.bf16.msra.mxu0 0
        %3356 = vmatprep.subr.bf16.mxu0 0
        %3357 = vmatpush1.bf16.msra.mxu0 0
        %3358 = vmatprep.mubr.bf16.mxu0 0
        %3359 = vmatmul.mubr.bf16.gmra.mrb[0].mxu0 %v3278
        %v3360 = vpop.f32.mrb[0].mxu0
        %v3361 = vadd.f32 %v3283, %v3360
        %v3362 = vpop.f32.mrb[0].mxu0
        %v3363 = vadd.f32 %v3283, %v3362
        %v3364 = vpop.f32.mrb[0].mxu0
        %v3365 = vpop.f32.mrb[0].mxu0
        %3366 = vdwg.mxu0
        %v3367 = vtanh.pop %v3320
        %v3368 = vtanh.pop %v3322
        %v3369 = vtanh.pop %v3361
        %v3370 = vtanh.pop %v3363
        %v3371 = vmul.f32 %v3367, 0.5
        %v3372 = vmul.f32 %v3368, 0.5
        %v3373 = vmul.f32 %v3369, 0.5
        %v3374 = vmul.f32 %v3370, 0.5
        %v3379 = vcombine.low %v3371, %v3372
        %v3380 = vcombine.low %v3373, %v3374
        %3383 = vst [vmem:[%s310] sm:$0x77] %v3379
        %3384 = vst [vmem:[%s310 + $0x8] sm:$0x77] %v3380
        %p3385 = scmp.lt.s32.totalorder %s19, 1
        %s3386 = scalar_select %p3385, %s19, 1
        %s3387 = smul.addr %s3386, 4
        %s3388 = smul.addr %s3387, 4
        %s3389 = scalar_lea.vmem %s7, %s3388
        // Predicated region
        $region53: #{tpu_custom_call.1} parent=47 // pred_check
          %p3390 = pneg %p194
        $region54: #{tpu_custom_call.1} parent=47 // pred_check_branch
          %3392 = sbr.rel (%p3390) target = $region56
        $region55: #{tpu_custom_call.1} parent=47 // pred_region
          _
        $region56: #{tpu_custom_call.1} parent=47 // pred_fallthru
          _
      $region48: #{tpu_custom_call.1} parent=5 // pred_fallthru
        _
      %p3393 = scmp.le.s32.totalorder 2, %s14
      // Predicated region
      $region57: #{tpu_custom_call.1} parent=5 // pred_check
        %p3394 = pneg %p3393
      $region58: #{tpu_custom_call.1} parent=5 // pred_check_branch
        %3396 = sbr.rel (%p3394) target = $region60
      $region59: #{tpu_custom_call.1} parent=5 // pred_region
        %s3397 = ssub.s32 %s14, 2
        // Predicated region
        $region61: #{tpu_custom_call.1} parent=59 // pred_check
          %p3398 = pneg %p200
        $region62: #{tpu_custom_call.1} parent=59 // pred_check_branch
          %3400 = sbr.rel (%p3398) target = $region64
        $region63: #{tpu_custom_call.1} parent=59 // pred_region
          %p3401 = scmp.lt.s32.totalorder %s20, 1
          %s3402 = scalar_select %p3401, %s20, 1
          %s3403 = smul.addr %s3402, 4
          %s3404 = smul.addr %s3403, 4
          %s3405 = scalar_lea.vmem %s7, %s3404
        $region64: #{tpu_custom_call.1} parent=59 // pred_fallthru
          _
      $region60: #{tpu_custom_call.1} parent=5 // pred_fallthru
        _
    $region6: #{tpu_custom_call.1} parent=1 // loop_footer
      %s18 = sadd.s32 1, %s14
    $region7: #{tpu_custom_call.1} parent=1 // loop_footer_branch
      %13 = sbr.rel target = $region3
    $region8: #{tpu_custom_call.1} parent=1 // loop_exit
      _
    %3406 = vsyncpa [#allocation3], 1
    %s3407 = scalar_lea.sflag [#allocation3], 1
    %3408 = vsyncpa %s3407, 1

</llo_original>
